<compile_context>
chip_gen: v7x
topology: tpu7x:2x2x1
jax: 0.10.0
libtpu: 0.0.40
codegen_flags: <defaults>
</compile_context>

<pallas_src>
import jax
import jax.numpy as jnp
from jax.experimental import pallas as pl
from jax.experimental.pallas import tpu as pltpu


# ----------------------------- Pallas kernels ------------------------------

def _conv_tap_gemm_kernel(x_ref, w_ref, s_ref, b_ref, o_ref, acc_ref):
    """One (batch, H-row, column-tile) output tile; grid axis 3 = the 3 kh taps.

    x_ref : (1, 1, 9*Cin, TN) bf16  (kw,kd)-im2col columns, row shifted by kh
    w_ref : (3, Cout, 9*Cin) bf16   per-kh weight slab (resident)
    s_ref : (Cout, 1) f32           folded BN scale
    b_ref : (Cout, 1) f32           folded BN bias
    o_ref : (1, 1, Cout, TN) f32
    acc   : (Cout, TN) f32 VMEM scratch, lives across the kh reduction axis
    """
    kh = pl.program_id(3)

    @pl.when(kh == 0)
    def _init():
        acc_ref[...] = jnp.zeros_like(acc_ref)

    acc_ref[...] += jnp.dot(w_ref[kh], x_ref[0, 0],
                            preferred_element_type=jnp.float32)

    @pl.when(kh == pl.num_programs(3) - 1)
    def _finalize():
        y = acc_ref[...] * s_ref[...] + b_ref[...]
        o_ref[0, 0] = jnp.maximum(y, 0.0).astype(o_ref.dtype)


def _maxpool8_kernel(x_ref, o_ref):
    # x_ref: (8, TN) — the 8 voxels of each 2x2x2 window sit along axis 0.
    o_ref[...] = jnp.max(x_ref[...], axis=0, keepdims=True)


# ------------------------------ layer wrappers ------------------------------

def conv3d_bn_relu(x, w, scale, bias, tn_max=1024):
    """3x3x3 'same' Conv3d + folded (inference) BatchNorm3d + ReLU.

    x: (B, H, Cin, W, D) f32, w: (3, 3, 3, Cin, Cout), scale/bias: (Cout,)
    returns (B, H, Cout, W, D) f32.
    """
    B, H, Cin, W, D = x.shape
    Cout = w.shape[-1]
    K9 = 9 * Cin

    # glue: (kw, kd) im2col only (9x, bf16); the kh tap is a grid reduction
    # axis inside the Pallas kernel, so no 27x HBM materialization.
    xp = jnp.pad(x, ((0, 0), (1, 1), (0, 0), (1, 1), (1, 1)))
    views = []
    for kw in range(3):
        for kd in range(3):
            views.append(xp[:, :, :, kw:kw + W, kd:kd + D])
    x9 = jnp.concatenate(views, axis=2)                 # (B, H+2, 9*Cin, W, D)
    x9 = x9.reshape(B, H + 2, K9, W * D).astype(jnp.bfloat16)

    WD = W * D
    if WD <= tn_max:
        TN, WDp = WD, WD
    else:
        TN = tn_max
        WDp = ((WD + TN - 1) // TN) * TN
    if WDp != WD:
        x9 = jnp.pad(x9, ((0, 0), (0, 0), (0, 0), (0, WDp - WD)))

    # weights as (kh, Cout, (kw,kd,ci)) so each kh step is one 2D GEMM slab
    w9 = jnp.transpose(w, (0, 4, 1, 2, 3)).reshape(3, Cout, K9)
    w9 = w9.astype(jnp.bfloat16)
    s2 = scale.reshape(Cout, 1).astype(jnp.float32)
    b2 = bias.reshape(Cout, 1).astype(jnp.float32)

    grid = (B, H, WDp // TN, 3)
    out = pl.pallas_call(
        _conv_tap_gemm_kernel,
        out_shape=jax.ShapeDtypeStruct((B, H, Cout, WDp), jnp.float32),
        grid_spec=pltpu.PrefetchScalarGridSpec(
            num_scalar_prefetch=0,
            grid=grid,
            in_specs=[
                pl.BlockSpec((1, 1, K9, TN),
                             lambda b, h, j, kh: (b, h + kh, 0, j)),
                pl.BlockSpec((3, Cout, K9), lambda b, h, j, kh: (0, 0, 0)),
                pl.BlockSpec((Cout, 1), lambda b, h, j, kh: (0, 0)),
                pl.BlockSpec((Cout, 1), lambda b, h, j, kh: (0, 0)),
            ],
            out_specs=pl.BlockSpec((1, 1, Cout, TN),
                                   lambda b, h, j, kh: (b, h, 0, j)),
            scratch_shapes=[pltpu.VMEM((Cout, TN), jnp.float32)],
        ),
        compiler_params=pltpu.CompilerParams(
            dimension_semantics=("parallel", "parallel", "parallel",
                                 "arbitrary")),
    )(x9, w9, s2, b2)

    if WDp != WD:
        out = out[..., :WD]
    return out.reshape(B, H, Cout, W, D)


def maxpool3d_2x(x, tn=4096):
    """MaxPool3d(kernel=2, stride=2) on (B, H, C, W, D)."""
    B, H, C, W, D = x.shape
    Ho, Wo, Do = H // 2, W // 2, D // 2
    N = B * Ho * C * Wo * Do
    # TODO(synk): this window shuffle is still an XLA transpose; fusing the pool
    # into the following conv's im2col would remove one HBM round trip.
    xr = x.reshape(B, Ho, 2, C, Wo, 2, Do, 2)
    xr = xr.transpose(2, 5, 7, 0, 1, 3, 4, 6).reshape(8, N)
    if N <= tn:
        TN, Np = N, N
    else:
        TN = tn
        Np = ((N + TN - 1) // TN) * TN
    if Np != N:
        xr = jnp.pad(xr, ((0, 0), (0, Np - N)))
    out = pl.pallas_call(
        _maxpool8_kernel,
        out_shape=jax.ShapeDtypeStruct((1, Np), jnp.float32),
        grid=(Np // TN,),
        in_specs=[pl.BlockSpec((8, TN), lambda i: (0, i))],
        out_specs=pl.BlockSpec((1, TN), lambda i: (0, i)),
        compiler_params=pltpu.CompilerParams(
            dimension_semantics=("parallel",)),
    )(xr)
    return out[0, :N].reshape(B, Ho, C, Wo, Do)


def _interp_matrix(in_size, out_size):
    """1D linear interpolation matrix, matches PyTorch align_corners=False."""
    scale = in_size / out_size
    dst = jnp.arange(out_size, dtype=jnp.float32)
    src = jnp.maximum((dst + 0.5) * scale - 0.5, 0.0)
    i0 = jnp.clip(jnp.floor(src).astype(jnp.int32), 0, in_size - 1)
    i1 = jnp.clip(i0 + 1, 0, in_size - 1)
    w1 = src - i0.astype(jnp.float32)
    w0 = 1.0 - w1
    rows = jnp.arange(out_size)
    m = jnp.zeros((out_size, in_size), jnp.float32)
    m = m.at[rows, i0].add(w0)
    m = m.at[rows, i1].add(w1)
    return m


def trilinear_resize(x, out_hwd):
    """F.interpolate(mode='trilinear', align_corners=False) on (B, H, C, W, D)."""
    # TODO(synk): resize + concat could be fused into the e4c1 conv tiles to
    # avoid materializing the widest activation; kept as plain-JAX glue here.
    B, H, C, W, D = x.shape
    h, w, d = out_hwd
    Mh = _interp_matrix(H, h)
    Mw = _interp_matrix(W, w)
    Md = _interp_matrix(D, d)
    y = jnp.einsum('ph,bhcwd->bpcwd', Mh, x)
    y = jnp.einsum('qw,bpcwd->bpcqd', Mw, y)
    y = jnp.einsum('rd,bpcqd->bpcqr', Md, y)
    return y


# ------------------------------- parameters ---------------------------------

def init_conv_bn(key, cin, cout, w_std=0.1):
    """Deterministic synthetic Conv3d weight + BatchNorm3d folded to (scale, bias)."""
    k1, k2, k3, k4, k5 = jax.random.split(key, 5)
    w = jax.random.normal(k1, (3, 3, 3, cin, cout), jnp.float32) * w_std
    gamma = 1.0 + 0.1 * jax.random.normal(k2, (cout,), jnp.float32)
    beta = 0.1 * jax.random.normal(k3, (cout,), jnp.float32)
    mean = 0.1 * jax.random.normal(k4, (cout,), jnp.float32)
    var = 1.0 + 0.1 * jnp.abs(jax.random.normal(k5, (cout,), jnp.float32))
    scale = gamma / jnp.sqrt(var + 1e-5)   # inference-mode BN fold
    bias = beta - mean * scale
    return w, scale, bias


# --------------------------------- forward ----------------------------------

def unet_dap_forward(vox_feat, params):
    """vox_feat: (B, H, W, D, C) — same input layout the PyTorch forward receives."""
    p = params
    # internal layout (B, H, C, W, D): keeps (W*D) voxel columns on the lane
    # axis of every Pallas GEMM so loads/stores are lane-dense.
    x = jnp.transpose(vox_feat, (0, 1, 4, 2, 3))

    # Encoder_block1: conv-bn-relu x2
    s11 = conv3d_bn_relu(x, *p['e1c1'])
    s11 = conv3d_bn_relu(s11, *p['e1c2'])
    # Encoder_block2: maxpool + conv-bn-relu x2
    t = maxpool3d_2x(s11)
    t = conv3d_bn_relu(t, *p['e2c1'])
    s12 = conv3d_bn_relu(t, *p['e2c2'])
    # Encoder_block3: maxpool + conv-bn-relu x2
    t = maxpool3d_2x(s12)
    t = conv3d_bn_relu(t, *p['e3c1'])
    s14 = conv3d_bn_relu(t, *p['e3c2'])

    B, h, c, w, d = s14.shape
    cat = jnp.concatenate([
        trilinear_resize(s14, (h, w, d * 4)),
        trilinear_resize(s12, (h, w, d * 4)),
        trilinear_resize(s11, (h, w, d * 4)),
    ], axis=2)                                   # channel axis (== torch dim=1)

    # Encoder_block4: conv-bn-relu, then to channels-last (== permute(0,2,3,4,1))
    vf = conv3d_bn_relu(cat, *p['e4c1'])         # (B, h, hidden_f, w, 4d)
    voxel_feat = jnp.transpose(vf, (0, 1, 3, 4, 2))

    # TODO(synk): self.voxel_transformer is an external mmcv transformer-layer
    # sequence built from config; no Pallas equivalent here, so it is treated
    # as identity and occ_list is empty.
    occ_list = []
    voxel_feature = jax.lax.stop_gradient(voxel_feat)  # .clone().detach()
    return voxel_feat, voxel_feature, occ_list


if __name__ == "__main__":
    key = jax.random.PRNGKey(0)
    B, H, W, D = 1, 8, 8, 8
    f = 4                     # input_dimensions
    hidden_f = 8 * f          # hidden_dimensions (cat = 7f channels -> hidden_f)

    keys = jax.random.split(key, 8)
    params = {
        'e1c1': init_conv_bn(keys[0], f, f),
        'e1c2': init_conv_bn(keys[1], f, f),
        'e2c1': init_conv_bn(keys[2], f, 2 * f),
        'e2c2': init_conv_bn(keys[3], 2 * f, 2 * f),
        'e3c1': init_conv_bn(keys[4], 2 * f, 4 * f),
        'e3c2': init_conv_bn(keys[5], 4 * f, 4 * f),
        'e4c1': init_conv_bn(keys[6], hidden_f - f, hidden_f),
    }
    vox_feat = jax.random.normal(keys[7], (B, H, W, D, f), jnp.float32)

    fwd = jax.jit(unet_dap_forward)
    voxel_feat, voxel_feature, occ_list = fwd(vox_feat, params)
    jax.block_until_ready(voxel_feat)
    jax.block_until_ready(voxel_feature)

    assert voxel_feat.shape == (B, H // 4, W // 4, D, hidden_f), voxel_feat.shape
    assert voxel_feature.shape == voxel_feat.shape
    assert bool(jnp.all(jnp.isfinite(voxel_feat)))
    print("KERNEL_OK")
</pallas_src>

<mosaic_0001>
module attributes {stable_mosaic.version = 11 : i64} {
  func.func @_conv_tap_gemm_kernel(%arg0: i32, %arg1: i32, %arg2: i32, %arg3: i32, %arg4: memref<1x1x36x64xbf16, #tpu.memory_space<vmem>>, %arg5: memref<3x4x36xbf16, #tpu.memory_space<vmem>>, %arg6: memref<4x1xf32, #tpu.memory_space<vmem>>, %arg7: memref<4x1xf32, #tpu.memory_space<vmem>>, %arg8: memref<1x1x4x64xf32, #tpu.memory_space<vmem>>, %arg9: memref<4x64xf32, #tpu.memory_space<vmem>>) attributes {dimension_semantics = [#tpu.dimension_semantics<parallel>, #tpu.dimension_semantics<parallel>, #tpu.dimension_semantics<parallel>, #tpu.dimension_semantics<arbitrary>], iteration_bounds = array<i64: 1, 8, 1, 3>, scalar_prefetch = 0 : i64, scratch_operands = 1 : i64, tpu.core_type = #tpu.core_type<tc>, window_params = [{transform_indices = @transform_0, window_bounds = array<i64: 1, 1, 36, 64>}, {pipeline_mode = #tpu.pipeline_mode<synchronous>, transform_indices = @transform_1, window_bounds = array<i64: 3, 4, 36>}, {pipeline_mode = #tpu.pipeline_mode<synchronous>, transform_indices = @transform_2, window_bounds = array<i64: 4, 1>}, {pipeline_mode = #tpu.pipeline_mode<synchronous>, transform_indices = @transform_3, window_bounds = array<i64: 4, 1>}, {transform_indices = @transform_4, window_bounds = array<i64: 1, 1, 4, 64>}]} {
    %c0_i32 = arith.constant 0 : i32
    %0 = arith.cmpi eq, %arg3, %c0_i32 : i32
    %1 = arith.extui %0 : i1 to i32
    %c0_i32_0 = arith.constant 0 : i32
    %2 = arith.cmpi ne, %1, %c0_i32_0 : i32
    scf.if %2 {
      %cst_11 = arith.constant 0.000000e+00 : f32
      %15 = vector.broadcast %cst_11 : f32 to vector<4x64xf32>
      %c0_12 = arith.constant 0 : index
      %c0_13 = arith.constant 0 : index
      %16 = vector.load %arg9[%c0_12, %c0_13] : memref<4x64xf32, #tpu.memory_space<vmem>>, vector<4x64xf32>
      tpu.vector_store %arg9[%c0_12, %c0_13], %15 {strides = array<i32>} : memref<4x64xf32, #tpu.memory_space<vmem>>, vector<4x64xf32>,
    } else {
    }
    %c0 = arith.constant 0 : index
    %c0_1 = arith.constant 0 : index
    %3 = vector.load %arg9[%c0, %c0_1] : memref<4x64xf32, #tpu.memory_space<vmem>>, vector<4x64xf32>
    %4 = arith.index_cast %arg3 : i32 to index
    %c0_2 = arith.constant 0 : index
    %c0_3 = arith.constant 0 : index
    %5 = vector.load %arg5[%4, %c0_2, %c0_3] : memref<3x4x36xbf16, #tpu.memory_space<vmem>>, vector<1x4x36xbf16>
    %6 = vector.shape_cast %5 : vector<1x4x36xbf16> to vector<4x36xbf16>
    %c0_4 = arith.constant 0 : index
    %c0_5 = arith.constant 0 : index
    %c0_6 = arith.constant 0 : index
    %c0_7 = arith.constant 0 : index
    %7 = vector.load %arg4[%c0_4, %c0_5, %c0_6, %c0_7] : memref<1x1x36x64xbf16, #tpu.memory_space<vmem>>, vector<1x1x36x64xbf16>
    %8 = vector.shape_cast %7 : vector<1x1x36x64xbf16> to vector<36x64xbf16>
    %cst = arith.constant dense<0.000000e+00> : vector<4x64xf32>
    %9 = tpu.matmul %6, %8, %cst {dimension_numbers = #tpu.dot_dimension_numbers<[1], [0], [0], [1], [0, 0, 1, 1], [], []>} : vector<4x36xbf16>, vector<36x64xbf16>, vector<4x64xf32> -> vector<4x64xf32>
    %10 = arith.addf %3, %9 : vector<4x64xf32>
    %c0_8 = arith.constant 0 : index
    %c0_9 = arith.constant 0 : index
    %11 = vector.load %arg9[%c0_8, %c0_9] : memref<4x64xf32, #tpu.memory_space<vmem>>, vector<4x64xf32>
    tpu.vector_store %arg9[%c0_8, %c0_9], %10 {strides = array<i32>} : memref<4x64xf32, #tpu.memory_space<vmem>>, vector<4x64xf32>,
    %c2_i32 = arith.constant 2 : i32
    %12 = arith.cmpi eq, %arg3, %c2_i32 : i32
    %13 = arith.extui %12 : i1 to i32
    %c0_i32_10 = arith.constant 0 : i32
    %14 = arith.cmpi ne, %13, %c0_i32_10 : i32
    scf.if %14 {
      %c0_11 = arith.constant 0 : index
      %c0_12 = arith.constant 0 : index
      %15 = vector.load %arg9[%c0_11, %c0_12] : memref<4x64xf32, #tpu.memory_space<vmem>>, vector<4x64xf32>
      %c0_13 = arith.constant 0 : index
      %c0_14 = arith.constant 0 : index
      %16 = vector.load %arg6[%c0_13, %c0_14] : memref<4x1xf32, #tpu.memory_space<vmem>>, vector<4x1xf32>
      %17 = vector.broadcast %16 : vector<4x1xf32> to vector<4x64xf32>
      %18 = arith.mulf %15, %17 : vector<4x64xf32>
      %c0_15 = arith.constant 0 : index
      %c0_16 = arith.constant 0 : index
      %19 = vector.load %arg7[%c0_15, %c0_16] : memref<4x1xf32, #tpu.memory_space<vmem>>, vector<4x1xf32>
      %20 = vector.broadcast %19 : vector<4x1xf32> to vector<4x64xf32>
      %21 = arith.addf %18, %20 : vector<4x64xf32>
      %cst_17 = arith.constant 0.000000e+00 : f32
      %22 = vector.broadcast %cst_17 : f32 to vector<4x64xf32>
      %23 = arith.maximumf %21, %22 : vector<4x64xf32>
      %c0_18 = arith.constant 0 : index
      %c0_19 = arith.constant 0 : index
      %c0_20 = arith.constant 0 : index
      %c0_21 = arith.constant 0 : index
      %24 = vector.load %arg8[%c0_18, %c0_19, %c0_20, %c0_21] : memref<1x1x4x64xf32, #tpu.memory_space<vmem>>, vector<1x1x4x64xf32>
      %25 = vector.shape_cast %24 : vector<1x1x4x64xf32> to vector<4x64xf32>
      %26 = vector.shape_cast %23 : vector<4x64xf32> to vector<1x1x4x64xf32>
      tpu.vector_store %arg8[%c0_18, %c0_19, %c0_20, %c0_21], %26 {strides = array<i32>} : memref<1x1x4x64xf32, #tpu.memory_space<vmem>>, vector<1x1x4x64xf32>,
    } else {
    }
    return
  }
  func.func @transform_0(%arg0: i32, %arg1: i32, %arg2: i32, %arg3: i32) -> (i32, i32, i32, i32) {
    %0 = arith.addi %arg1, %arg3 : i32
    %c0_i32 = arith.constant 0 : i32
    %c0_i32_0 = arith.constant 0 : i32
    return %arg0, %0, %c0_i32, %arg2 : i32, i32, i32, i32
  }
  func.func @transform_1(%arg0: i32, %arg1: i32, %arg2: i32, %arg3: i32) -> (i32, i32, i32) {
    %c0_i32 = arith.constant 0 : i32
    %c0_i32_0 = arith.constant 0 : i32
    %c0_i32_1 = arith.constant 0 : i32
    %c0_i32_2 = arith.constant 0 : i32
    return %c0_i32, %c0_i32_0, %c0_i32_1 : i32, i32, i32
  }
  func.func @transform_2(%arg0: i32, %arg1: i32, %arg2: i32, %arg3: i32) -> (i32, i32) {
    %c0_i32 = arith.constant 0 : i32
    %c0_i32_0 = arith.constant 0 : i32
    %c0_i32_1 = arith.constant 0 : i32
    return %c0_i32, %c0_i32_0 : i32, i32
  }
  func.func @transform_3(%arg0: i32, %arg1: i32, %arg2: i32, %arg3: i32) -> (i32, i32) {
    %c0_i32 = arith.constant 0 : i32
    %c0_i32_0 = arith.constant 0 : i32
    %c0_i32_1 = arith.constant 0 : i32
    return %c0_i32, %c0_i32_0 : i32, i32
  }
  func.func @transform_4(%arg0: i32, %arg1: i32, %arg2: i32, %arg3: i32) -> (i32, i32, i32, i32) {
    %c0_i32 = arith.constant 0 : i32
    %c0_i32_0 = arith.constant 0 : i32
    return %arg0, %arg1, %c0_i32, %arg2 : i32, i32, i32, i32
  }
}

module attributes {stable_mosaic.version = 11 : i64} {
  func.func @_maxpool8_kernel(%arg0: i32, %arg1: memref<8x256xf32, #tpu.memory_space<vmem>>, %arg2: memref<1x256xf32, #tpu.memory_space<vmem>>) attributes {dimension_semantics = [#tpu.dimension_semantics<parallel>], iteration_bounds = array<i64: 1>, scalar_prefetch = 0 : i64, scratch_operands = 0 : i64, tpu.core_type = #tpu.core_type<tc>, window_params = [{transform_indices = @transform_0, window_bounds = array<i64: 8, 256>}, {transform_indices = @transform_1, window_bounds = array<i64: 1, 256>}]} {
    %c0 = arith.constant 0 : index
    %c0_0 = arith.constant 0 : index
    %0 = vector.load %arg1[%c0, %c0_0] : memref<8x256xf32, #tpu.memory_space<vmem>>, vector<8x256xf32>
    %cst = arith.constant dense<0xFF800000> : vector<256xf32>
    %1 = vector.multi_reduction <maximumf>, %0, %cst [0] : vector<8x256xf32> to vector<256xf32>
    %2 = vector.shape_cast %1 : vector<256xf32> to vector<1x256xf32>
    %c0_1 = arith.constant 0 : index
    %c0_2 = arith.constant 0 : index
    %3 = vector.load %arg2[%c0_1, %c0_2] : memref<1x256xf32, #tpu.memory_space<vmem>>, vector<1x256xf32>
    tpu.vector_store %arg2[%c0_1, %c0_2], %2 {strides = array<i32>} : memref<1x256xf32, #tpu.memory_space<vmem>>, vector<1x256xf32>,
    return
  }
  func.func @transform_0(%arg0: i32) -> (i32, i32) {
    %c0_i32 = arith.constant 0 : i32
    %c0_i32_0 = arith.constant 0 : i32
    return %c0_i32, %arg0 : i32, i32
  }
  func.func @transform_1(%arg0: i32) -> (i32, i32) {
    %c0_i32 = arith.constant 0 : i32
    %c0_i32_0 = arith.constant 0 : i32
    return %c0_i32, %arg0 : i32, i32
  }
}

module attributes {stable_mosaic.version = 11 : i64} {
  func.func @_conv_tap_gemm_kernel(%arg0: i32, %arg1: i32, %arg2: i32, %arg3: i32, %arg4: memref<1x1x36x16xbf16, #tpu.memory_space<vmem>>, %arg5: memref<3x8x36xbf16, #tpu.memory_space<vmem>>, %arg6: memref<8x1xf32, #tpu.memory_space<vmem>>, %arg7: memref<8x1xf32, #tpu.memory_space<vmem>>, %arg8: memref<1x1x8x16xf32, #tpu.memory_space<vmem>>, %arg9: memref<8x16xf32, #tpu.memory_space<vmem>>) attributes {dimension_semantics = [#tpu.dimension_semantics<parallel>, #tpu.dimension_semantics<parallel>, #tpu.dimension_semantics<parallel>, #tpu.dimension_semantics<arbitrary>], iteration_bounds = array<i64: 1, 4, 1, 3>, scalar_prefetch = 0 : i64, scratch_operands = 1 : i64, tpu.core_type = #tpu.core_type<tc>, window_params = [{transform_indices = @transform_0, window_bounds = array<i64: 1, 1, 36, 16>}, {pipeline_mode = #tpu.pipeline_mode<synchronous>, transform_indices = @transform_1, window_bounds = array<i64: 3, 8, 36>}, {pipeline_mode = #tpu.pipeline_mode<synchronous>, transform_indices = @transform_2, window_bounds = array<i64: 8, 1>}, {pipeline_mode = #tpu.pipeline_mode<synchronous>, transform_indices = @transform_3, window_bounds = array<i64: 8, 1>}, {transform_indices = @transform_4, window_bounds = array<i64: 1, 1, 8, 16>}]} {
    %c0_i32 = arith.constant 0 : i32
    %0 = arith.cmpi eq, %arg3, %c0_i32 : i32
    %1 = arith.extui %0 : i1 to i32
    %c0_i32_0 = arith.constant 0 : i32
    %2 = arith.cmpi ne, %1, %c0_i32_0 : i32
    scf.if %2 {
      %cst_11 = arith.constant 0.000000e+00 : f32
      %15 = vector.broadcast %cst_11 : f32 to vector<8x16xf32>
      %c0_12 = arith.constant 0 : index
      %c0_13 = arith.constant 0 : index
      %16 = vector.load %arg9[%c0_12, %c0_13] : memref<8x16xf32, #tpu.memory_space<vmem>>, vector<8x16xf32>
      tpu.vector_store %arg9[%c0_12, %c0_13], %15 {strides = array<i32>} : memref<8x16xf32, #tpu.memory_space<vmem>>, vector<8x16xf32>,
    } else {
    }
    %c0 = arith.constant 0 : index
    %c0_1 = arith.constant 0 : index
    %3 = vector.load %arg9[%c0, %c0_1] : memref<8x16xf32, #tpu.memory_space<vmem>>, vector<8x16xf32>
    %4 = arith.index_cast %arg3 : i32 to index
    %c0_2 = arith.constant 0 : index
    %c0_3 = arith.constant 0 : index
    %5 = vector.load %arg5[%4, %c0_2, %c0_3] : memref<3x8x36xbf16, #tpu.memory_space<vmem>>, vector<1x8x36xbf16>
    %6 = vector.shape_cast %5 : vector<1x8x36xbf16> to vector<8x36xbf16>
    %c0_4 = arith.constant 0 : index
    %c0_5 = arith.constant 0 : index
    %c0_6 = arith.constant 0 : index
    %c0_7 = arith.constant 0 : index
    %7 = vector.load %arg4[%c0_4, %c0_5, %c0_6, %c0_7] : memref<1x1x36x16xbf16, #tpu.memory_space<vmem>>, vector<1x1x36x16xbf16>
    %8 = vector.shape_cast %7 : vector<1x1x36x16xbf16> to vector<36x16xbf16>
    %cst = arith.constant dense<0.000000e+00> : vector<8x16xf32>
    %9 = tpu.matmul %6, %8, %cst {dimension_numbers = #tpu.dot_dimension_numbers<[1], [0], [0], [1], [0, 0, 1, 1], [], []>} : vector<8x36xbf16>, vector<36x16xbf16>, vector<8x16xf32> -> vector<8x16xf32>
    %10 = arith.addf %3, %9 : vector<8x16xf32>
    %c0_8 = arith.constant 0 : index
    %c0_9 = arith.constant 0 : index
    %11 = vector.load %arg9[%c0_8, %c0_9] : memref<8x16xf32, #tpu.memory_space<vmem>>, vector<8x16xf32>
    tpu.vector_store %arg9[%c0_8, %c0_9], %10 {strides = array<i32>} : memref<8x16xf32, #tpu.memory_space<vmem>>, vector<8x16xf32>,
    %c2_i32 = arith.constant 2 : i32
    %12 = arith.cmpi eq, %arg3, %c2_i32 : i32
    %13 = arith.extui %12 : i1 to i32
    %c0_i32_10 = arith.constant 0 : i32
    %14 = arith.cmpi ne, %13, %c0_i32_10 : i32
    scf.if %14 {
      %c0_11 = arith.constant 0 : index
      %c0_12 = arith.constant 0 : index
      %15 = vector.load %arg9[%c0_11, %c0_12] : memref<8x16xf32, #tpu.memory_space<vmem>>, vector<8x16xf32>
      %c0_13 = arith.constant 0 : index
      %c0_14 = arith.constant 0 : index
      %16 = vector.load %arg6[%c0_13, %c0_14] : memref<8x1xf32, #tpu.memory_space<vmem>>, vector<8x1xf32>
      %17 = vector.broadcast %16 : vector<8x1xf32> to vector<8x16xf32>
      %18 = arith.mulf %15, %17 : vector<8x16xf32>
      %c0_15 = arith.constant 0 : index
      %c0_16 = arith.constant 0 : index
      %19 = vector.load %arg7[%c0_15, %c0_16] : memref<8x1xf32, #tpu.memory_space<vmem>>, vector<8x1xf32>
      %20 = vector.broadcast %19 : vector<8x1xf32> to vector<8x16xf32>
      %21 = arith.addf %18, %20 : vector<8x16xf32>
      %cst_17 = arith.constant 0.000000e+00 : f32
      %22 = vector.broadcast %cst_17 : f32 to vector<8x16xf32>
      %23 = arith.maximumf %21, %22 : vector<8x16xf32>
      %c0_18 = arith.constant 0 : index
      %c0_19 = arith.constant 0 : index
      %c0_20 = arith.constant 0 : index
      %c0_21 = arith.constant 0 : index
      %24 = vector.load %arg8[%c0_18, %c0_19, %c0_20, %c0_21] : memref<1x1x8x16xf32, #tpu.memory_space<vmem>>, vector<1x1x8x16xf32>
      %25 = vector.shape_cast %24 : vector<1x1x8x16xf32> to vector<8x16xf32>
      %26 = vector.shape_cast %23 : vector<8x16xf32> to vector<1x1x8x16xf32>
      tpu.vector_store %arg8[%c0_18, %c0_19, %c0_20, %c0_21], %26 {strides = array<i32>} : memref<1x1x8x16xf32, #tpu.memory_space<vmem>>, vector<1x1x8x16xf32>,
    } else {
    }
    return
  }
  func.func @transform_0(%arg0: i32, %arg1: i32, %arg2: i32, %arg3: i32) -> (i32, i32, i32, i32) {
    %0 = arith.addi %arg1, %arg3 : i32
    %c0_i32 = arith.constant 0 : i32
    %c0_i32_0 = arith.constant 0 : i32
    return %arg0, %0, %c0_i32, %arg2 : i32, i32, i32, i32
  }
  func.func @transform_1(%arg0: i32, %arg1: i32, %arg2: i32, %arg3: i32) -> (i32, i32, i32) {
    %c0_i32 = arith.constant 0 : i32
    %c0_i32_0 = arith.constant 0 : i32
    %c0_i32_1 = arith.constant 0 : i32
    %c0_i32_2 = arith.constant 0 : i32
    return %c0_i32, %c0_i32_0, %c0_i32_1 : i32, i32, i32
  }
  func.func @transform_2(%arg0: i32, %arg1: i32, %arg2: i32, %arg3: i32) -> (i32, i32) {
    %c0_i32 = arith.constant 0 : i32
    %c0_i32_0 = arith.constant 0 : i32
    %c0_i32_1 = arith.constant 0 : i32
    return %c0_i32, %c0_i32_0 : i32, i32
  }
  func.func @transform_3(%arg0: i32, %arg1: i32, %arg2: i32, %arg3: i32) -> (i32, i32) {
    %c0_i32 = arith.constant 0 : i32
    %c0_i32_0 = arith.constant 0 : i32
    %c0_i32_1 = arith.constant 0 : i32
    return %c0_i32, %c0_i32_0 : i32, i32
  }
  func.func @transform_4(%arg0: i32, %arg1: i32, %arg2: i32, %arg3: i32) -> (i32, i32, i32, i32) {
    %c0_i32 = arith.constant 0 : i32
    %c0_i32_0 = arith.constant 0 : i32
    return %arg0, %arg1, %c0_i32, %arg2 : i32, i32, i32, i32
  }
}

module attributes {stable_mosaic.version = 11 : i64} {
  func.func @_conv_tap_gemm_kernel(%arg0: i32, %arg1: i32, %arg2: i32, %arg3: i32, %arg4: memref<1x1x72x16xbf16, #tpu.memory_space<vmem>>, %arg5: memref<3x8x72xbf16, #tpu.memory_space<vmem>>, %arg6: memref<8x1xf32, #tpu.memory_space<vmem>>, %arg7: memref<8x1xf32, #tpu.memory_space<vmem>>, %arg8: memref<1x1x8x16xf32, #tpu.memory_space<vmem>>, %arg9: memref<8x16xf32, #tpu.memory_space<vmem>>) attributes {dimension_semantics = [#tpu.dimension_semantics<parallel>, #tpu.dimension_semantics<parallel>, #tpu.dimension_semantics<parallel>, #tpu.dimension_semantics<arbitrary>], iteration_bounds = array<i64: 1, 4, 1, 3>, scalar_prefetch = 0 : i64, scratch_operands = 1 : i64, tpu.core_type = #tpu.core_type<tc>, window_params = [{transform_indices = @transform_0, window_bounds = array<i64: 1, 1, 72, 16>}, {pipeline_mode = #tpu.pipeline_mode<synchronous>, transform_indices = @transform_1, window_bounds = array<i64: 3, 8, 72>}, {pipeline_mode = #tpu.pipeline_mode<synchronous>, transform_indices = @transform_2, window_bounds = array<i64: 8, 1>}, {pipeline_mode = #tpu.pipeline_mode<synchronous>, transform_indices = @transform_3, window_bounds = array<i64: 8, 1>}, {transform_indices = @transform_4, window_bounds = array<i64: 1, 1, 8, 16>}]} {
    %c0_i32 = arith.constant 0 : i32
    %0 = arith.cmpi eq, %arg3, %c0_i32 : i32
    %1 = arith.extui %0 : i1 to i32
    %c0_i32_0 = arith.constant 0 : i32
    %2 = arith.cmpi ne, %1, %c0_i32_0 : i32
    scf.if %2 {
      %cst_11 = arith.constant 0.000000e+00 : f32
      %15 = vector.broadcast %cst_11 : f32 to vector<8x16xf32>
      %c0_12 = arith.constant 0 : index
      %c0_13 = arith.constant 0 : index
      %16 = vector.load %arg9[%c0_12, %c0_13] : memref<8x16xf32, #tpu.memory_space<vmem>>, vector<8x16xf32>
      tpu.vector_store %arg9[%c0_12, %c0_13], %15 {strides = array<i32>} : memref<8x16xf32, #tpu.memory_space<vmem>>, vector<8x16xf32>,
    } else {
    }
    %c0 = arith.constant 0 : index
    %c0_1 = arith.constant 0 : index
    %3 = vector.load %arg9[%c0, %c0_1] : memref<8x16xf32, #tpu.memory_space<vmem>>, vector<8x16xf32>
    %4 = arith.index_cast %arg3 : i32 to index
    %c0_2 = arith.constant 0 : index
    %c0_3 = arith.constant 0 : index
    %5 = vector.load %arg5[%4, %c0_2, %c0_3] : memref<3x8x72xbf16, #tpu.memory_space<vmem>>, vector<1x8x72xbf16>
    %6 = vector.shape_cast %5 : vector<1x8x72xbf16> to vector<8x72xbf16>
    %c0_4 = arith.constant 0 : index
    %c0_5 = arith.constant 0 : index
    %c0_6 = arith.constant 0 : index
    %c0_7 = arith.constant 0 : index
    %7 = vector.load %arg4[%c0_4, %c0_5, %c0_6, %c0_7] : memref<1x1x72x16xbf16, #tpu.memory_space<vmem>>, vector<1x1x72x16xbf16>
    %8 = vector.shape_cast %7 : vector<1x1x72x16xbf16> to vector<72x16xbf16>
    %cst = arith.constant dense<0.000000e+00> : vector<8x16xf32>
    %9 = tpu.matmul %6, %8, %cst {dimension_numbers = #tpu.dot_dimension_numbers<[1], [0], [0], [1], [0, 0, 1, 1], [], []>} : vector<8x72xbf16>, vector<72x16xbf16>, vector<8x16xf32> -> vector<8x16xf32>
    %10 = arith.addf %3, %9 : vector<8x16xf32>
    %c0_8 = arith.constant 0 : index
    %c0_9 = arith.constant 0 : index
    %11 = vector.load %arg9[%c0_8, %c0_9] : memref<8x16xf32, #tpu.memory_space<vmem>>, vector<8x16xf32>
    tpu.vector_store %arg9[%c0_8, %c0_9], %10 {strides = array<i32>} : memref<8x16xf32, #tpu.memory_space<vmem>>, vector<8x16xf32>,
    %c2_i32 = arith.constant 2 : i32
    %12 = arith.cmpi eq, %arg3, %c2_i32 : i32
    %13 = arith.extui %12 : i1 to i32
    %c0_i32_10 = arith.constant 0 : i32
    %14 = arith.cmpi ne, %13, %c0_i32_10 : i32
    scf.if %14 {
      %c0_11 = arith.constant 0 : index
      %c0_12 = arith.constant 0 : index
      %15 = vector.load %arg9[%c0_11, %c0_12] : memref<8x16xf32, #tpu.memory_space<vmem>>, vector<8x16xf32>
      %c0_13 = arith.constant 0 : index
      %c0_14 = arith.constant 0 : index
      %16 = vector.load %arg6[%c0_13, %c0_14] : memref<8x1xf32, #tpu.memory_space<vmem>>, vector<8x1xf32>
      %17 = vector.broadcast %16 : vector<8x1xf32> to vector<8x16xf32>
      %18 = arith.mulf %15, %17 : vector<8x16xf32>
      %c0_15 = arith.constant 0 : index
      %c0_16 = arith.constant 0 : index
      %19 = vector.load %arg7[%c0_15, %c0_16] : memref<8x1xf32, #tpu.memory_space<vmem>>, vector<8x1xf32>
      %20 = vector.broadcast %19 : vector<8x1xf32> to vector<8x16xf32>
      %21 = arith.addf %18, %20 : vector<8x16xf32>
      %cst_17 = arith.constant 0.000000e+00 : f32
      %22 = vector.broadcast %cst_17 : f32 to vector<8x16xf32>
      %23 = arith.maximumf %21, %22 : vector<8x16xf32>
      %c0_18 = arith.constant 0 : index
      %c0_19 = arith.constant 0 : index
      %c0_20 = arith.constant 0 : index
      %c0_21 = arith.constant 0 : index
      %24 = vector.load %arg8[%c0_18, %c0_19, %c0_20, %c0_21] : memref<1x1x8x16xf32, #tpu.memory_space<vmem>>, vector<1x1x8x16xf32>
      %25 = vector.shape_cast %24 : vector<1x1x8x16xf32> to vector<8x16xf32>
      %26 = vector.shape_cast %23 : vector<8x16xf32> to vector<1x1x8x16xf32>
      tpu.vector_store %arg8[%c0_18, %c0_19, %c0_20, %c0_21], %26 {strides = array<i32>} : memref<1x1x8x16xf32, #tpu.memory_space<vmem>>, vector<1x1x8x16xf32>,
    } else {
    }
    return
  }
  func.func @transform_0(%arg0: i32, %arg1: i32, %arg2: i32, %arg3: i32) -> (i32, i32, i32, i32) {
    %0 = arith.addi %arg1, %arg3 : i32
    %c0_i32 = arith.constant 0 : i32
    %c0_i32_0 = arith.constant 0 : i32
    return %arg0, %0, %c0_i32, %arg2 : i32, i32, i32, i32
  }
  func.func @transform_1(%arg0: i32, %arg1: i32, %arg2: i32, %arg3: i32) -> (i32, i32, i32) {
    %c0_i32 = arith.constant 0 : i32
    %c0_i32_0 = arith.constant 0 : i32
    %c0_i32_1 = arith.constant 0 : i32
    %c0_i32_2 = arith.constant 0 : i32
    return %c0_i32, %c0_i32_0, %c0_i32_1 : i32, i32, i32
  }
  func.func @transform_2(%arg0: i32, %arg1: i32, %arg2: i32, %arg3: i32) -> (i32, i32) {
    %c0_i32 = arith.constant 0 : i32
    %c0_i32_0 = arith.constant 0 : i32
    %c0_i32_1 = arith.constant 0 : i32
    return %c0_i32, %c0_i32_0 : i32, i32
  }
  func.func @transform_3(%arg0: i32, %arg1: i32, %arg2: i32, %arg3: i32) -> (i32, i32) {
    %c0_i32 = arith.constant 0 : i32
    %c0_i32_0 = arith.constant 0 : i32
    %c0_i32_1 = arith.constant 0 : i32
    return %c0_i32, %c0_i32_0 : i32, i32
  }
  func.func @transform_4(%arg0: i32, %arg1: i32, %arg2: i32, %arg3: i32) -> (i32, i32, i32, i32) {
    %c0_i32 = arith.constant 0 : i32
    %c0_i32_0 = arith.constant 0 : i32
    return %arg0, %arg1, %c0_i32, %arg2 : i32, i32, i32, i32
  }
}

module attributes {stable_mosaic.version = 11 : i64} {
  func.func @_maxpool8_kernel(%arg0: i32, %arg1: memref<8x64xf32, #tpu.memory_space<vmem>>, %arg2: memref<1x64xf32, #tpu.memory_space<vmem>>) attributes {dimension_semantics = [#tpu.dimension_semantics<parallel>], iteration_bounds = array<i64: 1>, scalar_prefetch = 0 : i64, scratch_operands = 0 : i64, tpu.core_type = #tpu.core_type<tc>, window_params = [{transform_indices = @transform_0, window_bounds = array<i64: 8, 64>}, {transform_indices = @transform_1, window_bounds = array<i64: 1, 64>}]} {
    %c0 = arith.constant 0 : index
    %c0_0 = arith.constant 0 : index
    %0 = vector.load %arg1[%c0, %c0_0] : memref<8x64xf32, #tpu.memory_space<vmem>>, vector<8x64xf32>
    %cst = arith.constant dense<0xFF800000> : vector<64xf32>
    %1 = vector.multi_reduction <maximumf>, %0, %cst [0] : vector<8x64xf32> to vector<64xf32>
    %2 = vector.shape_cast %1 : vector<64xf32> to vector<1x64xf32>
    %c0_1 = arith.constant 0 : index
    %c0_2 = arith.constant 0 : index
    %3 = vector.load %arg2[%c0_1, %c0_2] : memref<1x64xf32, #tpu.memory_space<vmem>>, vector<1x64xf32>
    tpu.vector_store %arg2[%c0_1, %c0_2], %2 {strides = array<i32>} : memref<1x64xf32, #tpu.memory_space<vmem>>, vector<1x64xf32>,
    return
  }
  func.func @transform_0(%arg0: i32) -> (i32, i32) {
    %c0_i32 = arith.constant 0 : i32
    %c0_i32_0 = arith.constant 0 : i32
    return %c0_i32, %arg0 : i32, i32
  }
  func.func @transform_1(%arg0: i32) -> (i32, i32) {
    %c0_i32 = arith.constant 0 : i32
    %c0_i32_0 = arith.constant 0 : i32
    return %c0_i32, %arg0 : i32, i32
  }
}

module attributes {stable_mosaic.version = 11 : i64} {
  func.func @_conv_tap_gemm_kernel(%arg0: i32, %arg1: i32, %arg2: i32, %arg3: i32, %arg4: memref<1x1x72x4xbf16, #tpu.memory_space<vmem>>, %arg5: memref<3x16x72xbf16, #tpu.memory_space<vmem>>, %arg6: memref<16x1xf32, #tpu.memory_space<vmem>>, %arg7: memref<16x1xf32, #tpu.memory_space<vmem>>, %arg8: memref<1x1x16x4xf32, #tpu.memory_space<vmem>>, %arg9: memref<16x4xf32, #tpu.memory_space<vmem>>) attributes {dimension_semantics = [#tpu.dimension_semantics<parallel>, #tpu.dimension_semantics<parallel>, #tpu.dimension_semantics<parallel>, #tpu.dimension_semantics<arbitrary>], iteration_bounds = array<i64: 1, 2, 1, 3>, scalar_prefetch = 0 : i64, scratch_operands = 1 : i64, tpu.core_type = #tpu.core_type<tc>, window_params = [{transform_indices = @transform_0, window_bounds = array<i64: 1, 1, 72, 4>}, {pipeline_mode = #tpu.pipeline_mode<synchronous>, transform_indices = @transform_1, window_bounds = array<i64: 3, 16, 72>}, {pipeline_mode = #tpu.pipeline_mode<synchronous>, transform_indices = @transform_2, window_bounds = array<i64: 16, 1>}, {pipeline_mode = #tpu.pipeline_mode<synchronous>, transform_indices = @transform_3, window_bounds = array<i64: 16, 1>}, {transform_indices = @transform_4, window_bounds = array<i64: 1, 1, 16, 4>}]} {
    %c0_i32 = arith.constant 0 : i32
    %0 = arith.cmpi eq, %arg3, %c0_i32 : i32
    %1 = arith.extui %0 : i1 to i32
    %c0_i32_0 = arith.constant 0 : i32
    %2 = arith.cmpi ne, %1, %c0_i32_0 : i32
    scf.if %2 {
      %cst_11 = arith.constant 0.000000e+00 : f32
      %15 = vector.broadcast %cst_11 : f32 to vector<16x4xf32>
      %c0_12 = arith.constant 0 : index
      %c0_13 = arith.constant 0 : index
      %16 = vector.load %arg9[%c0_12, %c0_13] : memref<16x4xf32, #tpu.memory_space<vmem>>, vector<16x4xf32>
      tpu.vector_store %arg9[%c0_12, %c0_13], %15 {strides = array<i32>} : memref<16x4xf32, #tpu.memory_space<vmem>>, vector<16x4xf32>,
    } else {
    }
    %c0 = arith.constant 0 : index
    %c0_1 = arith.constant 0 : index
    %3 = vector.load %arg9[%c0, %c0_1] : memref<16x4xf32, #tpu.memory_space<vmem>>, vector<16x4xf32>
    %4 = arith.index_cast %arg3 : i32 to index
    %c0_2 = arith.constant 0 : index
    %c0_3 = arith.constant 0 : index
    %5 = vector.load %arg5[%4, %c0_2, %c0_3] : memref<3x16x72xbf16, #tpu.memory_space<vmem>>, vector<1x16x72xbf16>
    %6 = vector.shape_cast %5 : vector<1x16x72xbf16> to vector<16x72xbf16>
    %c0_4 = arith.constant 0 : index
    %c0_5 = arith.constant 0 : index
    %c0_6 = arith.constant 0 : index
    %c0_7 = arith.constant 0 : index
    %7 = vector.load %arg4[%c0_4, %c0_5, %c0_6, %c0_7] : memref<1x1x72x4xbf16, #tpu.memory_space<vmem>>, vector<1x1x72x4xbf16>
    %8 = vector.shape_cast %7 : vector<1x1x72x4xbf16> to vector<72x4xbf16>
    %cst = arith.constant dense<0.000000e+00> : vector<16x4xf32>
    %9 = tpu.matmul %6, %8, %cst {dimension_numbers = #tpu.dot_dimension_numbers<[1], [0], [0], [1], [0, 0, 1, 1], [], []>} : vector<16x72xbf16>, vector<72x4xbf16>, vector<16x4xf32> -> vector<16x4xf32>
    %10 = arith.addf %3, %9 : vector<16x4xf32>
    %c0_8 = arith.constant 0 : index
    %c0_9 = arith.constant 0 : index
    %11 = vector.load %arg9[%c0_8, %c0_9] : memref<16x4xf32, #tpu.memory_space<vmem>>, vector<16x4xf32>
    tpu.vector_store %arg9[%c0_8, %c0_9], %10 {strides = array<i32>} : memref<16x4xf32, #tpu.memory_space<vmem>>, vector<16x4xf32>,
    %c2_i32 = arith.constant 2 : i32
    %12 = arith.cmpi eq, %arg3, %c2_i32 : i32
    %13 = arith.extui %12 : i1 to i32
    %c0_i32_10 = arith.constant 0 : i32
    %14 = arith.cmpi ne, %13, %c0_i32_10 : i32
    scf.if %14 {
      %c0_11 = arith.constant 0 : index
      %c0_12 = arith.constant 0 : index
      %15 = vector.load %arg9[%c0_11, %c0_12] : memref<16x4xf32, #tpu.memory_space<vmem>>, vector<16x4xf32>
      %c0_13 = arith.constant 0 : index
      %c0_14 = arith.constant 0 : index
      %16 = vector.load %arg6[%c0_13, %c0_14] : memref<16x1xf32, #tpu.memory_space<vmem>>, vector<16x1xf32>
      %17 = vector.broadcast %16 : vector<16x1xf32> to vector<16x4xf32>
      %18 = arith.mulf %15, %17 : vector<16x4xf32>
      %c0_15 = arith.constant 0 : index
      %c0_16 = arith.constant 0 : index
      %19 = vector.load %arg7[%c0_15, %c0_16] : memref<16x1xf32, #tpu.memory_space<vmem>>, vector<16x1xf32>
      %20 = vector.broadcast %19 : vector<16x1xf32> to vector<16x4xf32>
      %21 = arith.addf %18, %20 : vector<16x4xf32>
      %cst_17 = arith.constant 0.000000e+00 : f32
      %22 = vector.broadcast %cst_17 : f32 to vector<16x4xf32>
      %23 = arith.maximumf %21, %22 : vector<16x4xf32>
      %c0_18 = arith.constant 0 : index
      %c0_19 = arith.constant 0 : index
      %c0_20 = arith.constant 0 : index
      %c0_21 = arith.constant 0 : index
      %24 = vector.load %arg8[%c0_18, %c0_19, %c0_20, %c0_21] : memref<1x1x16x4xf32, #tpu.memory_space<vmem>>, vector<1x1x16x4xf32>
      %25 = vector.shape_cast %24 : vector<1x1x16x4xf32> to vector<16x4xf32>
      %26 = vector.shape_cast %23 : vector<16x4xf32> to vector<1x1x16x4xf32>
      tpu.vector_store %arg8[%c0_18, %c0_19, %c0_20, %c0_21], %26 {strides = array<i32>} : memref<1x1x16x4xf32, #tpu.memory_space<vmem>>, vector<1x1x16x4xf32>,
    } else {
    }
    return
  }
  func.func @transform_0(%arg0: i32, %arg1: i32, %arg2: i32, %arg3: i32) -> (i32, i32, i32, i32) {
    %0 = arith.addi %arg1, %arg3 : i32
    %c0_i32 = arith.constant 0 : i32
    %c0_i32_0 = arith.constant 0 : i32
    return %arg0, %0, %c0_i32, %arg2 : i32, i32, i32, i32
  }
  func.func @transform_1(%arg0: i32, %arg1: i32, %arg2: i32, %arg3: i32) -> (i32, i32, i32) {
    %c0_i32 = arith.constant 0 : i32
    %c0_i32_0 = arith.constant 0 : i32
    %c0_i32_1 = arith.constant 0 : i32
    %c0_i32_2 = arith.constant 0 : i32
    return %c0_i32, %c0_i32_0, %c0_i32_1 : i32, i32, i32
  }
  func.func @transform_2(%arg0: i32, %arg1: i32, %arg2: i32, %arg3: i32) -> (i32, i32) {
    %c0_i32 = arith.constant 0 : i32
    %c0_i32_0 = arith.constant 0 : i32
    %c0_i32_1 = arith.constant 0 : i32
    return %c0_i32, %c0_i32_0 : i32, i32
  }
  func.func @transform_3(%arg0: i32, %arg1: i32, %arg2: i32, %arg3: i32) -> (i32, i32) {
    %c0_i32 = arith.constant 0 : i32
    %c0_i32_0 = arith.constant 0 : i32
    %c0_i32_1 = arith.constant 0 : i32
    return %c0_i32, %c0_i32_0 : i32, i32
  }
  func.func @transform_4(%arg0: i32, %arg1: i32, %arg2: i32, %arg3: i32) -> (i32, i32, i32, i32) {
    %c0_i32 = arith.constant 0 : i32
    %c0_i32_0 = arith.constant 0 : i32
    return %arg0, %arg1, %c0_i32, %arg2 : i32, i32, i32, i32
  }
}

module attributes {stable_mosaic.version = 11 : i64} {
  func.func @_conv_tap_gemm_kernel(%arg0: i32, %arg1: i32, %arg2: i32, %arg3: i32, %arg4: memref<1x1x144x4xbf16, #tpu.memory_space<vmem>>, %arg5: memref<3x16x144xbf16, #tpu.memory_space<vmem>>, %arg6: memref<16x1xf32, #tpu.memory_space<vmem>>, %arg7: memref<16x1xf32, #tpu.memory_space<vmem>>, %arg8: memref<1x1x16x4xf32, #tpu.memory_space<vmem>>, %arg9: memref<16x4xf32, #tpu.memory_space<vmem>>) attributes {dimension_semantics = [#tpu.dimension_semantics<parallel>, #tpu.dimension_semantics<parallel>, #tpu.dimension_semantics<parallel>, #tpu.dimension_semantics<arbitrary>], iteration_bounds = array<i64: 1, 2, 1, 3>, scalar_prefetch = 0 : i64, scratch_operands = 1 : i64, tpu.core_type = #tpu.core_type<tc>, window_params = [{transform_indices = @transform_0, window_bounds = array<i64: 1, 1, 144, 4>}, {pipeline_mode = #tpu.pipeline_mode<synchronous>, transform_indices = @transform_1, window_bounds = array<i64: 3, 16, 144>}, {pipeline_mode = #tpu.pipeline_mode<synchronous>, transform_indices = @transform_2, window_bounds = array<i64: 16, 1>}, {pipeline_mode = #tpu.pipeline_mode<synchronous>, transform_indices = @transform_3, window_bounds = array<i64: 16, 1>}, {transform_indices = @transform_4, window_bounds = array<i64: 1, 1, 16, 4>}]} {
    %c0_i32 = arith.constant 0 : i32
    %0 = arith.cmpi eq, %arg3, %c0_i32 : i32
    %1 = arith.extui %0 : i1 to i32
    %c0_i32_0 = arith.constant 0 : i32
    %2 = arith.cmpi ne, %1, %c0_i32_0 : i32
    scf.if %2 {
      %cst_11 = arith.constant 0.000000e+00 : f32
      %15 = vector.broadcast %cst_11 : f32 to vector<16x4xf32>
      %c0_12 = arith.constant 0 : index
      %c0_13 = arith.constant 0 : index
      %16 = vector.load %arg9[%c0_12, %c0_13] : memref<16x4xf32, #tpu.memory_space<vmem>>, vector<16x4xf32>
      tpu.vector_store %arg9[%c0_12, %c0_13], %15 {strides = array<i32>} : memref<16x4xf32, #tpu.memory_space<vmem>>, vector<16x4xf32>,
    } else {
    }
    %c0 = arith.constant 0 : index
    %c0_1 = arith.constant 0 : index
    %3 = vector.load %arg9[%c0, %c0_1] : memref<16x4xf32, #tpu.memory_space<vmem>>, vector<16x4xf32>
    %4 = arith.index_cast %arg3 : i32 to index
    %c0_2 = arith.constant 0 : index
    %c0_3 = arith.constant 0 : index
    %5 = vector.load %arg5[%4, %c0_2, %c0_3] : memref<3x16x144xbf16, #tpu.memory_space<vmem>>, vector<1x16x144xbf16>
    %6 = vector.shape_cast %5 : vector<1x16x144xbf16> to vector<16x144xbf16>
    %c0_4 = arith.constant 0 : index
    %c0_5 = arith.constant 0 : index
    %c0_6 = arith.constant 0 : index
    %c0_7 = arith.constant 0 : index
    %7 = vector.load %arg4[%c0_4, %c0_5, %c0_6, %c0_7] : memref<1x1x144x4xbf16, #tpu.memory_space<vmem>>, vector<1x1x144x4xbf16>
    %8 = vector.shape_cast %7 : vector<1x1x144x4xbf16> to vector<144x4xbf16>
    %cst = arith.constant dense<0.000000e+00> : vector<16x4xf32>
    %9 = tpu.matmul %6, %8, %cst {dimension_numbers = #tpu.dot_dimension_numbers<[1], [0], [0], [1], [0, 0, 1, 1], [], []>} : vector<16x144xbf16>, vector<144x4xbf16>, vector<16x4xf32> -> vector<16x4xf32>
    %10 = arith.addf %3, %9 : vector<16x4xf32>
    %c0_8 = arith.constant 0 : index
    %c0_9 = arith.constant 0 : index
    %11 = vector.load %arg9[%c0_8, %c0_9] : memref<16x4xf32, #tpu.memory_space<vmem>>, vector<16x4xf32>
    tpu.vector_store %arg9[%c0_8, %c0_9], %10 {strides = array<i32>} : memref<16x4xf32, #tpu.memory_space<vmem>>, vector<16x4xf32>,
    %c2_i32 = arith.constant 2 : i32
    %12 = arith.cmpi eq, %arg3, %c2_i32 : i32
    %13 = arith.extui %12 : i1 to i32
    %c0_i32_10 = arith.constant 0 : i32
    %14 = arith.cmpi ne, %13, %c0_i32_10 : i32
    scf.if %14 {
      %c0_11 = arith.constant 0 : index
      %c0_12 = arith.constant 0 : index
      %15 = vector.load %arg9[%c0_11, %c0_12] : memref<16x4xf32, #tpu.memory_space<vmem>>, vector<16x4xf32>
      %c0_13 = arith.constant 0 : index
      %c0_14 = arith.constant 0 : index
      %16 = vector.load %arg6[%c0_13, %c0_14] : memref<16x1xf32, #tpu.memory_space<vmem>>, vector<16x1xf32>
      %17 = vector.broadcast %16 : vector<16x1xf32> to vector<16x4xf32>
      %18 = arith.mulf %15, %17 : vector<16x4xf32>
      %c0_15 = arith.constant 0 : index
      %c0_16 = arith.constant 0 : index
      %19 = vector.load %arg7[%c0_15, %c0_16] : memref<16x1xf32, #tpu.memory_space<vmem>>, vector<16x1xf32>
      %20 = vector.broadcast %19 : vector<16x1xf32> to vector<16x4xf32>
      %21 = arith.addf %18, %20 : vector<16x4xf32>
      %cst_17 = arith.constant 0.000000e+00 : f32
      %22 = vector.broadcast %cst_17 : f32 to vector<16x4xf32>
      %23 = arith.maximumf %21, %22 : vector<16x4xf32>
      %c0_18 = arith.constant 0 : index
      %c0_19 = arith.constant 0 : index
      %c0_20 = arith.constant 0 : index
      %c0_21 = arith.constant 0 : index
      %24 = vector.load %arg8[%c0_18, %c0_19, %c0_20, %c0_21] : memref<1x1x16x4xf32, #tpu.memory_space<vmem>>, vector<1x1x16x4xf32>
      %25 = vector.shape_cast %24 : vector<1x1x16x4xf32> to vector<16x4xf32>
      %26 = vector.shape_cast %23 : vector<16x4xf32> to vector<1x1x16x4xf32>
      tpu.vector_store %arg8[%c0_18, %c0_19, %c0_20, %c0_21], %26 {strides = array<i32>} : memref<1x1x16x4xf32, #tpu.memory_space<vmem>>, vector<1x1x16x4xf32>,
    } else {
    }
    return
  }
  func.func @transform_0(%arg0: i32, %arg1: i32, %arg2: i32, %arg3: i32) -> (i32, i32, i32, i32) {
    %0 = arith.addi %arg1, %arg3 : i32
    %c0_i32 = arith.constant 0 : i32
    %c0_i32_0 = arith.constant 0 : i32
    return %arg0, %0, %c0_i32, %arg2 : i32, i32, i32, i32
  }
  func.func @transform_1(%arg0: i32, %arg1: i32, %arg2: i32, %arg3: i32) -> (i32, i32, i32) {
    %c0_i32 = arith.constant 0 : i32
    %c0_i32_0 = arith.constant 0 : i32
    %c0_i32_1 = arith.constant 0 : i32
    %c0_i32_2 = arith.constant 0 : i32
    return %c0_i32, %c0_i32_0, %c0_i32_1 : i32, i32, i32
  }
  func.func @transform_2(%arg0: i32, %arg1: i32, %arg2: i32, %arg3: i32) -> (i32, i32) {
    %c0_i32 = arith.constant 0 : i32
    %c0_i32_0 = arith.constant 0 : i32
    %c0_i32_1 = arith.constant 0 : i32
    return %c0_i32, %c0_i32_0 : i32, i32
  }
  func.func @transform_3(%arg0: i32, %arg1: i32, %arg2: i32, %arg3: i32) -> (i32, i32) {
    %c0_i32 = arith.constant 0 : i32
    %c0_i32_0 = arith.constant 0 : i32
    %c0_i32_1 = arith.constant 0 : i32
    return %c0_i32, %c0_i32_0 : i32, i32
  }
  func.func @transform_4(%arg0: i32, %arg1: i32, %arg2: i32, %arg3: i32) -> (i32, i32, i32, i32) {
    %c0_i32 = arith.constant 0 : i32
    %c0_i32_0 = arith.constant 0 : i32
    return %arg0, %arg1, %c0_i32, %arg2 : i32, i32, i32, i32
  }
}

module attributes {stable_mosaic.version = 11 : i64} {
  func.func @_conv_tap_gemm_kernel(%arg0: i32, %arg1: i32, %arg2: i32, %arg3: i32, %arg4: memref<1x1x252x16xbf16, #tpu.memory_space<vmem>>, %arg5: memref<3x32x252xbf16, #tpu.memory_space<vmem>>, %arg6: memref<32x1xf32, #tpu.memory_space<vmem>>, %arg7: memref<32x1xf32, #tpu.memory_space<vmem>>, %arg8: memref<1x1x32x16xf32, #tpu.memory_space<vmem>>, %arg9: memref<32x16xf32, #tpu.memory_space<vmem>>) attributes {dimension_semantics = [#tpu.dimension_semantics<parallel>, #tpu.dimension_semantics<parallel>, #tpu.dimension_semantics<parallel>, #tpu.dimension_semantics<arbitrary>], iteration_bounds = array<i64: 1, 2, 1, 3>, scalar_prefetch = 0 : i64, scratch_operands = 1 : i64, tpu.core_type = #tpu.core_type<tc>, window_params = [{transform_indices = @transform_0, window_bounds = array<i64: 1, 1, 252, 16>}, {pipeline_mode = #tpu.pipeline_mode<synchronous>, transform_indices = @transform_1, window_bounds = array<i64: 3, 32, 252>}, {pipeline_mode = #tpu.pipeline_mode<synchronous>, transform_indices = @transform_2, window_bounds = array<i64: 32, 1>}, {pipeline_mode = #tpu.pipeline_mode<synchronous>, transform_indices = @transform_3, window_bounds = array<i64: 32, 1>}, {transform_indices = @transform_4, window_bounds = array<i64: 1, 1, 32, 16>}]} {
    %c0_i32 = arith.constant 0 : i32
    %0 = arith.cmpi eq, %arg3, %c0_i32 : i32
    %1 = arith.extui %0 : i1 to i32
    %c0_i32_0 = arith.constant 0 : i32
    %2 = arith.cmpi ne, %1, %c0_i32_0 : i32
    scf.if %2 {
      %cst_11 = arith.constant 0.000000e+00 : f32
      %15 = vector.broadcast %cst_11 : f32 to vector<32x16xf32>
      %c0_12 = arith.constant 0 : index
      %c0_13 = arith.constant 0 : index
      %16 = vector.load %arg9[%c0_12, %c0_13] : memref<32x16xf32, #tpu.memory_space<vmem>>, vector<32x16xf32>
      tpu.vector_store %arg9[%c0_12, %c0_13], %15 {strides = array<i32>} : memref<32x16xf32, #tpu.memory_space<vmem>>, vector<32x16xf32>,
    } else {
    }
    %c0 = arith.constant 0 : index
    %c0_1 = arith.constant 0 : index
    %3 = vector.load %arg9[%c0, %c0_1] : memref<32x16xf32, #tpu.memory_space<vmem>>, vector<32x16xf32>
    %4 = arith.index_cast %arg3 : i32 to index
    %c0_2 = arith.constant 0 : index
    %c0_3 = arith.constant 0 : index
    %5 = vector.load %arg5[%4, %c0_2, %c0_3] : memref<3x32x252xbf16, #tpu.memory_space<vmem>>, vector<1x32x252xbf16>
    %6 = vector.shape_cast %5 : vector<1x32x252xbf16> to vector<32x252xbf16>
    %c0_4 = arith.constant 0 : index
    %c0_5 = arith.constant 0 : index
    %c0_6 = arith.constant 0 : index
    %c0_7 = arith.constant 0 : index
    %7 = vector.load %arg4[%c0_4, %c0_5, %c0_6, %c0_7] : memref<1x1x252x16xbf16, #tpu.memory_space<vmem>>, vector<1x1x252x16xbf16>
    %8 = vector.shape_cast %7 : vector<1x1x252x16xbf16> to vector<252x16xbf16>
    %cst = arith.constant dense<0.000000e+00> : vector<32x16xf32>
    %9 = tpu.matmul %6, %8, %cst {dimension_numbers = #tpu.dot_dimension_numbers<[1], [0], [0], [1], [0, 0, 1, 1], [], []>} : vector<32x252xbf16>, vector<252x16xbf16>, vector<32x16xf32> -> vector<32x16xf32>
    %10 = arith.addf %3, %9 : vector<32x16xf32>
    %c0_8 = arith.constant 0 : index
    %c0_9 = arith.constant 0 : index
    %11 = vector.load %arg9[%c0_8, %c0_9] : memref<32x16xf32, #tpu.memory_space<vmem>>, vector<32x16xf32>
    tpu.vector_store %arg9[%c0_8, %c0_9], %10 {strides = array<i32>} : memref<32x16xf32, #tpu.memory_space<vmem>>, vector<32x16xf32>,
    %c2_i32 = arith.constant 2 : i32
    %12 = arith.cmpi eq, %arg3, %c2_i32 : i32
    %13 = arith.extui %12 : i1 to i32
    %c0_i32_10 = arith.constant 0 : i32
    %14 = arith.cmpi ne, %13, %c0_i32_10 : i32
    scf.if %14 {
      %c0_11 = arith.constant 0 : index
      %c0_12 = arith.constant 0 : index
      %15 = vector.load %arg9[%c0_11, %c0_12] : memref<32x16xf32, #tpu.memory_space<vmem>>, vector<32x16xf32>
      %c0_13 = arith.constant 0 : index
      %c0_14 = arith.constant 0 : index
      %16 = vector.load %arg6[%c0_13, %c0_14] : memref<32x1xf32, #tpu.memory_space<vmem>>, vector<32x1xf32>
      %17 = vector.broadcast %16 : vector<32x1xf32> to vector<32x16xf32>
      %18 = arith.mulf %15, %17 : vector<32x16xf32>
      %c0_15 = arith.constant 0 : index
      %c0_16 = arith.constant 0 : index
      %19 = vector.load %arg7[%c0_15, %c0_16] : memref<32x1xf32, #tpu.memory_space<vmem>>, vector<32x1xf32>
      %20 = vector.broadcast %19 : vector<32x1xf32> to vector<32x16xf32>
      %21 = arith.addf %18, %20 : vector<32x16xf32>
      %cst_17 = arith.constant 0.000000e+00 : f32
      %22 = vector.broadcast %cst_17 : f32 to vector<32x16xf32>
      %23 = arith.maximumf %21, %22 : vector<32x16xf32>
      %c0_18 = arith.constant 0 : index
      %c0_19 = arith.constant 0 : index
      %c0_20 = arith.constant 0 : index
      %c0_21 = arith.constant 0 : index
      %24 = vector.load %arg8[%c0_18, %c0_19, %c0_20, %c0_21] : memref<1x1x32x16xf32, #tpu.memory_space<vmem>>, vector<1x1x32x16xf32>
      %25 = vector.shape_cast %24 : vector<1x1x32x16xf32> to vector<32x16xf32>
      %26 = vector.shape_cast %23 : vector<32x16xf32> to vector<1x1x32x16xf32>
      tpu.vector_store %arg8[%c0_18, %c0_19, %c0_20, %c0_21], %26 {strides = array<i32>} : memref<1x1x32x16xf32, #tpu.memory_space<vmem>>, vector<1x1x32x16xf32>,
    } else {
    }
    return
  }
  func.func @transform_0(%arg0: i32, %arg1: i32, %arg2: i32, %arg3: i32) -> (i32, i32, i32, i32) {
    %0 = arith.addi %arg1, %arg3 : i32
    %c0_i32 = arith.constant 0 : i32
    %c0_i32_0 = arith.constant 0 : i32
    return %arg0, %0, %c0_i32, %arg2 : i32, i32, i32, i32
  }
  func.func @transform_1(%arg0: i32, %arg1: i32, %arg2: i32, %arg3: i32) -> (i32, i32, i32) {
    %c0_i32 = arith.constant 0 : i32
    %c0_i32_0 = arith.constant 0 : i32
    %c0_i32_1 = arith.constant 0 : i32
    %c0_i32_2 = arith.constant 0 : i32
    return %c0_i32, %c0_i32_0, %c0_i32_1 : i32, i32, i32
  }
  func.func @transform_2(%arg0: i32, %arg1: i32, %arg2: i32, %arg3: i32) -> (i32, i32) {
    %c0_i32 = arith.constant 0 : i32
    %c0_i32_0 = arith.constant 0 : i32
    %c0_i32_1 = arith.constant 0 : i32
    return %c0_i32, %c0_i32_0 : i32, i32
  }
  func.func @transform_3(%arg0: i32, %arg1: i32, %arg2: i32, %arg3: i32) -> (i32, i32) {
    %c0_i32 = arith.constant 0 : i32
    %c0_i32_0 = arith.constant 0 : i32
    %c0_i32_1 = arith.constant 0 : i32
    return %c0_i32, %c0_i32_0 : i32, i32
  }
  func.func @transform_4(%arg0: i32, %arg1: i32, %arg2: i32, %arg3: i32) -> (i32, i32, i32, i32) {
    %c0_i32 = arith.constant 0 : i32
    %c0_i32_0 = arith.constant 0 : i32
    return %arg0, %arg1, %c0_i32, %arg2 : i32, i32, i32, i32
  }
}

</mosaic_0001>

<llo_original>
// kernel: unet_dap_forward.9
$region0: #{unet_dap_forward.9}
  #allocation0 [shape = 'u32[]', space=smem, size = 0x4, offset = 0x4, fixed_abs, tag = 'smem constant byte address 0x4 - core index']
  #allocation1 [shape = 'u32[144,128]{1,0:T(1,128)}', space=vmem, size = 0x12000, scoped, tag = 'internal scratch']
  #allocation2 [shape = 'f32[4,64]{1,0:T(4,128)}', space=vmem, size = 0x800, scoped, tag = 'scratch operand']
  %s0 = inlined_call_operand.vmem [shape: bf16[1,10,36,64], index: 0, kind: input, shape index: {}]
  %s1 = inlined_call_operand.vmem [shape: bf16[3,4,36], index: 1, kind: input, shape index: {}]
  %s2 = inlined_call_operand.vmem [shape: f32[4,1], index: 2, kind: input, shape index: {}]
  %s3 = inlined_call_operand.vmem [shape: f32[4,1], index: 3, kind: input, shape index: {}]
  %s4 = inlined_call_operand.vmem [shape: f32[1,8,4,64], index: 4, kind: output, shape index: {}]
  %s5 = sld [smem:[#allocation0]]
  $region57: #{unet_dap_forward.9} parent=0
    _
  %s7 = ssub.s32 1, %s5
  %s8 = scalar_select 0, %s7, %s5
  loop: start=0, step=1, limit=26
  $region2: #{unet_dap_forward.9} parent=0 // loop_pre_header
    _
  $region3: #{unet_dap_forward.9} parent=0 // loop_header
    %s10 = sphi 0, %s14
    %p11 = scmp.ge.s32.totalorder %s10, 26
    %s17 = sphi 0, %s43
    %s18 = sphi 0, %s39
    %s19 = sphi 0, %s35
    %s20 = sphi 0, %s31
    %s21 = sphi 0, %s17
    %s22 = sphi 0, %s18
    %s23 = sphi 0, %s19
    %s24 = sphi 0, %s20
    %s25 = sphi 0, %s21
    %s26 = sphi 0, %s22
    %s27 = sphi 0, %s23
    %s28 = sphi 0, %s24
    %s52 = sphi 0, %s54
    %s55 = sphi 0, %s52
    %s56 = sphi 0, %s55
    %s72 = sphi 0, %s56
    %s76 = sphi 0, %s76
    %s78 = sphi 0, %s76
    %s79 = sphi 0, %s78
    %s93 = sphi 0, %s79
    %s97 = sphi 0, %s97
    %s99 = sphi 0, %s97
    %s100 = sphi 0, %s99
    %s114 = sphi 0, %s100
    %s118 = sphi 0, %s118
    %s120 = sphi 0, %s118
    %s121 = sphi 0, %s120
    %s135 = sphi 0, %s121
    %s145 = sphi 0, %s147
    %s148 = sphi 0, %s145
    %s149 = sphi 0, %s148
    %s165 = sphi 0, %s149
  $region4: #{unet_dap_forward.9} parent=0 // loop_header_branch
    %13 = sbr.rel (%p11) target = $region8
  $region5: #{unet_dap_forward.9} parent=0 // loop_body
    %s15 = ssub.s32 %s10, 1
    %s16 = ssub.s32 %s10, 2
    %s29 = sadd.s32 1, %s20
    %p30 = scmp.ge.s32.totalorder %s29, 3
    %s31 = scalar_select %p30, 0, %s29
    %s32 = sadd.s32 1, %s19
    %s33 = scalar_select %p30, %s32, %s19
    %p34 = scmp.ge.s32.totalorder %s33, 1
    %s35 = scalar_select %p34, 0, %s33
    %s36 = sadd.s32 1, %s18
    %s37 = scalar_select %p34, %s36, %s18
    %p38 = scmp.ge.s32.totalorder %s37, 8
    %s39 = scalar_select %p38, 0, %s37
    %s40 = sadd.s32 1, %s17
    %s41 = scalar_select %p38, %s40, %s17
    %p42 = scmp.ge.s32.totalorder %s41, 1
    %s43 = scalar_select %p42, 0, %s41
    %s44 = sadd.s32 %s18, %s20
    %s45 = sadd.s32 %s39, %s31
    %s46 = ssub.s32 %s17, %s43
    %s47 = ssub.s32 %s44, %s45
    %s48 = sor.u32 %s46, %s47
    %s49 = ssub.s32 %s19, %s35
    %s50 = sor.u32 %s48, %s49
    %p51 = scmp.eq.s32.totalorder %s50, 0
    %s53 = sadd.s32 %s52, 1
    %s54 = scalar_select %p51, %s52, %s53
    %p57 = pneg %p51
    %p58 = scmp.eq.s32.totalorder %s10, 23
    %p59 = por %p57, %p58
    %p60 = scmp.ne.s32.totalorder %s52, %s55
    %p61 = scmp.eq.s32.totalorder %s10, 0
    %p62 = por %p60, %p61
    %p63 = scmp.ne.s32.totalorder %s52, %s55
    %p64 = scmp.eq.s32.totalorder %s15, 23
    %p65 = por %p63, %p64
    %p66 = scmp.ne.s32.totalorder %s55, %s56
    %p67 = scmp.eq.s32.totalorder %s15, 0
    %p68 = por %p66, %p67
    %p69 = scmp.ne.s32.totalorder %s55, %s56
    %p70 = scmp.eq.s32.totalorder %s16, 23
    %p71 = por %p69, %p70
    %p73 = scmp.ne.s32.totalorder %s56, %s72
    %p74 = scmp.eq.s32.totalorder %s16, 0
    %p75 = por %p73, %p74
    %s77 = sadd.s32 %s76, 1
    %p80 = scmp.eq.s32.totalorder %s10, 23
    %p81 = scmp.ne.s32.totalorder %s76, %s78
    %p82 = scmp.eq.s32.totalorder %s10, 0
    %p83 = por %p81, %p82
    %p84 = scmp.ne.s32.totalorder %s76, %s78
    %p85 = scmp.eq.s32.totalorder %s15, 23
    %p86 = por %p84, %p85
    %p87 = scmp.ne.s32.totalorder %s78, %s79
    %p88 = scmp.eq.s32.totalorder %s15, 0
    %p89 = por %p87, %p88
    %p90 = scmp.ne.s32.totalorder %s78, %s79
    %p91 = scmp.eq.s32.totalorder %s16, 23
    %p92 = por %p90, %p91
    %p94 = scmp.ne.s32.totalorder %s79, %s93
    %p95 = scmp.eq.s32.totalorder %s16, 0
    %p96 = por %p94, %p95
    %s98 = sadd.s32 %s97, 1
    %p101 = scmp.eq.s32.totalorder %s10, 23
    %p102 = scmp.ne.s32.totalorder %s97, %s99
    %p103 = scmp.eq.s32.totalorder %s10, 0
    %p104 = por %p102, %p103
    %p105 = scmp.ne.s32.totalorder %s97, %s99
    %p106 = scmp.eq.s32.totalorder %s15, 23
    %p107 = por %p105, %p106
    %p108 = scmp.ne.s32.totalorder %s99, %s100
    %p109 = scmp.eq.s32.totalorder %s15, 0
    %p110 = por %p108, %p109
    %p111 = scmp.ne.s32.totalorder %s99, %s100
    %p112 = scmp.eq.s32.totalorder %s16, 23
    %p113 = por %p111, %p112
    %p115 = scmp.ne.s32.totalorder %s100, %s114
    %p116 = scmp.eq.s32.totalorder %s16, 0
    %p117 = por %p115, %p116
    %s119 = sadd.s32 %s118, 1
    %p122 = scmp.eq.s32.totalorder %s10, 23
    %p123 = scmp.ne.s32.totalorder %s118, %s120
    %p124 = scmp.eq.s32.totalorder %s10, 0
    %p125 = por %p123, %p124
    %p126 = scmp.ne.s32.totalorder %s118, %s120
    %p127 = scmp.eq.s32.totalorder %s15, 23
    %p128 = por %p126, %p127
    %p129 = scmp.ne.s32.totalorder %s120, %s121
    %p130 = scmp.eq.s32.totalorder %s15, 0
    %p131 = por %p129, %p130
    %p132 = scmp.ne.s32.totalorder %s120, %s121
    %p133 = scmp.eq.s32.totalorder %s16, 23
    %p134 = por %p132, %p133
    %p136 = scmp.ne.s32.totalorder %s121, %s135
    %p137 = scmp.eq.s32.totalorder %s16, 0
    %p138 = por %p136, %p137
    %s139 = ssub.s32 %s17, %s43
    %s140 = ssub.s32 %s18, %s39
    %s141 = sor.u32 %s139, %s140
    %s142 = ssub.s32 %s19, %s35
    %s143 = sor.u32 %s141, %s142
    %p144 = scmp.eq.s32.totalorder %s143, 0
    %s146 = sadd.s32 %s145, 1
    %s147 = scalar_select %p144, %s145, %s146
    %p150 = pneg %p144
    %p151 = scmp.eq.s32.totalorder %s10, 23
    %p152 = por %p150, %p151
    %p153 = scmp.ne.s32.totalorder %s145, %s148
    %p154 = scmp.eq.s32.totalorder %s10, 0
    %p155 = por %p153, %p154
    %p156 = scmp.ne.s32.totalorder %s145, %s148
    %p157 = scmp.eq.s32.totalorder %s15, 23
    %p158 = por %p156, %p157
    %p159 = scmp.ne.s32.totalorder %s148, %s149
    %p160 = scmp.eq.s32.totalorder %s15, 0
    %p161 = por %p159, %p160
    %p162 = scmp.ne.s32.totalorder %s148, %s149
    %p163 = scmp.eq.s32.totalorder %s16, 23
    %p164 = por %p162, %p163
    %p166 = scmp.ne.s32.totalorder %s149, %s165
    %p167 = scmp.eq.s32.totalorder %s16, 0
    %p168 = por %p166, %p167
    %p169 = scmp.le.s32.totalorder 1, %s10
    %p170 = scmp.lt.s32.totalorder %s10, 25
    %p171 = pnand %p169, %p170
    %p172 = pneg %p171
    // Predicated region
    $region9: #{unet_dap_forward.9} parent=5 // pred_check
      _
    $region10: #{unet_dap_forward.9} parent=5 // pred_check_branch
      %174 = sbr.rel (%p171) target = $region12
    $region11: #{unet_dap_forward.9} parent=5 // pred_region
      %s175 = ssub.s32 %s10, 1
      // Predicated region
      $region13: #{unet_dap_forward.9} parent=11 // pred_check
        %p176 = pneg %p89
      $region14: #{unet_dap_forward.9} parent=11 // pred_check_branch
        %178 = sbr.rel (%p176) target = $region16
      $region15: #{unet_dap_forward.9} parent=11 // pred_region
        _
      $region16: #{unet_dap_forward.9} parent=11 // pred_fallthru
        _
      // Predicated region
      $region17: #{unet_dap_forward.9} parent=11 // pred_check
        %p179 = pneg %p110
      $region18: #{unet_dap_forward.9} parent=11 // pred_check_branch
        %181 = sbr.rel (%p179) target = $region20
      $region19: #{unet_dap_forward.9} parent=11 // pred_region
        _
      $region20: #{unet_dap_forward.9} parent=11 // pred_fallthru
        _
      // Predicated region
      $region21: #{unet_dap_forward.9} parent=11 // pred_check
        %p182 = pneg %p131
      $region22: #{unet_dap_forward.9} parent=11 // pred_check_branch
        %184 = sbr.rel (%p182) target = $region24
      $region23: #{unet_dap_forward.9} parent=11 // pred_region
        _
      $region24: #{unet_dap_forward.9} parent=11 // pred_fallthru
        _
    $region12: #{unet_dap_forward.9} parent=5 // pred_fallthru
      _
    %p185 = scmp.lt.s32.totalorder %s10, 24
    // Predicated region
    $region25: #{unet_dap_forward.9} parent=5 // pred_check
      %p186 = pneg %p185
    $region26: #{unet_dap_forward.9} parent=5 // pred_check_branch
      %188 = sbr.rel (%p186) target = $region28
    $region27: #{unet_dap_forward.9} parent=5 // pred_region
      // Predicated region
      $region29: #{unet_dap_forward.9} parent=27 // pred_check
        %p189 = pneg %p62
      $region30: #{unet_dap_forward.9} parent=27 // pred_check_branch
        %191 = sbr.rel (%p189) target = $region32
      $region31: #{unet_dap_forward.9} parent=27 // pred_region
        %s192 = sadd.s32 %s18, %s20
        %p193 = scmp.lt.s32.totalorder %s17, 0
        %s194 = scalar_select %p193, %s17, 0
        %p195 = scmp.lt.s32.totalorder %s192, 9
        %s196 = scalar_select %p195, %s192, 9
        %p197 = scmp.lt.s32.totalorder %s19, 0
        %s198 = scalar_select %p197, %s19, 0
        %s199 = smul.addr %s196, 5
        %s200 = sadd.s32 %s198, %s199
        %s201 = smul.addr %s194, 50
        %s202 = sadd.s32 %s200, %s201
        %s203 = smul.addr %s202, 4
        %s204 = scalar_lea.vmem %s0, %s203
        %s205 = sadd.s32 %s18, %s20
      $region32: #{unet_dap_forward.9} parent=27 // pred_fallthru
        _
    $region28: #{unet_dap_forward.9} parent=5 // pred_fallthru
      _
    %p206 = scmp.le.s32.totalorder 1, %s10
    %p207 = scmp.lt.s32.totalorder %s10, 25
    %p208 = pnand %p206, %p207
    %p209 = pneg %p208
    // Predicated region
    $region33: #{unet_dap_forward.9} parent=5 // pred_check
      _
    $region34: #{unet_dap_forward.9} parent=5 // pred_check_branch
      %211 = sbr.rel (%p208) target = $region36
    $region35: #{unet_dap_forward.9} parent=5 // pred_region
      %s212 = ssub.s32 %s10, 1
      %s213 = sadd.s32 %s22, %s24
      %p214 = scmp.lt.s32.totalorder %s21, 0
      %s215 = scalar_select %p214, %s21, 0
      %p216 = scmp.lt.s32.totalorder %s213, 9
      %s217 = scalar_select %p216, %s213, 9
      %p218 = scmp.lt.s32.totalorder %s23, 0
      %s219 = scalar_select %p218, %s23, 0
      %s220 = smul.addr %s217, 5
      %s221 = sadd.s32 %s219, %s220
      %s222 = smul.addr %s215, 50
      %s223 = sadd.s32 %s221, %s222
      %s224 = smul.addr %s223, 4
      %s225 = scalar_lea.vmem %s0, %s224
      %p226 = pneg %p68
      %p227 = pneg %p65
      %p228 = pneg %p89
      %p229 = pneg %p86
      %p230 = pneg %p110
      %p231 = pneg %p107
      %p232 = pneg %p131
      %p233 = pneg %p128
      %p234 = pneg %p161
      %p235 = pneg %p158
      %p236 = scmp.lt.s32.totalorder %s21, 0
      %s237 = scalar_select %p236, %s21, 0
      %p238 = scmp.lt.s32.totalorder %s22, 7
      %s239 = scalar_select %p238, %s22, 7
      %p240 = scmp.lt.s32.totalorder %s23, 0
      %s241 = scalar_select %p240, %s23, 0
      %s242 = sadd.s32 %s241, %s239
      %s243 = smul.addr %s237, 8
      %s244 = sadd.s32 %s242, %s243
      %s245 = smul.addr %s244, 4
      %s246 = scalar_lea.vmem %s4, %s245
      %s247 = sadd.s32 %s22, %s24
      %p248 = scmp.lt.s32.totalorder %s21, 0
      %s249 = scalar_select %p248, %s21, 0
      %p250 = scmp.lt.s32.totalorder %s247, 9
      %s251 = scalar_select %p250, %s247, 9
      %p252 = scmp.lt.s32.totalorder %s23, 0
      %s253 = scalar_select %p252, %s23, 0
      %s254 = smul.addr %s251, 5
      %s255 = sadd.s32 %s253, %s254
      %s256 = smul.addr %s249, 50
      %s257 = sadd.s32 %s255, %s256
      %s258 = smul.addr %s257, 4
      %s259 = scalar_lea.vmem %s0, %s258
      %s260 = sadd.s32 %s22, %s24
      %p261 = scmp.lt.s32.totalorder %s21, 0
      %s262 = scalar_select %p261, %s21, 0
      %p263 = scmp.lt.s32.totalorder %s22, 7
      %s264 = scalar_select %p263, %s22, 7
      %p265 = scmp.lt.s32.totalorder %s23, 0
      %s266 = scalar_select %p265, %s23, 0
      %s267 = sadd.s32 %s266, %s264
      %s268 = smul.addr %s262, 8
      %s269 = sadd.s32 %s267, %s268
      %s270 = smul.addr %s269, 4
      %s271 = scalar_lea.vmem %s4, %s270
      %p273 = scmp.eq.s32.totalorder %s24, 0
      // Predicated region
      $region37: #{unet_dap_forward.9} parent=35 // pred_check
        %p274 = pneg %p273
      $region38: #{unet_dap_forward.9} parent=35 // pred_check_branch
        %276 = sbr.rel (%p274) target = $region40
      $region39: #{unet_dap_forward.9} parent=35 // pred_region
        %vm277 = vcmask 519168
        %278 = vst.msk [vmem:[#allocation2] sm:$0xf] %vm277, 0.0
      $region40: #{unet_dap_forward.9} parent=35 // pred_fallthru
        _
      %v279 = vld [vmem:[#allocation2] sm:$0xf]
      %s280 = smul.addr %s24, 2
      %s281 = scalar_lea.vmem %s1, %s280
      %v282 = vld [vmem:[%s281] sm:$0x3]
      %v283 = vld [vmem:[%s259] sm:$0xf]
      %v284 = vld [vmem:[%s259 + $0x4] sm:$0xf]
      %v285 = vld [vmem:[%s259 + $0x8] sm:$0xf]
      %v286 = vld [vmem:[%s259 + $0xc] sm:$0xf]
      %v287 = vld [vmem:[%s259 + $0x10] sm:$0x3]
      %v293 = vunpack.c.l.b16 %v283
      %v294 = vunpack.c.l.b16 %v284
      %v295 = vunpack.c.l.b16 %v285
      %v296 = vunpack.c.l.b16 %v286
      %v297 = vunpack.c.l.b16 %v287
      %v298 = vpack.c.b16 %v294, %v293
      %v299 = vpack.c.b16 %v296, %v295
      %v300 = vpack.c.b16 %v297, %v297
      %vm303 = vcmask 293888
      %v305 = vsel %vm303, %v282, 0
      %vm307 = vcmask 1041408
      %v309 = vsel %vm307, %v300, 0
      %311 = vmatprep.subr.bf16.mxu0 0
      %312 = vmatpush1.bf16.msra.mxu0 %v298
      %313 = vmatprep.subr.bf16.mxu0 0
      %314 = vmatpush1.bf16.msra.mxu0 %v299
      %315 = vmatprep.subr.bf16.mxu0 0
      %316 = vmatpush1.bf16.msra.mxu0 %v309
      %317 = vmatprep.subr.bf16.mxu0 0
      %318 = vmatpush1.bf16.msra.mxu0 0
      %319 = vmatprep.subr.bf16.mxu0 0
      %320 = vmatpush1.bf16.msra.mxu0 0
      %321 = vmatprep.subr.bf16.mxu0 0
      %322 = vmatpush1.bf16.msra.mxu0 0
      %323 = vmatprep.subr.bf16.mxu0 0
      %324 = vmatpush1.bf16.msra.mxu0 0
      %325 = vmatprep.subr.bf16.mxu0 0
      %326 = vmatpush1.bf16.msra.mxu0 0
      %327 = vmatprep.subr.bf16.mxu0 0
      %328 = vmatpush1.bf16.msra.mxu0 0
      %329 = vmatprep.subr.bf16.mxu0 0
      %330 = vmatpush1.bf16.msra.mxu0 0
      %331 = vmatprep.subr.bf16.mxu0 0
      %332 = vmatpush1.bf16.msra.mxu0 0
      %333 = vmatprep.subr.bf16.mxu0 0
      %334 = vmatpush1.bf16.msra.mxu0 0
      %335 = vmatprep.subr.bf16.mxu0 0
      %336 = vmatpush1.bf16.msra.mxu0 0
      %337 = vmatprep.subr.bf16.mxu0 0
      %338 = vmatpush1.bf16.msra.mxu0 0
      %339 = vmatprep.subr.bf16.mxu0 0
      %340 = vmatpush1.bf16.msra.mxu0 0
      %341 = vmatprep.subr.bf16.mxu0 0
      %342 = vmatpush1.bf16.msra.mxu0 0
      %343 = vmatprep.mubr.bf16.mxu0 0
      %344 = vmatmul.mubr.bf16.gmra.mrb[0].mxu0 %v305
      %v345 = vpop.f32.mrb[0].mxu0
      %v346 = vadd.f32 0.0, %v345
      %v347 = vpop.f32.mrb[0].mxu0
      %v348 = vpop.f32.mrb[0].mxu0
      %v349 = vpop.f32.mrb[0].mxu0
      %350 = vdwg.mxu0
      %v351 = vadd.f32 %v279, %v346
      %vm352 = vcmask 519168
      %353 = vst.msk [vmem:[#allocation2] sm:$0xf] %vm352, %v351
      %p354 = scmp.eq.s32.totalorder %s24, 2
      // Predicated region
      $region41: #{unet_dap_forward.9} parent=35 // pred_check
        %p355 = pneg %p354
      $region42: #{unet_dap_forward.9} parent=35 // pred_check_branch
        %357 = sbr.rel (%p355) target = $region44
      $region43: #{unet_dap_forward.9} parent=35 // pred_region
        %v358 = vld [vmem:[#allocation2] sm:$0xf]
        %v359 = vld [vmem:[%s2] sm:$0xf]
        %361 = vset.pattern.permute.xlu0 0
        %362 = vperm.xlu0 %361, %v359
        %v363 = vpop.permute.xlu0 %362
        %v365 = vmul.f32 %v358, %v363
        %v366 = vld [vmem:[%s3] sm:$0xf]
        %368 = vset.pattern.permute.xlu0 0
        %369 = vperm.xlu0 %368, %v366
        %v370 = vpop.permute.xlu0 %369
        %v372 = vadd.f32 %v365, %v370
        %v373 = vmax.f32 %v372, 0.0
        %374 = vst.msk [vmem:[%s271] sm:$0xf] %vm352, %v373
      $region44: #{unet_dap_forward.9} parent=35 // pred_fallthru
        _
      %p375 = scmp.lt.s32.totalorder %s21, 0
      %s376 = scalar_select %p375, %s21, 0
      %p377 = scmp.lt.s32.totalorder %s22, 7
      %s378 = scalar_select %p377, %s22, 7
      %p379 = scmp.lt.s32.totalorder %s23, 0
      %s380 = scalar_select %p379, %s23, 0
      %s381 = sadd.s32 %s380, %s378
      %s382 = smul.addr %s376, 8
      %s383 = sadd.s32 %s381, %s382
      %s384 = smul.addr %s383, 4
      %s385 = scalar_lea.vmem %s4, %s384
      // Predicated region
      $region45: #{unet_dap_forward.9} parent=35 // pred_check
        %p386 = pneg %p158
      $region46: #{unet_dap_forward.9} parent=35 // pred_check_branch
        %388 = sbr.rel (%p386) target = $region48
      $region47: #{unet_dap_forward.9} parent=35 // pred_region
        _
      $region48: #{unet_dap_forward.9} parent=35 // pred_fallthru
        _
    $region36: #{unet_dap_forward.9} parent=5 // pred_fallthru
      _
    %p389 = scmp.le.s32.totalorder 2, %s10
    // Predicated region
    $region49: #{unet_dap_forward.9} parent=5 // pred_check
      %p390 = pneg %p389
    $region50: #{unet_dap_forward.9} parent=5 // pred_check_branch
      %392 = sbr.rel (%p390) target = $region52
    $region51: #{unet_dap_forward.9} parent=5 // pred_region
      %s393 = ssub.s32 %s10, 2
      // Predicated region
      $region53: #{unet_dap_forward.9} parent=51 // pred_check
        %p394 = pneg %p164
      $region54: #{unet_dap_forward.9} parent=51 // pred_check_branch
        %396 = sbr.rel (%p394) target = $region56
      $region55: #{unet_dap_forward.9} parent=51 // pred_region
        %p397 = scmp.lt.s32.totalorder %s25, 0
        %s398 = scalar_select %p397, %s25, 0
        %p399 = scmp.lt.s32.totalorder %s26, 7
        %s400 = scalar_select %p399, %s26, 7
        %p401 = scmp.lt.s32.totalorder %s27, 0
        %s402 = scalar_select %p401, %s27, 0
        %s403 = sadd.s32 %s402, %s400
        %s404 = smul.addr %s398, 8
        %s405 = sadd.s32 %s403, %s404
        %s406 = smul.addr %s405, 4
        %s407 = scalar_lea.vmem %s4, %s406
      $region56: #{unet_dap_forward.9} parent=51 // pred_fallthru
        _
    $region52: #{unet_dap_forward.9} parent=5 // pred_fallthru
      _
  $region6: #{unet_dap_forward.9} parent=0 // loop_footer
    %s14 = sadd.s32 1, %s10
  $region7: #{unet_dap_forward.9} parent=0 // loop_footer_branch
    %9 = sbr.rel target = $region3
  $region8: #{unet_dap_forward.9} parent=0 // loop_exit
    _

// kernel: squeeze.2
$region0: #{squeeze.2}
  %s0 = inlined_call_operand.vmem [shape: bf16[256], index: 0, kind: input, shape index: {}]
  %s1 = inlined_call_operand.vmem [shape: bf16[1,4,4,4,4], index: 1, kind: output, shape index: {}]
  $region1: #{squeeze.2} parent=0
    #allocation0 [shape = 'u8[65536]{0}', space=vmem, size = 0x10000, scoped, tag = 'scoped mem for output reshape']
    #allocation1 [shape = 'u8[4096]{0}', space=vmem, size = 0x1000, scoped, tag = 'scoped mem for input reshape']
    %s3 = smul.u32 1, 2
    %s4 = sshllo.u32 0, %s3
    %s5 = sshrl.u32 %s4, 1
    %s6 = sor.u32 %s4, %s5
    %s7 = sand.u32 %s6, 85
    %s8 = sshrl.u32 %s7, 1
    %s9 = sor.u32 %s7, %s8
    %s10 = sand.u32 51, %s9
    %s11 = sshrl.u32 %s10, 2
    %s12 = sor.u32 %s10, %s11
    %s13 = sand.u32 15, %s12
    %v14 = vld [vmem:[%s0] sm:%s13]
    %v15 = vunpack.c.l.bf16 %v14
    %v16 = vunpack.c.h.bf16 %v14
    %17 = vst [vmem:[#allocation1] sm:%s4] %v15
    %v18 = vld [vmem:[#allocation1] sm:$0x3]
    %vm19 = vcmask 31744
    %20 = vst.msk [vmem:[#allocation0] sm:$0x1] %vm19, %v18
    %s21 = scalar_lea.vmem [#allocation0], 63
    %22 = vst.msk [vmem:[%s21] sm:$0x2] %vm19, %v18
    %v23 = vld [vmem:[#allocation1] sm:$0x3]
    %24 = vrot.lane.b32.xlu0 %v23, 124
    %v25 = vpop.permute.xlu0 %24
    %vm26 = vcmask 31744
    %s27 = scalar_lea.vmem [#allocation0], 1
    %28 = vst.msk [vmem:[%s27] sm:$0x1] %vm26, %v25
    %s29 = scalar_lea.vmem [#allocation0], 64
    %30 = vst.msk [vmem:[%s29] sm:$0x2] %vm26, %v25
    %v31 = vld [vmem:[#allocation1] sm:$0x3]
    %32 = vrot.lane.b32.xlu0 %v31, 120
    %v33 = vpop.permute.xlu0 %32
    %vm34 = vcmask 31744
    %s35 = scalar_lea.vmem [#allocation0], 2
    %36 = vst.msk [vmem:[%s35] sm:$0x1] %vm34, %v33
    %s37 = scalar_lea.vmem [#allocation0], 65
    %38 = vst.msk [vmem:[%s37] sm:$0x2] %vm34, %v33
    %v39 = vld [vmem:[#allocation1] sm:$0x3]
    %40 = vrot.lane.b32.xlu0 %v39, 116
    %v41 = vpop.permute.xlu0 %40
    %vm42 = vcmask 31744
    %s43 = scalar_lea.vmem [#allocation0], 3
    %44 = vst.msk [vmem:[%s43] sm:$0x1] %vm42, %v41
    %s45 = scalar_lea.vmem [#allocation0], 66
    %46 = vst.msk [vmem:[%s45] sm:$0x2] %vm42, %v41
    %v47 = vld [vmem:[#allocation1] sm:$0x3]
    %48 = vrot.lane.b32.xlu0 %v47, 112
    %v49 = vpop.permute.xlu0 %48
    %vm50 = vcmask 31744
    %s51 = scalar_lea.vmem [#allocation0], 8
    %52 = vst.msk [vmem:[%s51] sm:$0x1] %vm50, %v49
    %s53 = scalar_lea.vmem [#allocation0], 71
    %54 = vst.msk [vmem:[%s53] sm:$0x2] %vm50, %v49
    %v55 = vld [vmem:[#allocation1] sm:$0x3]
    %56 = vrot.lane.b32.xlu0 %v55, 108
    %v57 = vpop.permute.xlu0 %56
    %vm58 = vcmask 31744
    %s59 = scalar_lea.vmem [#allocation0], 9
    %60 = vst.msk [vmem:[%s59] sm:$0x1] %vm58, %v57
    %s61 = scalar_lea.vmem [#allocation0], 72
    %62 = vst.msk [vmem:[%s61] sm:$0x2] %vm58, %v57
    %v63 = vld [vmem:[#allocation1] sm:$0x3]
    %64 = vrot.lane.b32.xlu0 %v63, 104
    %v65 = vpop.permute.xlu0 %64
    %vm66 = vcmask 31744
    %s67 = scalar_lea.vmem [#allocation0], 10
    %68 = vst.msk [vmem:[%s67] sm:$0x1] %vm66, %v65
    %s69 = scalar_lea.vmem [#allocation0], 73
    %70 = vst.msk [vmem:[%s69] sm:$0x2] %vm66, %v65
    %v71 = vld [vmem:[#allocation1] sm:$0x3]
    %72 = vrot.lane.b32.xlu0 %v71, 100
    %v73 = vpop.permute.xlu0 %72
    %vm74 = vcmask 31744
    %s75 = scalar_lea.vmem [#allocation0], 11
    %76 = vst.msk [vmem:[%s75] sm:$0x1] %vm74, %v73
    %s77 = scalar_lea.vmem [#allocation0], 74
    %78 = vst.msk [vmem:[%s77] sm:$0x2] %vm74, %v73
    %v79 = vld [vmem:[#allocation1] sm:$0x3]
    %80 = vrot.lane.b32.xlu0 %v79, 96
    %v81 = vpop.permute.xlu0 %80
    %vm82 = vcmask 31744
    %s83 = scalar_lea.vmem [#allocation0], 16
    %84 = vst.msk [vmem:[%s83] sm:$0x1] %vm82, %v81
    %s85 = scalar_lea.vmem [#allocation0], 79
    %86 = vst.msk [vmem:[%s85] sm:$0x2] %vm82, %v81
    %v87 = vld [vmem:[#allocation1] sm:$0x3]
    %88 = vrot.lane.b32.xlu0 %v87, 92
    %v89 = vpop.permute.xlu0 %88
    %vm90 = vcmask 31744
    %s91 = scalar_lea.vmem [#allocation0], 17
    %92 = vst.msk [vmem:[%s91] sm:$0x1] %vm90, %v89
    %s93 = scalar_lea.vmem [#allocation0], 80
    %94 = vst.msk [vmem:[%s93] sm:$0x2] %vm90, %v89
    %v95 = vld [vmem:[#allocation1] sm:$0x3]
    %96 = vrot.lane.b32.xlu0 %v95, 88
    %v97 = vpop.permute.xlu0 %96
    %vm98 = vcmask 31744
    %s99 = scalar_lea.vmem [#allocation0], 18
    %100 = vst.msk [vmem:[%s99] sm:$0x1] %vm98, %v97
    %s101 = scalar_lea.vmem [#allocation0], 81
    %102 = vst.msk [vmem:[%s101] sm:$0x2] %vm98, %v97
    %v103 = vld [vmem:[#allocation1] sm:$0x3]
    %104 = vrot.lane.b32.xlu0 %v103, 84
    %v105 = vpop.permute.xlu0 %104
    %vm106 = vcmask 31744
    %s107 = scalar_lea.vmem [#allocation0], 19
    %108 = vst.msk [vmem:[%s107] sm:$0x1] %vm106, %v105
    %s109 = scalar_lea.vmem [#allocation0], 82
    %110 = vst.msk [vmem:[%s109] sm:$0x2] %vm106, %v105
    %v111 = vld [vmem:[#allocation1] sm:$0x3]
    %112 = vrot.lane.b32.xlu0 %v111, 80
    %v113 = vpop.permute.xlu0 %112
    %vm114 = vcmask 31744
    %s115 = scalar_lea.vmem [#allocation0], 24
    %116 = vst.msk [vmem:[%s115] sm:$0x1] %vm114, %v113
    %s117 = scalar_lea.vmem [#allocation0], 87
    %118 = vst.msk [vmem:[%s117] sm:$0x2] %vm114, %v113
    %v119 = vld [vmem:[#allocation1] sm:$0x3]
    %120 = vrot.lane.b32.xlu0 %v119, 76
    %v121 = vpop.permute.xlu0 %120
    %vm122 = vcmask 31744
    %s123 = scalar_lea.vmem [#allocation0], 25
    %124 = vst.msk [vmem:[%s123] sm:$0x1] %vm122, %v121
    %s125 = scalar_lea.vmem [#allocation0], 88
    %126 = vst.msk [vmem:[%s125] sm:$0x2] %vm122, %v121
    %v127 = vld [vmem:[#allocation1] sm:$0x3]
    %128 = vrot.lane.b32.xlu0 %v127, 72
    %v129 = vpop.permute.xlu0 %128
    %vm130 = vcmask 31744
    %s131 = scalar_lea.vmem [#allocation0], 26
    %132 = vst.msk [vmem:[%s131] sm:$0x1] %vm130, %v129
    %s133 = scalar_lea.vmem [#allocation0], 89
    %134 = vst.msk [vmem:[%s133] sm:$0x2] %vm130, %v129
    %v135 = vld [vmem:[#allocation1] sm:$0x3]
    %136 = vrot.lane.b32.xlu0 %v135, 68
    %v137 = vpop.permute.xlu0 %136
    %vm138 = vcmask 31744
    %s139 = scalar_lea.vmem [#allocation0], 27
    %140 = vst.msk [vmem:[%s139] sm:$0x1] %vm138, %v137
    %s141 = scalar_lea.vmem [#allocation0], 90
    %142 = vst.msk [vmem:[%s141] sm:$0x2] %vm138, %v137
    %v143 = vld [vmem:[#allocation1] sm:$0x3]
    %144 = vrot.lane.b32.xlu0 %v143, 64
    %v145 = vpop.permute.xlu0 %144
    %vm146 = vcmask 31744
    %s147 = scalar_lea.vmem [#allocation0], 32
    %148 = vst.msk [vmem:[%s147] sm:$0x1] %vm146, %v145
    %s149 = scalar_lea.vmem [#allocation0], 95
    %150 = vst.msk [vmem:[%s149] sm:$0x2] %vm146, %v145
    %v151 = vld [vmem:[#allocation1] sm:$0x3]
    %152 = vrot.lane.b32.xlu0 %v151, 60
    %v153 = vpop.permute.xlu0 %152
    %vm154 = vcmask 31744
    %s155 = scalar_lea.vmem [#allocation0], 33
    %156 = vst.msk [vmem:[%s155] sm:$0x1] %vm154, %v153
    %s157 = scalar_lea.vmem [#allocation0], 96
    %158 = vst.msk [vmem:[%s157] sm:$0x2] %vm154, %v153
    %v159 = vld [vmem:[#allocation1] sm:$0x3]
    %160 = vrot.lane.b32.xlu0 %v159, 56
    %v161 = vpop.permute.xlu0 %160
    %vm162 = vcmask 31744
    %s163 = scalar_lea.vmem [#allocation0], 34
    %164 = vst.msk [vmem:[%s163] sm:$0x1] %vm162, %v161
    %s165 = scalar_lea.vmem [#allocation0], 97
    %166 = vst.msk [vmem:[%s165] sm:$0x2] %vm162, %v161
    %v167 = vld [vmem:[#allocation1] sm:$0x3]
    %168 = vrot.lane.b32.xlu0 %v167, 52
    %v169 = vpop.permute.xlu0 %168
    %vm170 = vcmask 31744
    %s171 = scalar_lea.vmem [#allocation0], 35
    %172 = vst.msk [vmem:[%s171] sm:$0x1] %vm170, %v169
    %s173 = scalar_lea.vmem [#allocation0], 98
    %174 = vst.msk [vmem:[%s173] sm:$0x2] %vm170, %v169
    %v175 = vld [vmem:[#allocation1] sm:$0x3]
    %176 = vrot.lane.b32.xlu0 %v175, 48
    %v177 = vpop.permute.xlu0 %176
    %vm178 = vcmask 31744
    %s179 = scalar_lea.vmem [#allocation0], 40
    %180 = vst.msk [vmem:[%s179] sm:$0x1] %vm178, %v177
    %s181 = scalar_lea.vmem [#allocation0], 103
    %182 = vst.msk [vmem:[%s181] sm:$0x2] %vm178, %v177
    %v183 = vld [vmem:[#allocation1] sm:$0x3]
    %184 = vrot.lane.b32.xlu0 %v183, 44
    %v185 = vpop.permute.xlu0 %184
    %vm186 = vcmask 31744
    %s187 = scalar_lea.vmem [#allocation0], 41
    %188 = vst.msk [vmem:[%s187] sm:$0x1] %vm186, %v185
    %s189 = scalar_lea.vmem [#allocation0], 104
    %190 = vst.msk [vmem:[%s189] sm:$0x2] %vm186, %v185
    %v191 = vld [vmem:[#allocation1] sm:$0x3]
    %192 = vrot.lane.b32.xlu0 %v191, 40
    %v193 = vpop.permute.xlu0 %192
    %vm194 = vcmask 31744
    %s195 = scalar_lea.vmem [#allocation0], 42
    %196 = vst.msk [vmem:[%s195] sm:$0x1] %vm194, %v193
    %s197 = scalar_lea.vmem [#allocation0], 105
    %198 = vst.msk [vmem:[%s197] sm:$0x2] %vm194, %v193
    %v199 = vld [vmem:[#allocation1] sm:$0x3]
    %200 = vrot.lane.b32.xlu0 %v199, 36
    %v201 = vpop.permute.xlu0 %200
    %vm202 = vcmask 31744
    %s203 = scalar_lea.vmem [#allocation0], 43
    %204 = vst.msk [vmem:[%s203] sm:$0x1] %vm202, %v201
    %s205 = scalar_lea.vmem [#allocation0], 106
    %206 = vst.msk [vmem:[%s205] sm:$0x2] %vm202, %v201
    %v207 = vld [vmem:[#allocation1] sm:$0x3]
    %208 = vrot.lane.b32.xlu0 %v207, 32
    %v209 = vpop.permute.xlu0 %208
    %vm210 = vcmask 31744
    %s211 = scalar_lea.vmem [#allocation0], 48
    %212 = vst.msk [vmem:[%s211] sm:$0x1] %vm210, %v209
    %s213 = scalar_lea.vmem [#allocation0], 111
    %214 = vst.msk [vmem:[%s213] sm:$0x2] %vm210, %v209
    %v215 = vld [vmem:[#allocation1] sm:$0x3]
    %216 = vrot.lane.b32.xlu0 %v215, 28
    %v217 = vpop.permute.xlu0 %216
    %vm218 = vcmask 31744
    %s219 = scalar_lea.vmem [#allocation0], 49
    %220 = vst.msk [vmem:[%s219] sm:$0x1] %vm218, %v217
    %s221 = scalar_lea.vmem [#allocation0], 112
    %222 = vst.msk [vmem:[%s221] sm:$0x2] %vm218, %v217
    %v223 = vld [vmem:[#allocation1] sm:$0x3]
    %224 = vrot.lane.b32.xlu0 %v223, 24
    %v225 = vpop.permute.xlu0 %224
    %vm226 = vcmask 31744
    %s227 = scalar_lea.vmem [#allocation0], 50
    %228 = vst.msk [vmem:[%s227] sm:$0x1] %vm226, %v225
    %s229 = scalar_lea.vmem [#allocation0], 113
    %230 = vst.msk [vmem:[%s229] sm:$0x2] %vm226, %v225
    %v231 = vld [vmem:[#allocation1] sm:$0x3]
    %232 = vrot.lane.b32.xlu0 %v231, 20
    %v233 = vpop.permute.xlu0 %232
    %vm234 = vcmask 31744
    %s235 = scalar_lea.vmem [#allocation0], 51
    %236 = vst.msk [vmem:[%s235] sm:$0x1] %vm234, %v233
    %s237 = scalar_lea.vmem [#allocation0], 114
    %238 = vst.msk [vmem:[%s237] sm:$0x2] %vm234, %v233
    %v239 = vld [vmem:[#allocation1] sm:$0x3]
    %240 = vrot.lane.b32.xlu0 %v239, 16
    %v241 = vpop.permute.xlu0 %240
    %vm242 = vcmask 31744
    %s243 = scalar_lea.vmem [#allocation0], 56
    %244 = vst.msk [vmem:[%s243] sm:$0x1] %vm242, %v241
    %s245 = scalar_lea.vmem [#allocation0], 119
    %246 = vst.msk [vmem:[%s245] sm:$0x2] %vm242, %v241
    %v247 = vld [vmem:[#allocation1] sm:$0x3]
    %248 = vrot.lane.b32.xlu0 %v247, 12
    %v249 = vpop.permute.xlu0 %248
    %vm250 = vcmask 31744
    %s251 = scalar_lea.vmem [#allocation0], 57
    %252 = vst.msk [vmem:[%s251] sm:$0x1] %vm250, %v249
    %s253 = scalar_lea.vmem [#allocation0], 120
    %254 = vst.msk [vmem:[%s253] sm:$0x2] %vm250, %v249
    %v255 = vld [vmem:[#allocation1] sm:$0x3]
    %256 = vrot.lane.b32.xlu0 %v255, 8
    %v257 = vpop.permute.xlu0 %256
    %vm258 = vcmask 31744
    %s259 = scalar_lea.vmem [#allocation0], 58
    %260 = vst.msk [vmem:[%s259] sm:$0x1] %vm258, %v257
    %s261 = scalar_lea.vmem [#allocation0], 121
    %262 = vst.msk [vmem:[%s261] sm:$0x2] %vm258, %v257
    %v263 = vld [vmem:[#allocation1] sm:$0x3]
    %264 = vrot.lane.b32.xlu0 %v263, 4
    %v265 = vpop.permute.xlu0 %264
    %vm266 = vcmask 31744
    %s267 = scalar_lea.vmem [#allocation0], 59
    %268 = vst.msk [vmem:[%s267] sm:$0x1] %vm266, %v265
    %s269 = scalar_lea.vmem [#allocation0], 122
    %270 = vst.msk [vmem:[%s269] sm:$0x2] %vm266, %v265
    %s272 = smul.u32 2, 2
    %s273 = sshllo.u32 0, %s272
    %s274 = sshrl.u32 %s272, 1
    %v275 = vld [vmem:[#allocation0] sm:%s273]
    %v276 = vpack.c.bf16 0.0, %v275
    %s277 = sshllo.u32 0, %s274
    %278 = vst [vmem:[%s1] sm:%s277] %v276
    %s279 = scalar_lea.vmem [#allocation0], 8
    %v280 = vld [vmem:[%s279] sm:%s273]
    %v281 = vpack.c.bf16 0.0, %v280
    %s282 = sshllo.u32 0, %s274
    %s283 = scalar_lea.vmem %s1, 2
    %284 = vst [vmem:[%s283] sm:%s282] %v281
    %s285 = scalar_lea.vmem [#allocation0], 16
    %v286 = vld [vmem:[%s285] sm:%s273]
    %v287 = vpack.c.bf16 0.0, %v286
    %s288 = sshllo.u32 0, %s274
    %s289 = smul.addr 2, 2
    %s290 = scalar_lea.vmem %s1, %s289
    %291 = vst [vmem:[%s290] sm:%s288] %v287
    %s292 = scalar_lea.vmem [#allocation0], 24
    %v293 = vld [vmem:[%s292] sm:%s273]
    %v294 = vpack.c.bf16 0.0, %v293
    %s295 = sshllo.u32 0, %s274
    %s296 = smul.addr 2, 3
    %s297 = scalar_lea.vmem %s1, %s296
    %298 = vst [vmem:[%s297] sm:%s295] %v294
    %s299 = scalar_lea.vmem [#allocation0], 32
    %v300 = vld [vmem:[%s299] sm:%s273]
    %v301 = vpack.c.bf16 0.0, %v300
    %s302 = sshllo.u32 0, %s274
    %s303 = smul.addr 2, 4
    %s304 = scalar_lea.vmem %s1, %s303
    %305 = vst [vmem:[%s304] sm:%s302] %v301
    %s306 = scalar_lea.vmem [#allocation0], 40
    %v307 = vld [vmem:[%s306] sm:%s273]
    %v308 = vpack.c.bf16 0.0, %v307
    %s309 = sshllo.u32 0, %s274
    %s310 = smul.addr 2, 5
    %s311 = scalar_lea.vmem %s1, %s310
    %312 = vst [vmem:[%s311] sm:%s309] %v308
    %s313 = scalar_lea.vmem [#allocation0], 48
    %v314 = vld [vmem:[%s313] sm:%s273]
    %v315 = vpack.c.bf16 0.0, %v314
    %s316 = sshllo.u32 0, %s274
    %s317 = smul.addr 2, 6
    %s318 = scalar_lea.vmem %s1, %s317
    %319 = vst [vmem:[%s318] sm:%s316] %v315
    %s320 = scalar_lea.vmem [#allocation0], 56
    %v321 = vld [vmem:[%s320] sm:%s273]
    %v322 = vpack.c.bf16 0.0, %v321
    %s323 = sshllo.u32 0, %s274
    %s324 = smul.addr 2, 7
    %s325 = scalar_lea.vmem %s1, %s324
    %326 = vst [vmem:[%s325] sm:%s323] %v322
    %s327 = scalar_lea.vmem [#allocation0], 64
    %v328 = vld [vmem:[%s327] sm:%s273]
    %v329 = vpack.c.bf16 0.0, %v328
    %s330 = sshllo.u32 0, %s274
    %s331 = smul.addr 2, 8
    %s332 = scalar_lea.vmem %s1, %s331
    %333 = vst [vmem:[%s332] sm:%s330] %v329
    %s334 = scalar_lea.vmem [#allocation0], 72
    %v335 = vld [vmem:[%s334] sm:%s273]
    %v336 = vpack.c.bf16 0.0, %v335
    %s337 = sshllo.u32 0, %s274
    %s338 = smul.addr 2, 9
    %s339 = scalar_lea.vmem %s1, %s338
    %340 = vst [vmem:[%s339] sm:%s337] %v336
    %s341 = scalar_lea.vmem [#allocation0], 80
    %v342 = vld [vmem:[%s341] sm:%s273]
    %v343 = vpack.c.bf16 0.0, %v342
    %s344 = sshllo.u32 0, %s274
    %s345 = smul.addr 2, 10
    %s346 = scalar_lea.vmem %s1, %s345
    %347 = vst [vmem:[%s346] sm:%s344] %v343
    %s348 = scalar_lea.vmem [#allocation0], 88
    %v349 = vld [vmem:[%s348] sm:%s273]
    %v350 = vpack.c.bf16 0.0, %v349
    %s351 = sshllo.u32 0, %s274
    %s352 = smul.addr 2, 11
    %s353 = scalar_lea.vmem %s1, %s352
    %354 = vst [vmem:[%s353] sm:%s351] %v350
    %s355 = scalar_lea.vmem [#allocation0], 96
    %v356 = vld [vmem:[%s355] sm:%s273]
    %v357 = vpack.c.bf16 0.0, %v356
    %s358 = sshllo.u32 0, %s274
    %s359 = smul.addr 2, 12
    %s360 = scalar_lea.vmem %s1, %s359
    %361 = vst [vmem:[%s360] sm:%s358] %v357
    %s362 = scalar_lea.vmem [#allocation0], 104
    %v363 = vld [vmem:[%s362] sm:%s273]
    %v364 = vpack.c.bf16 0.0, %v363
    %s365 = sshllo.u32 0, %s274
    %s366 = smul.addr 2, 13
    %s367 = scalar_lea.vmem %s1, %s366
    %368 = vst [vmem:[%s367] sm:%s365] %v364
    %s369 = scalar_lea.vmem [#allocation0], 112
    %v370 = vld [vmem:[%s369] sm:%s273]
    %v371 = vpack.c.bf16 0.0, %v370
    %s372 = sshllo.u32 0, %s274
    %s373 = smul.addr 2, 14
    %s374 = scalar_lea.vmem %s1, %s373
    %375 = vst [vmem:[%s374] sm:%s372] %v371
    %s376 = scalar_lea.vmem [#allocation0], 120
    %v377 = vld [vmem:[%s376] sm:%s273]
    %v378 = vpack.c.bf16 0.0, %v377
    %s379 = sshllo.u32 0, %s274
    %s380 = smul.addr 2, 15
    %s381 = scalar_lea.vmem %s1, %s380
    %382 = vst [vmem:[%s381] sm:%s379] %v378

// kernel: unet_dap_forward.11
$region0: #{unet_dap_forward.11}
  #allocation0 [shape = 'u32[]', space=smem, size = 0x4, offset = 0x4, fixed_abs, tag = 'smem constant byte address 0x4 - core index']
  #allocation1 [shape = 'u32[144,128]{1,0:T(1,128)}', space=vmem, size = 0x12000, scoped, tag = 'internal scratch']
  %s0 = inlined_call_operand.vmem [shape: f32[8,256], index: 0, kind: input, shape index: {}]
  %s1 = inlined_call_operand.vmem [shape: f32[1,256], index: 1, kind: output, shape index: {}]
  %s2 = sld [smem:[#allocation0]]
  $region14: #{unet_dap_forward.11} parent=0
    _
  %s4 = ssub.s32 1, %s2
  %s5 = scalar_select 0, %s4, %s2
  // Predicated region
  $region2: #{unet_dap_forward.11} parent=0 // pred_check
    _
  $region3: #{unet_dap_forward.11} parent=0 // pred_check_branch
    %7 = sbr.rel (0) target = $region5
  $region4: #{unet_dap_forward.11} parent=0 // pred_region
    _
  $region5: #{unet_dap_forward.11} parent=0 // pred_fallthru
    _
  %v8 = vld [vmem:[%s0] sm:$0xff]
  %v9 = vld [vmem:[%s0 + $0x8] sm:$0xff]
  %v10 = vrot.slane %v8, 4
  %v11 = vmax.f32 %v8, %v10
  %v12 = vrot.slane %v11, 2
  %v13 = vmax.f32 %v11, %v12
  %v14 = vrot.slane %v13, 1
  %v15 = vmax.f32 %v13, %v14
  %v16 = vrot.slane %v9, 4
  %v17 = vmax.f32 %v9, %v16
  %v18 = vrot.slane %v17, 2
  %v19 = vmax.f32 %v17, %v18
  %v20 = vrot.slane %v19, 1
  %v21 = vmax.f32 %v19, %v20
  %v24 = vcombine.low %v15, %v21
  %v26 = vunpack.c.l.s4 1966171168
  %v27 = vunpack.c.0.s8 %v26
  %v28 = vlaneseq
  %v29 = vshrl.u32 %v28, 7
  %v30 = vsub.s32 %v27, %v29
  %v31 = vrot.slane %v24, %v30
  %v33 = vunpack.c.l.s4 1966171168
  %v34 = vunpack.c.0.s8 %v33
  %v35 = vlaneseq
  %v36 = vshrl.u32 %v35, 7
  %v37 = vsub.s32 %v34, %v36
  %v38 = vrot.slane %v31, %v37
  %v40 = vlaneseq
  %vm41 = vcmp.ge.s32.totalorder %v40, 0
  %vm42 = vcmp.lt.s32.totalorder %v40, 256
  %vm43 = vmand %vm41, %vm42
  %44 = vst.msk [vmem:[%s1] sm:$0x3] %vm43, %v38
  // Predicated region
  $region6: #{unet_dap_forward.11} parent=0 // pred_check
    _
  $region7: #{unet_dap_forward.11} parent=0 // pred_check_branch
    %46 = sbr.rel (0) target = $region9
  $region8: #{unet_dap_forward.11} parent=0 // pred_region
    _
  $region9: #{unet_dap_forward.11} parent=0 // pred_fallthru
    _
  // Predicated region
  $region10: #{unet_dap_forward.11} parent=0 // pred_check
    _
  $region11: #{unet_dap_forward.11} parent=0 // pred_check_branch
    %48 = sbr.rel (0) target = $region13
  $region12: #{unet_dap_forward.11} parent=0 // pred_region
    _
  $region13: #{unet_dap_forward.11} parent=0 // pred_fallthru
    _

// kernel: unet_dap_forward.12
$region0: #{unet_dap_forward.12}
  #allocation0 [shape = 'u32[]', space=smem, size = 0x4, offset = 0x4, fixed_abs, tag = 'smem constant byte address 0x4 - core index']
  #allocation1 [shape = 'u32[144,128]{1,0:T(1,128)}', space=vmem, size = 0x12000, scoped, tag = 'internal scratch']
  #allocation2 [shape = 'f32[8,16]{1,0:T(8,128)}', space=vmem, size = 0x1000, scoped, tag = 'scratch operand']
  %s0 = inlined_call_operand.vmem [shape: bf16[1,6,36,16], index: 0, kind: input, shape index: {}]
  %s1 = inlined_call_operand.vmem [shape: bf16[3,8,36], index: 1, kind: input, shape index: {}]
  %s2 = inlined_call_operand.vmem [shape: f32[8,1], index: 2, kind: input, shape index: {}]
  %s3 = inlined_call_operand.vmem [shape: f32[8,1], index: 3, kind: input, shape index: {}]
  %s4 = inlined_call_operand.vmem [shape: f32[1,4,8,16], index: 4, kind: output, shape index: {}]
  %s5 = sld [smem:[#allocation0]]
  $region57: #{unet_dap_forward.12} parent=0
    _
  %s7 = ssub.s32 1, %s5
  %s8 = scalar_select 0, %s7, %s5
  loop: start=0, step=1, limit=14
  $region2: #{unet_dap_forward.12} parent=0 // loop_pre_header
    _
  $region3: #{unet_dap_forward.12} parent=0 // loop_header
    %s10 = sphi 0, %s14
    %p11 = scmp.ge.s32.totalorder %s10, 14
    %s17 = sphi 0, %s43
    %s18 = sphi 0, %s39
    %s19 = sphi 0, %s35
    %s20 = sphi 0, %s31
    %s21 = sphi 0, %s17
    %s22 = sphi 0, %s18
    %s23 = sphi 0, %s19
    %s24 = sphi 0, %s20
    %s25 = sphi 0, %s21
    %s26 = sphi 0, %s22
    %s27 = sphi 0, %s23
    %s28 = sphi 0, %s24
    %s52 = sphi 0, %s54
    %s55 = sphi 0, %s52
    %s56 = sphi 0, %s55
    %s72 = sphi 0, %s56
    %s76 = sphi 0, %s76
    %s78 = sphi 0, %s76
    %s79 = sphi 0, %s78
    %s93 = sphi 0, %s79
    %s97 = sphi 0, %s97
    %s99 = sphi 0, %s97
    %s100 = sphi 0, %s99
    %s114 = sphi 0, %s100
    %s118 = sphi 0, %s118
    %s120 = sphi 0, %s118
    %s121 = sphi 0, %s120
    %s135 = sphi 0, %s121
    %s145 = sphi 0, %s147
    %s148 = sphi 0, %s145
    %s149 = sphi 0, %s148
    %s165 = sphi 0, %s149
  $region4: #{unet_dap_forward.12} parent=0 // loop_header_branch
    %13 = sbr.rel (%p11) target = $region8
  $region5: #{unet_dap_forward.12} parent=0 // loop_body
    %s15 = ssub.s32 %s10, 1
    %s16 = ssub.s32 %s10, 2
    %s29 = sadd.s32 1, %s20
    %p30 = scmp.ge.s32.totalorder %s29, 3
    %s31 = scalar_select %p30, 0, %s29
    %s32 = sadd.s32 1, %s19
    %s33 = scalar_select %p30, %s32, %s19
    %p34 = scmp.ge.s32.totalorder %s33, 1
    %s35 = scalar_select %p34, 0, %s33
    %s36 = sadd.s32 1, %s18
    %s37 = scalar_select %p34, %s36, %s18
    %p38 = scmp.ge.s32.totalorder %s37, 4
    %s39 = scalar_select %p38, 0, %s37
    %s40 = sadd.s32 1, %s17
    %s41 = scalar_select %p38, %s40, %s17
    %p42 = scmp.ge.s32.totalorder %s41, 1
    %s43 = scalar_select %p42, 0, %s41
    %s44 = sadd.s32 %s18, %s20
    %s45 = sadd.s32 %s39, %s31
    %s46 = ssub.s32 %s17, %s43
    %s47 = ssub.s32 %s44, %s45
    %s48 = sor.u32 %s46, %s47
    %s49 = ssub.s32 %s19, %s35
    %s50 = sor.u32 %s48, %s49
    %p51 = scmp.eq.s32.totalorder %s50, 0
    %s53 = sadd.s32 %s52, 1
    %s54 = scalar_select %p51, %s52, %s53
    %p57 = pneg %p51
    %p58 = scmp.eq.s32.totalorder %s10, 11
    %p59 = por %p57, %p58
    %p60 = scmp.ne.s32.totalorder %s52, %s55
    %p61 = scmp.eq.s32.totalorder %s10, 0
    %p62 = por %p60, %p61
    %p63 = scmp.ne.s32.totalorder %s52, %s55
    %p64 = scmp.eq.s32.totalorder %s15, 11
    %p65 = por %p63, %p64
    %p66 = scmp.ne.s32.totalorder %s55, %s56
    %p67 = scmp.eq.s32.totalorder %s15, 0
    %p68 = por %p66, %p67
    %p69 = scmp.ne.s32.totalorder %s55, %s56
    %p70 = scmp.eq.s32.totalorder %s16, 11
    %p71 = por %p69, %p70
    %p73 = scmp.ne.s32.totalorder %s56, %s72
    %p74 = scmp.eq.s32.totalorder %s16, 0
    %p75 = por %p73, %p74
    %s77 = sadd.s32 %s76, 1
    %p80 = scmp.eq.s32.totalorder %s10, 11
    %p81 = scmp.ne.s32.totalorder %s76, %s78
    %p82 = scmp.eq.s32.totalorder %s10, 0
    %p83 = por %p81, %p82
    %p84 = scmp.ne.s32.totalorder %s76, %s78
    %p85 = scmp.eq.s32.totalorder %s15, 11
    %p86 = por %p84, %p85
    %p87 = scmp.ne.s32.totalorder %s78, %s79
    %p88 = scmp.eq.s32.totalorder %s15, 0
    %p89 = por %p87, %p88
    %p90 = scmp.ne.s32.totalorder %s78, %s79
    %p91 = scmp.eq.s32.totalorder %s16, 11
    %p92 = por %p90, %p91
    %p94 = scmp.ne.s32.totalorder %s79, %s93
    %p95 = scmp.eq.s32.totalorder %s16, 0
    %p96 = por %p94, %p95
    %s98 = sadd.s32 %s97, 1
    %p101 = scmp.eq.s32.totalorder %s10, 11
    %p102 = scmp.ne.s32.totalorder %s97, %s99
    %p103 = scmp.eq.s32.totalorder %s10, 0
    %p104 = por %p102, %p103
    %p105 = scmp.ne.s32.totalorder %s97, %s99
    %p106 = scmp.eq.s32.totalorder %s15, 11
    %p107 = por %p105, %p106
    %p108 = scmp.ne.s32.totalorder %s99, %s100
    %p109 = scmp.eq.s32.totalorder %s15, 0
    %p110 = por %p108, %p109
    %p111 = scmp.ne.s32.totalorder %s99, %s100
    %p112 = scmp.eq.s32.totalorder %s16, 11
    %p113 = por %p111, %p112
    %p115 = scmp.ne.s32.totalorder %s100, %s114
    %p116 = scmp.eq.s32.totalorder %s16, 0
    %p117 = por %p115, %p116
    %s119 = sadd.s32 %s118, 1
    %p122 = scmp.eq.s32.totalorder %s10, 11
    %p123 = scmp.ne.s32.totalorder %s118, %s120
    %p124 = scmp.eq.s32.totalorder %s10, 0
    %p125 = por %p123, %p124
    %p126 = scmp.ne.s32.totalorder %s118, %s120
    %p127 = scmp.eq.s32.totalorder %s15, 11
    %p128 = por %p126, %p127
    %p129 = scmp.ne.s32.totalorder %s120, %s121
    %p130 = scmp.eq.s32.totalorder %s15, 0
    %p131 = por %p129, %p130
    %p132 = scmp.ne.s32.totalorder %s120, %s121
    %p133 = scmp.eq.s32.totalorder %s16, 11
    %p134 = por %p132, %p133
    %p136 = scmp.ne.s32.totalorder %s121, %s135
    %p137 = scmp.eq.s32.totalorder %s16, 0
    %p138 = por %p136, %p137
    %s139 = ssub.s32 %s17, %s43
    %s140 = ssub.s32 %s18, %s39
    %s141 = sor.u32 %s139, %s140
    %s142 = ssub.s32 %s19, %s35
    %s143 = sor.u32 %s141, %s142
    %p144 = scmp.eq.s32.totalorder %s143, 0
    %s146 = sadd.s32 %s145, 1
    %s147 = scalar_select %p144, %s145, %s146
    %p150 = pneg %p144
    %p151 = scmp.eq.s32.totalorder %s10, 11
    %p152 = por %p150, %p151
    %p153 = scmp.ne.s32.totalorder %s145, %s148
    %p154 = scmp.eq.s32.totalorder %s10, 0
    %p155 = por %p153, %p154
    %p156 = scmp.ne.s32.totalorder %s145, %s148
    %p157 = scmp.eq.s32.totalorder %s15, 11
    %p158 = por %p156, %p157
    %p159 = scmp.ne.s32.totalorder %s148, %s149
    %p160 = scmp.eq.s32.totalorder %s15, 0
    %p161 = por %p159, %p160
    %p162 = scmp.ne.s32.totalorder %s148, %s149
    %p163 = scmp.eq.s32.totalorder %s16, 11
    %p164 = por %p162, %p163
    %p166 = scmp.ne.s32.totalorder %s149, %s165
    %p167 = scmp.eq.s32.totalorder %s16, 0
    %p168 = por %p166, %p167
    %p169 = scmp.le.s32.totalorder 1, %s10
    %p170 = scmp.lt.s32.totalorder %s10, 13
    %p171 = pnand %p169, %p170
    %p172 = pneg %p171
    // Predicated region
    $region9: #{unet_dap_forward.12} parent=5 // pred_check
      _
    $region10: #{unet_dap_forward.12} parent=5 // pred_check_branch
      %174 = sbr.rel (%p171) target = $region12
    $region11: #{unet_dap_forward.12} parent=5 // pred_region
      %s175 = ssub.s32 %s10, 1
      // Predicated region
      $region13: #{unet_dap_forward.12} parent=11 // pred_check
        %p176 = pneg %p89
      $region14: #{unet_dap_forward.12} parent=11 // pred_check_branch
        %178 = sbr.rel (%p176) target = $region16
      $region15: #{unet_dap_forward.12} parent=11 // pred_region
        _
      $region16: #{unet_dap_forward.12} parent=11 // pred_fallthru
        _
      // Predicated region
      $region17: #{unet_dap_forward.12} parent=11 // pred_check
        %p179 = pneg %p110
      $region18: #{unet_dap_forward.12} parent=11 // pred_check_branch
        %181 = sbr.rel (%p179) target = $region20
      $region19: #{unet_dap_forward.12} parent=11 // pred_region
        _
      $region20: #{unet_dap_forward.12} parent=11 // pred_fallthru
        _
      // Predicated region
      $region21: #{unet_dap_forward.12} parent=11 // pred_check
        %p182 = pneg %p131
      $region22: #{unet_dap_forward.12} parent=11 // pred_check_branch
        %184 = sbr.rel (%p182) target = $region24
      $region23: #{unet_dap_forward.12} parent=11 // pred_region
        _
      $region24: #{unet_dap_forward.12} parent=11 // pred_fallthru
        _
    $region12: #{unet_dap_forward.12} parent=5 // pred_fallthru
      _
    %p185 = scmp.lt.s32.totalorder %s10, 12
    // Predicated region
    $region25: #{unet_dap_forward.12} parent=5 // pred_check
      %p186 = pneg %p185
    $region26: #{unet_dap_forward.12} parent=5 // pred_check_branch
      %188 = sbr.rel (%p186) target = $region28
    $region27: #{unet_dap_forward.12} parent=5 // pred_region
      // Predicated region
      $region29: #{unet_dap_forward.12} parent=27 // pred_check
        %p189 = pneg %p62
      $region30: #{unet_dap_forward.12} parent=27 // pred_check_branch
        %191 = sbr.rel (%p189) target = $region32
      $region31: #{unet_dap_forward.12} parent=27 // pred_region
        %s192 = sadd.s32 %s18, %s20
        %p193 = scmp.lt.s32.totalorder %s17, 0
        %s194 = scalar_select %p193, %s17, 0
        %p195 = scmp.lt.s32.totalorder %s192, 5
        %s196 = scalar_select %p195, %s192, 5
        %p197 = scmp.lt.s32.totalorder %s19, 0
        %s198 = scalar_select %p197, %s19, 0
        %s199 = smul.addr %s196, 5
        %s200 = sadd.s32 %s198, %s199
        %s201 = smul.addr %s194, 30
        %s202 = sadd.s32 %s200, %s201
        %s203 = smul.addr %s202, 4
        %s204 = scalar_lea.vmem %s0, %s203
        %s205 = sadd.s32 %s18, %s20
      $region32: #{unet_dap_forward.12} parent=27 // pred_fallthru
        _
    $region28: #{unet_dap_forward.12} parent=5 // pred_fallthru
      _
    %p206 = scmp.le.s32.totalorder 1, %s10
    %p207 = scmp.lt.s32.totalorder %s10, 13
    %p208 = pnand %p206, %p207
    %p209 = pneg %p208
    // Predicated region
    $region33: #{unet_dap_forward.12} parent=5 // pred_check
      _
    $region34: #{unet_dap_forward.12} parent=5 // pred_check_branch
      %211 = sbr.rel (%p208) target = $region36
    $region35: #{unet_dap_forward.12} parent=5 // pred_region
      %s212 = ssub.s32 %s10, 1
      %s213 = sadd.s32 %s22, %s24
      %p214 = scmp.lt.s32.totalorder %s21, 0
      %s215 = scalar_select %p214, %s21, 0
      %p216 = scmp.lt.s32.totalorder %s213, 5
      %s217 = scalar_select %p216, %s213, 5
      %p218 = scmp.lt.s32.totalorder %s23, 0
      %s219 = scalar_select %p218, %s23, 0
      %s220 = smul.addr %s217, 5
      %s221 = sadd.s32 %s219, %s220
      %s222 = smul.addr %s215, 30
      %s223 = sadd.s32 %s221, %s222
      %s224 = smul.addr %s223, 4
      %s225 = scalar_lea.vmem %s0, %s224
      %p226 = pneg %p68
      %p227 = pneg %p65
      %p228 = pneg %p89
      %p229 = pneg %p86
      %p230 = pneg %p110
      %p231 = pneg %p107
      %p232 = pneg %p131
      %p233 = pneg %p128
      %p234 = pneg %p161
      %p235 = pneg %p158
      %p236 = scmp.lt.s32.totalorder %s21, 0
      %s237 = scalar_select %p236, %s21, 0
      %p238 = scmp.lt.s32.totalorder %s22, 3
      %s239 = scalar_select %p238, %s22, 3
      %p240 = scmp.lt.s32.totalorder %s23, 0
      %s241 = scalar_select %p240, %s23, 0
      %s242 = sadd.s32 %s241, %s239
      %s243 = smul.addr %s237, 4
      %s244 = sadd.s32 %s242, %s243
      %s245 = smul.addr %s244, 8
      %s246 = scalar_lea.vmem %s4, %s245
      %s247 = sadd.s32 %s22, %s24
      %p248 = scmp.lt.s32.totalorder %s21, 0
      %s249 = scalar_select %p248, %s21, 0
      %p250 = scmp.lt.s32.totalorder %s247, 5
      %s251 = scalar_select %p250, %s247, 5
      %p252 = scmp.lt.s32.totalorder %s23, 0
      %s253 = scalar_select %p252, %s23, 0
      %s254 = smul.addr %s251, 5
      %s255 = sadd.s32 %s253, %s254
      %s256 = smul.addr %s249, 30
      %s257 = sadd.s32 %s255, %s256
      %s258 = smul.addr %s257, 4
      %s259 = scalar_lea.vmem %s0, %s258
      %s260 = sadd.s32 %s22, %s24
      %p261 = scmp.lt.s32.totalorder %s21, 0
      %s262 = scalar_select %p261, %s21, 0
      %p263 = scmp.lt.s32.totalorder %s22, 3
      %s264 = scalar_select %p263, %s22, 3
      %p265 = scmp.lt.s32.totalorder %s23, 0
      %s266 = scalar_select %p265, %s23, 0
      %s267 = sadd.s32 %s266, %s264
      %s268 = smul.addr %s262, 4
      %s269 = sadd.s32 %s267, %s268
      %s270 = smul.addr %s269, 8
      %s271 = scalar_lea.vmem %s4, %s270
      %p273 = scmp.eq.s32.totalorder %s24, 0
      // Predicated region
      $region37: #{unet_dap_forward.12} parent=35 // pred_check
        %p274 = pneg %p273
      $region38: #{unet_dap_forward.12} parent=35 // pred_check_branch
        %276 = sbr.rel (%p274) target = $region40
      $region39: #{unet_dap_forward.12} parent=35 // pred_region
        %vm277 = vcmask 130048
        %278 = vst.msk [vmem:[#allocation2] sm:$0xff] %vm277, 0.0
      $region40: #{unet_dap_forward.12} parent=35 // pred_fallthru
        _
      %v279 = vld [vmem:[#allocation2] sm:$0xff]
      %s280 = smul.addr %s24, 4
      %s281 = scalar_lea.vmem %s1, %s280
      %v282 = vld [vmem:[%s281] sm:$0xf]
      %v283 = vld [vmem:[%s259] sm:$0xf]
      %v284 = vld [vmem:[%s259 + $0x4] sm:$0xf]
      %v285 = vld [vmem:[%s259 + $0x8] sm:$0xf]
      %v286 = vld [vmem:[%s259 + $0xc] sm:$0xf]
      %v287 = vld [vmem:[%s259 + $0x10] sm:$0x3]
      %v293 = vunpack.c.l.b16 %v283
      %v294 = vunpack.c.l.b16 %v284
      %v295 = vunpack.c.l.b16 %v285
      %v296 = vunpack.c.l.b16 %v286
      %v297 = vunpack.c.l.b16 %v287
      %v298 = vpack.c.b16 %v294, %v293
      %v299 = vpack.c.b16 %v296, %v295
      %v300 = vpack.c.b16 %v297, %v297
      %vm303 = vcmask 293888
      %v305 = vsel %vm303, %v282, 0
      %vm307 = vcmask 1041408
      %v309 = vsel %vm307, %v300, 0
      %311 = vmatprep.subr.bf16.mxu0 0
      %312 = vmatpush1.bf16.msra.mxu0 %v298
      %313 = vmatprep.subr.bf16.mxu0 0
      %314 = vmatpush1.bf16.msra.mxu0 %v299
      %315 = vmatprep.subr.bf16.mxu0 0
      %316 = vmatpush1.bf16.msra.mxu0 %v309
      %317 = vmatprep.subr.bf16.mxu0 0
      %318 = vmatpush1.bf16.msra.mxu0 0
      %319 = vmatprep.subr.bf16.mxu0 0
      %320 = vmatpush1.bf16.msra.mxu0 0
      %321 = vmatprep.subr.bf16.mxu0 0
      %322 = vmatpush1.bf16.msra.mxu0 0
      %323 = vmatprep.subr.bf16.mxu0 0
      %324 = vmatpush1.bf16.msra.mxu0 0
      %325 = vmatprep.subr.bf16.mxu0 0
      %326 = vmatpush1.bf16.msra.mxu0 0
      %327 = vmatprep.subr.bf16.mxu0 0
      %328 = vmatpush1.bf16.msra.mxu0 0
      %329 = vmatprep.subr.bf16.mxu0 0
      %330 = vmatpush1.bf16.msra.mxu0 0
      %331 = vmatprep.subr.bf16.mxu0 0
      %332 = vmatpush1.bf16.msra.mxu0 0
      %333 = vmatprep.subr.bf16.mxu0 0
      %334 = vmatpush1.bf16.msra.mxu0 0
      %335 = vmatprep.subr.bf16.mxu0 0
      %336 = vmatpush1.bf16.msra.mxu0 0
      %337 = vmatprep.subr.bf16.mxu0 0
      %338 = vmatpush1.bf16.msra.mxu0 0
      %339 = vmatprep.subr.bf16.mxu0 0
      %340 = vmatpush1.bf16.msra.mxu0 0
      %341 = vmatprep.subr.bf16.mxu0 0
      %342 = vmatpush1.bf16.msra.mxu0 0
      %343 = vmatprep.mubr.bf16.mxu0 0
      %344 = vmatmul.mubr.bf16.gmra.mrb[0].mxu0 %v305
      %v345 = vpop.f32.mrb[0].mxu0
      %v346 = vadd.f32 0.0, %v345
      %v347 = vpop.f32.mrb[0].mxu0
      %v348 = vpop.f32.mrb[0].mxu0
      %v349 = vpop.f32.mrb[0].mxu0
      %350 = vdwg.mxu0
      %v351 = vadd.f32 %v279, %v346
      %vm352 = vcmask 130048
      %353 = vst.msk [vmem:[#allocation2] sm:$0xff] %vm352, %v351
      %p354 = scmp.eq.s32.totalorder %s24, 2
      // Predicated region
      $region41: #{unet_dap_forward.12} parent=35 // pred_check
        %p355 = pneg %p354
      $region42: #{unet_dap_forward.12} parent=35 // pred_check_branch
        %357 = sbr.rel (%p355) target = $region44
      $region43: #{unet_dap_forward.12} parent=35 // pred_region
        %v358 = vld [vmem:[#allocation2] sm:$0xff]
        %v359 = vld [vmem:[%s2] sm:$0xff]
        %361 = vset.pattern.permute.xlu0 0
        %362 = vperm.xlu0 %361, %v359
        %v363 = vpop.permute.xlu0 %362
        %v365 = vmul.f32 %v358, %v363
        %v366 = vld [vmem:[%s3] sm:$0xff]
        %368 = vset.pattern.permute.xlu0 0
        %369 = vperm.xlu0 %368, %v366
        %v370 = vpop.permute.xlu0 %369
        %v372 = vadd.f32 %v365, %v370
        %v373 = vmax.f32 %v372, 0.0
        %374 = vst.msk [vmem:[%s271] sm:$0xff] %vm352, %v373
      $region44: #{unet_dap_forward.12} parent=35 // pred_fallthru
        _
      %p375 = scmp.lt.s32.totalorder %s21, 0
      %s376 = scalar_select %p375, %s21, 0
      %p377 = scmp.lt.s32.totalorder %s22, 3
      %s378 = scalar_select %p377, %s22, 3
      %p379 = scmp.lt.s32.totalorder %s23, 0
      %s380 = scalar_select %p379, %s23, 0
      %s381 = sadd.s32 %s380, %s378
      %s382 = smul.addr %s376, 4
      %s383 = sadd.s32 %s381, %s382
      %s384 = smul.addr %s383, 8
      %s385 = scalar_lea.vmem %s4, %s384
      // Predicated region
      $region45: #{unet_dap_forward.12} parent=35 // pred_check
        %p386 = pneg %p158
      $region46: #{unet_dap_forward.12} parent=35 // pred_check_branch
        %388 = sbr.rel (%p386) target = $region48
      $region47: #{unet_dap_forward.12} parent=35 // pred_region
        _
      $region48: #{unet_dap_forward.12} parent=35 // pred_fallthru
        _
    $region36: #{unet_dap_forward.12} parent=5 // pred_fallthru
      _
    %p389 = scmp.le.s32.totalorder 2, %s10
    // Predicated region
    $region49: #{unet_dap_forward.12} parent=5 // pred_check
      %p390 = pneg %p389
    $region50: #{unet_dap_forward.12} parent=5 // pred_check_branch
      %392 = sbr.rel (%p390) target = $region52
    $region51: #{unet_dap_forward.12} parent=5 // pred_region
      %s393 = ssub.s32 %s10, 2
      // Predicated region
      $region53: #{unet_dap_forward.12} parent=51 // pred_check
        %p394 = pneg %p164
      $region54: #{unet_dap_forward.12} parent=51 // pred_check_branch
        %396 = sbr.rel (%p394) target = $region56
      $region55: #{unet_dap_forward.12} parent=51 // pred_region
        %p397 = scmp.lt.s32.totalorder %s25, 0
        %s398 = scalar_select %p397, %s25, 0
        %p399 = scmp.lt.s32.totalorder %s26, 3
        %s400 = scalar_select %p399, %s26, 3
        %p401 = scmp.lt.s32.totalorder %s27, 0
        %s402 = scalar_select %p401, %s27, 0
        %s403 = sadd.s32 %s402, %s400
        %s404 = smul.addr %s398, 4
        %s405 = sadd.s32 %s403, %s404
        %s406 = smul.addr %s405, 8
        %s407 = scalar_lea.vmem %s4, %s406
      $region56: #{unet_dap_forward.12} parent=51 // pred_fallthru
        _
    $region52: #{unet_dap_forward.12} parent=5 // pred_fallthru
      _
  $region6: #{unet_dap_forward.12} parent=0 // loop_footer
    %s14 = sadd.s32 1, %s10
  $region7: #{unet_dap_forward.12} parent=0 // loop_footer_branch
    %9 = sbr.rel target = $region3
  $region8: #{unet_dap_forward.12} parent=0 // loop_exit
    _

// kernel: unet_dap_forward.13
$region0: #{unet_dap_forward.13}
  #allocation0 [shape = 'u32[]', space=smem, size = 0x4, offset = 0x4, fixed_abs, tag = 'smem constant byte address 0x4 - core index']
  #allocation1 [shape = 'u32[144,128]{1,0:T(1,128)}', space=vmem, size = 0x12000, scoped, tag = 'internal scratch']
  #allocation2 [shape = 'f32[8,16]{1,0:T(8,128)}', space=vmem, size = 0x1000, scoped, tag = 'scratch operand']
  %s0 = inlined_call_operand.vmem [shape: bf16[1,6,72,16], index: 0, kind: input, shape index: {}]
  %s1 = inlined_call_operand.vmem [shape: bf16[3,8,72], index: 1, kind: input, shape index: {}]
  %s2 = inlined_call_operand.vmem [shape: f32[8,1], index: 2, kind: input, shape index: {}]
  %s3 = inlined_call_operand.vmem [shape: f32[8,1], index: 3, kind: input, shape index: {}]
  %s4 = inlined_call_operand.vmem [shape: f32[1,4,8,16], index: 4, kind: output, shape index: {}]
  %s5 = sld [smem:[#allocation0]]
  $region57: #{unet_dap_forward.13} parent=0
    _
  %s7 = ssub.s32 1, %s5
  %s8 = scalar_select 0, %s7, %s5
  loop: start=0, step=1, limit=14
  $region2: #{unet_dap_forward.13} parent=0 // loop_pre_header
    _
  $region3: #{unet_dap_forward.13} parent=0 // loop_header
    %s10 = sphi 0, %s14
    %p11 = scmp.ge.s32.totalorder %s10, 14
    %s17 = sphi 0, %s43
    %s18 = sphi 0, %s39
    %s19 = sphi 0, %s35
    %s20 = sphi 0, %s31
    %s21 = sphi 0, %s17
    %s22 = sphi 0, %s18
    %s23 = sphi 0, %s19
    %s24 = sphi 0, %s20
    %s25 = sphi 0, %s21
    %s26 = sphi 0, %s22
    %s27 = sphi 0, %s23
    %s28 = sphi 0, %s24
    %s52 = sphi 0, %s54
    %s55 = sphi 0, %s52
    %s56 = sphi 0, %s55
    %s72 = sphi 0, %s56
    %s76 = sphi 0, %s76
    %s78 = sphi 0, %s76
    %s79 = sphi 0, %s78
    %s93 = sphi 0, %s79
    %s97 = sphi 0, %s97
    %s99 = sphi 0, %s97
    %s100 = sphi 0, %s99
    %s114 = sphi 0, %s100
    %s118 = sphi 0, %s118
    %s120 = sphi 0, %s118
    %s121 = sphi 0, %s120
    %s135 = sphi 0, %s121
    %s145 = sphi 0, %s147
    %s148 = sphi 0, %s145
    %s149 = sphi 0, %s148
    %s165 = sphi 0, %s149
  $region4: #{unet_dap_forward.13} parent=0 // loop_header_branch
    %13 = sbr.rel (%p11) target = $region8
  $region5: #{unet_dap_forward.13} parent=0 // loop_body
    %s15 = ssub.s32 %s10, 1
    %s16 = ssub.s32 %s10, 2
    %s29 = sadd.s32 1, %s20
    %p30 = scmp.ge.s32.totalorder %s29, 3
    %s31 = scalar_select %p30, 0, %s29
    %s32 = sadd.s32 1, %s19
    %s33 = scalar_select %p30, %s32, %s19
    %p34 = scmp.ge.s32.totalorder %s33, 1
    %s35 = scalar_select %p34, 0, %s33
    %s36 = sadd.s32 1, %s18
    %s37 = scalar_select %p34, %s36, %s18
    %p38 = scmp.ge.s32.totalorder %s37, 4
    %s39 = scalar_select %p38, 0, %s37
    %s40 = sadd.s32 1, %s17
    %s41 = scalar_select %p38, %s40, %s17
    %p42 = scmp.ge.s32.totalorder %s41, 1
    %s43 = scalar_select %p42, 0, %s41
    %s44 = sadd.s32 %s18, %s20
    %s45 = sadd.s32 %s39, %s31
    %s46 = ssub.s32 %s17, %s43
    %s47 = ssub.s32 %s44, %s45
    %s48 = sor.u32 %s46, %s47
    %s49 = ssub.s32 %s19, %s35
    %s50 = sor.u32 %s48, %s49
    %p51 = scmp.eq.s32.totalorder %s50, 0
    %s53 = sadd.s32 %s52, 1
    %s54 = scalar_select %p51, %s52, %s53
    %p57 = pneg %p51
    %p58 = scmp.eq.s32.totalorder %s10, 11
    %p59 = por %p57, %p58
    %p60 = scmp.ne.s32.totalorder %s52, %s55
    %p61 = scmp.eq.s32.totalorder %s10, 0
    %p62 = por %p60, %p61
    %p63 = scmp.ne.s32.totalorder %s52, %s55
    %p64 = scmp.eq.s32.totalorder %s15, 11
    %p65 = por %p63, %p64
    %p66 = scmp.ne.s32.totalorder %s55, %s56
    %p67 = scmp.eq.s32.totalorder %s15, 0
    %p68 = por %p66, %p67
    %p69 = scmp.ne.s32.totalorder %s55, %s56
    %p70 = scmp.eq.s32.totalorder %s16, 11
    %p71 = por %p69, %p70
    %p73 = scmp.ne.s32.totalorder %s56, %s72
    %p74 = scmp.eq.s32.totalorder %s16, 0
    %p75 = por %p73, %p74
    %s77 = sadd.s32 %s76, 1
    %p80 = scmp.eq.s32.totalorder %s10, 11
    %p81 = scmp.ne.s32.totalorder %s76, %s78
    %p82 = scmp.eq.s32.totalorder %s10, 0
    %p83 = por %p81, %p82
    %p84 = scmp.ne.s32.totalorder %s76, %s78
    %p85 = scmp.eq.s32.totalorder %s15, 11
    %p86 = por %p84, %p85
    %p87 = scmp.ne.s32.totalorder %s78, %s79
    %p88 = scmp.eq.s32.totalorder %s15, 0
    %p89 = por %p87, %p88
    %p90 = scmp.ne.s32.totalorder %s78, %s79
    %p91 = scmp.eq.s32.totalorder %s16, 11
    %p92 = por %p90, %p91
    %p94 = scmp.ne.s32.totalorder %s79, %s93
    %p95 = scmp.eq.s32.totalorder %s16, 0
    %p96 = por %p94, %p95
    %s98 = sadd.s32 %s97, 1
    %p101 = scmp.eq.s32.totalorder %s10, 11
    %p102 = scmp.ne.s32.totalorder %s97, %s99
    %p103 = scmp.eq.s32.totalorder %s10, 0
    %p104 = por %p102, %p103
    %p105 = scmp.ne.s32.totalorder %s97, %s99
    %p106 = scmp.eq.s32.totalorder %s15, 11
    %p107 = por %p105, %p106
    %p108 = scmp.ne.s32.totalorder %s99, %s100
    %p109 = scmp.eq.s32.totalorder %s15, 0
    %p110 = por %p108, %p109
    %p111 = scmp.ne.s32.totalorder %s99, %s100
    %p112 = scmp.eq.s32.totalorder %s16, 11
    %p113 = por %p111, %p112
    %p115 = scmp.ne.s32.totalorder %s100, %s114
    %p116 = scmp.eq.s32.totalorder %s16, 0
    %p117 = por %p115, %p116
    %s119 = sadd.s32 %s118, 1
    %p122 = scmp.eq.s32.totalorder %s10, 11
    %p123 = scmp.ne.s32.totalorder %s118, %s120
    %p124 = scmp.eq.s32.totalorder %s10, 0
    %p125 = por %p123, %p124
    %p126 = scmp.ne.s32.totalorder %s118, %s120
    %p127 = scmp.eq.s32.totalorder %s15, 11
    %p128 = por %p126, %p127
    %p129 = scmp.ne.s32.totalorder %s120, %s121
    %p130 = scmp.eq.s32.totalorder %s15, 0
    %p131 = por %p129, %p130
    %p132 = scmp.ne.s32.totalorder %s120, %s121
    %p133 = scmp.eq.s32.totalorder %s16, 11
    %p134 = por %p132, %p133
    %p136 = scmp.ne.s32.totalorder %s121, %s135
    %p137 = scmp.eq.s32.totalorder %s16, 0
    %p138 = por %p136, %p137
    %s139 = ssub.s32 %s17, %s43
    %s140 = ssub.s32 %s18, %s39
    %s141 = sor.u32 %s139, %s140
    %s142 = ssub.s32 %s19, %s35
    %s143 = sor.u32 %s141, %s142
    %p144 = scmp.eq.s32.totalorder %s143, 0
    %s146 = sadd.s32 %s145, 1
    %s147 = scalar_select %p144, %s145, %s146
    %p150 = pneg %p144
    %p151 = scmp.eq.s32.totalorder %s10, 11
    %p152 = por %p150, %p151
    %p153 = scmp.ne.s32.totalorder %s145, %s148
    %p154 = scmp.eq.s32.totalorder %s10, 0
    %p155 = por %p153, %p154
    %p156 = scmp.ne.s32.totalorder %s145, %s148
    %p157 = scmp.eq.s32.totalorder %s15, 11
    %p158 = por %p156, %p157
    %p159 = scmp.ne.s32.totalorder %s148, %s149
    %p160 = scmp.eq.s32.totalorder %s15, 0
    %p161 = por %p159, %p160
    %p162 = scmp.ne.s32.totalorder %s148, %s149
    %p163 = scmp.eq.s32.totalorder %s16, 11
    %p164 = por %p162, %p163
    %p166 = scmp.ne.s32.totalorder %s149, %s165
    %p167 = scmp.eq.s32.totalorder %s16, 0
    %p168 = por %p166, %p167
    %p169 = scmp.le.s32.totalorder 1, %s10
    %p170 = scmp.lt.s32.totalorder %s10, 13
    %p171 = pnand %p169, %p170
    %p172 = pneg %p171
    // Predicated region
    $region9: #{unet_dap_forward.13} parent=5 // pred_check
      _
    $region10: #{unet_dap_forward.13} parent=5 // pred_check_branch
      %174 = sbr.rel (%p171) target = $region12
    $region11: #{unet_dap_forward.13} parent=5 // pred_region
      %s175 = ssub.s32 %s10, 1
      // Predicated region
      $region13: #{unet_dap_forward.13} parent=11 // pred_check
        %p176 = pneg %p89
      $region14: #{unet_dap_forward.13} parent=11 // pred_check_branch
        %178 = sbr.rel (%p176) target = $region16
      $region15: #{unet_dap_forward.13} parent=11 // pred_region
        _
      $region16: #{unet_dap_forward.13} parent=11 // pred_fallthru
        _
      // Predicated region
      $region17: #{unet_dap_forward.13} parent=11 // pred_check
        %p179 = pneg %p110
      $region18: #{unet_dap_forward.13} parent=11 // pred_check_branch
        %181 = sbr.rel (%p179) target = $region20
      $region19: #{unet_dap_forward.13} parent=11 // pred_region
        _
      $region20: #{unet_dap_forward.13} parent=11 // pred_fallthru
        _
      // Predicated region
      $region21: #{unet_dap_forward.13} parent=11 // pred_check
        %p182 = pneg %p131
      $region22: #{unet_dap_forward.13} parent=11 // pred_check_branch
        %184 = sbr.rel (%p182) target = $region24
      $region23: #{unet_dap_forward.13} parent=11 // pred_region
        _
      $region24: #{unet_dap_forward.13} parent=11 // pred_fallthru
        _
    $region12: #{unet_dap_forward.13} parent=5 // pred_fallthru
      _
    %p185 = scmp.lt.s32.totalorder %s10, 12
    // Predicated region
    $region25: #{unet_dap_forward.13} parent=5 // pred_check
      %p186 = pneg %p185
    $region26: #{unet_dap_forward.13} parent=5 // pred_check_branch
      %188 = sbr.rel (%p186) target = $region28
    $region27: #{unet_dap_forward.13} parent=5 // pred_region
      // Predicated region
      $region29: #{unet_dap_forward.13} parent=27 // pred_check
        %p189 = pneg %p62
      $region30: #{unet_dap_forward.13} parent=27 // pred_check_branch
        %191 = sbr.rel (%p189) target = $region32
      $region31: #{unet_dap_forward.13} parent=27 // pred_region
        %s192 = sadd.s32 %s18, %s20
        %p193 = scmp.lt.s32.totalorder %s17, 0
        %s194 = scalar_select %p193, %s17, 0
        %p195 = scmp.lt.s32.totalorder %s192, 5
        %s196 = scalar_select %p195, %s192, 5
        %p197 = scmp.lt.s32.totalorder %s19, 0
        %s198 = scalar_select %p197, %s19, 0
        %s199 = smul.addr %s196, 9
        %s200 = sadd.s32 %s198, %s199
        %s201 = smul.addr %s194, 54
        %s202 = sadd.s32 %s200, %s201
        %s203 = smul.addr %s202, 4
        %s204 = scalar_lea.vmem %s0, %s203
        %s205 = sadd.s32 %s18, %s20
      $region32: #{unet_dap_forward.13} parent=27 // pred_fallthru
        _
    $region28: #{unet_dap_forward.13} parent=5 // pred_fallthru
      _
    %p206 = scmp.le.s32.totalorder 1, %s10
    %p207 = scmp.lt.s32.totalorder %s10, 13
    %p208 = pnand %p206, %p207
    %p209 = pneg %p208
    // Predicated region
    $region33: #{unet_dap_forward.13} parent=5 // pred_check
      _
    $region34: #{unet_dap_forward.13} parent=5 // pred_check_branch
      %211 = sbr.rel (%p208) target = $region36
    $region35: #{unet_dap_forward.13} parent=5 // pred_region
      %s212 = ssub.s32 %s10, 1
      %s213 = sadd.s32 %s22, %s24
      %p214 = scmp.lt.s32.totalorder %s21, 0
      %s215 = scalar_select %p214, %s21, 0
      %p216 = scmp.lt.s32.totalorder %s213, 5
      %s217 = scalar_select %p216, %s213, 5
      %p218 = scmp.lt.s32.totalorder %s23, 0
      %s219 = scalar_select %p218, %s23, 0
      %s220 = smul.addr %s217, 9
      %s221 = sadd.s32 %s219, %s220
      %s222 = smul.addr %s215, 54
      %s223 = sadd.s32 %s221, %s222
      %s224 = smul.addr %s223, 4
      %s225 = scalar_lea.vmem %s0, %s224
      %p226 = pneg %p68
      %p227 = pneg %p65
      %p228 = pneg %p89
      %p229 = pneg %p86
      %p230 = pneg %p110
      %p231 = pneg %p107
      %p232 = pneg %p131
      %p233 = pneg %p128
      %p234 = pneg %p161
      %p235 = pneg %p158
      %p236 = scmp.lt.s32.totalorder %s21, 0
      %s237 = scalar_select %p236, %s21, 0
      %p238 = scmp.lt.s32.totalorder %s22, 3
      %s239 = scalar_select %p238, %s22, 3
      %p240 = scmp.lt.s32.totalorder %s23, 0
      %s241 = scalar_select %p240, %s23, 0
      %s242 = sadd.s32 %s241, %s239
      %s243 = smul.addr %s237, 4
      %s244 = sadd.s32 %s242, %s243
      %s245 = smul.addr %s244, 8
      %s246 = scalar_lea.vmem %s4, %s245
      %s247 = sadd.s32 %s22, %s24
      %p248 = scmp.lt.s32.totalorder %s21, 0
      %s249 = scalar_select %p248, %s21, 0
      %p250 = scmp.lt.s32.totalorder %s247, 5
      %s251 = scalar_select %p250, %s247, 5
      %p252 = scmp.lt.s32.totalorder %s23, 0
      %s253 = scalar_select %p252, %s23, 0
      %s254 = smul.addr %s251, 9
      %s255 = sadd.s32 %s253, %s254
      %s256 = smul.addr %s249, 54
      %s257 = sadd.s32 %s255, %s256
      %s258 = smul.addr %s257, 4
      %s259 = scalar_lea.vmem %s0, %s258
      %s260 = sadd.s32 %s22, %s24
      %p261 = scmp.lt.s32.totalorder %s21, 0
      %s262 = scalar_select %p261, %s21, 0
      %p263 = scmp.lt.s32.totalorder %s22, 3
      %s264 = scalar_select %p263, %s22, 3
      %p265 = scmp.lt.s32.totalorder %s23, 0
      %s266 = scalar_select %p265, %s23, 0
      %s267 = sadd.s32 %s266, %s264
      %s268 = smul.addr %s262, 4
      %s269 = sadd.s32 %s267, %s268
      %s270 = smul.addr %s269, 8
      %s271 = scalar_lea.vmem %s4, %s270
      %p273 = scmp.eq.s32.totalorder %s24, 0
      // Predicated region
      $region37: #{unet_dap_forward.13} parent=35 // pred_check
        %p274 = pneg %p273
      $region38: #{unet_dap_forward.13} parent=35 // pred_check_branch
        %276 = sbr.rel (%p274) target = $region40
      $region39: #{unet_dap_forward.13} parent=35 // pred_region
        %vm277 = vcmask 130048
        %278 = vst.msk [vmem:[#allocation2] sm:$0xff] %vm277, 0.0
      $region40: #{unet_dap_forward.13} parent=35 // pred_fallthru
        _
      %v279 = vld [vmem:[#allocation2] sm:$0xff]
      %s280 = smul.addr %s24, 4
      %s281 = scalar_lea.vmem %s1, %s280
      %v282 = vld [vmem:[%s281] sm:$0xf]
      %v283 = vld [vmem:[%s259] sm:$0xf]
      %v284 = vld [vmem:[%s259 + $0x4] sm:$0xf]
      %v285 = vld [vmem:[%s259 + $0x8] sm:$0xf]
      %v286 = vld [vmem:[%s259 + $0xc] sm:$0xf]
      %v287 = vld [vmem:[%s259 + $0x10] sm:$0xf]
      %v288 = vld [vmem:[%s259 + $0x14] sm:$0xf]
      %v289 = vld [vmem:[%s259 + $0x18] sm:$0xf]
      %v290 = vld [vmem:[%s259 + $0x1c] sm:$0xf]
      %v291 = vld [vmem:[%s259 + $0x20] sm:$0xf]
      %v301 = vunpack.c.l.b16 %v283
      %v302 = vunpack.c.l.b16 %v284
      %v303 = vunpack.c.l.b16 %v285
      %v304 = vunpack.c.l.b16 %v286
      %v305 = vunpack.c.l.b16 %v287
      %v306 = vunpack.c.l.b16 %v288
      %v307 = vunpack.c.l.b16 %v289
      %v308 = vunpack.c.l.b16 %v290
      %v309 = vunpack.c.l.b16 %v291
      %v310 = vpack.c.b16 %v302, %v301
      %v311 = vpack.c.b16 %v304, %v303
      %v312 = vpack.c.b16 %v306, %v305
      %v313 = vpack.c.b16 %v308, %v307
      %v314 = vpack.c.b16 %v309, %v309
      %vm319 = vcmask 588800
      %v321 = vsel %vm319, %v282, 0
      %vm323 = vcmask 1043456
      %v325 = vsel %vm323, %v314, 0
      %327 = vmatprep.subr.bf16.mxu0 0
      %328 = vmatpush1.bf16.msra.mxu0 %v310
      %329 = vmatprep.subr.bf16.mxu0 0
      %330 = vmatpush1.bf16.msra.mxu0 %v311
      %331 = vmatprep.subr.bf16.mxu0 0
      %332 = vmatpush1.bf16.msra.mxu0 %v312
      %333 = vmatprep.subr.bf16.mxu0 0
      %334 = vmatpush1.bf16.msra.mxu0 %v313
      %335 = vmatprep.subr.bf16.mxu0 0
      %336 = vmatpush1.bf16.msra.mxu0 %v325
      %337 = vmatprep.subr.bf16.mxu0 0
      %338 = vmatpush1.bf16.msra.mxu0 0
      %339 = vmatprep.subr.bf16.mxu0 0
      %340 = vmatpush1.bf16.msra.mxu0 0
      %341 = vmatprep.subr.bf16.mxu0 0
      %342 = vmatpush1.bf16.msra.mxu0 0
      %343 = vmatprep.subr.bf16.mxu0 0
      %344 = vmatpush1.bf16.msra.mxu0 0
      %345 = vmatprep.subr.bf16.mxu0 0
      %346 = vmatpush1.bf16.msra.mxu0 0
      %347 = vmatprep.subr.bf16.mxu0 0
      %348 = vmatpush1.bf16.msra.mxu0 0
      %349 = vmatprep.subr.bf16.mxu0 0
      %350 = vmatpush1.bf16.msra.mxu0 0
      %351 = vmatprep.subr.bf16.mxu0 0
      %352 = vmatpush1.bf16.msra.mxu0 0
      %353 = vmatprep.subr.bf16.mxu0 0
      %354 = vmatpush1.bf16.msra.mxu0 0
      %355 = vmatprep.subr.bf16.mxu0 0
      %356 = vmatpush1.bf16.msra.mxu0 0
      %357 = vmatprep.subr.bf16.mxu0 0
      %358 = vmatpush1.bf16.msra.mxu0 0
      %359 = vmatprep.mubr.bf16.mxu0 0
      %360 = vmatmul.mubr.bf16.gmra.mrb[0].mxu0 %v321
      %v361 = vpop.f32.mrb[0].mxu0
      %v362 = vadd.f32 0.0, %v361
      %v363 = vpop.f32.mrb[0].mxu0
      %v364 = vpop.f32.mrb[0].mxu0
      %v365 = vpop.f32.mrb[0].mxu0
      %366 = vdwg.mxu0
      %v367 = vadd.f32 %v279, %v362
      %vm368 = vcmask 130048
      %369 = vst.msk [vmem:[#allocation2] sm:$0xff] %vm368, %v367
      %p370 = scmp.eq.s32.totalorder %s24, 2
      // Predicated region
      $region41: #{unet_dap_forward.13} parent=35 // pred_check
        %p371 = pneg %p370
      $region42: #{unet_dap_forward.13} parent=35 // pred_check_branch
        %373 = sbr.rel (%p371) target = $region44
      $region43: #{unet_dap_forward.13} parent=35 // pred_region
        %v374 = vld [vmem:[#allocation2] sm:$0xff]
        %v375 = vld [vmem:[%s2] sm:$0xff]
        %377 = vset.pattern.permute.xlu0 0
        %378 = vperm.xlu0 %377, %v375
        %v379 = vpop.permute.xlu0 %378
        %v381 = vmul.f32 %v374, %v379
        %v382 = vld [vmem:[%s3] sm:$0xff]
        %384 = vset.pattern.permute.xlu0 0
        %385 = vperm.xlu0 %384, %v382
        %v386 = vpop.permute.xlu0 %385
        %v388 = vadd.f32 %v381, %v386
        %v389 = vmax.f32 %v388, 0.0
        %390 = vst.msk [vmem:[%s271] sm:$0xff] %vm368, %v389
      $region44: #{unet_dap_forward.13} parent=35 // pred_fallthru
        _
      %p391 = scmp.lt.s32.totalorder %s21, 0
      %s392 = scalar_select %p391, %s21, 0
      %p393 = scmp.lt.s32.totalorder %s22, 3
      %s394 = scalar_select %p393, %s22, 3
      %p395 = scmp.lt.s32.totalorder %s23, 0
      %s396 = scalar_select %p395, %s23, 0
      %s397 = sadd.s32 %s396, %s394
      %s398 = smul.addr %s392, 4
      %s399 = sadd.s32 %s397, %s398
      %s400 = smul.addr %s399, 8
      %s401 = scalar_lea.vmem %s4, %s400
      // Predicated region
      $region45: #{unet_dap_forward.13} parent=35 // pred_check
        %p402 = pneg %p158
      $region46: #{unet_dap_forward.13} parent=35 // pred_check_branch
        %404 = sbr.rel (%p402) target = $region48
      $region47: #{unet_dap_forward.13} parent=35 // pred_region
        _
      $region48: #{unet_dap_forward.13} parent=35 // pred_fallthru
        _
    $region36: #{unet_dap_forward.13} parent=5 // pred_fallthru
      _
    %p405 = scmp.le.s32.totalorder 2, %s10
    // Predicated region
    $region49: #{unet_dap_forward.13} parent=5 // pred_check
      %p406 = pneg %p405
    $region50: #{unet_dap_forward.13} parent=5 // pred_check_branch
      %408 = sbr.rel (%p406) target = $region52
    $region51: #{unet_dap_forward.13} parent=5 // pred_region
      %s409 = ssub.s32 %s10, 2
      // Predicated region
      $region53: #{unet_dap_forward.13} parent=51 // pred_check
        %p410 = pneg %p164
      $region54: #{unet_dap_forward.13} parent=51 // pred_check_branch
        %412 = sbr.rel (%p410) target = $region56
      $region55: #{unet_dap_forward.13} parent=51 // pred_region
        %p413 = scmp.lt.s32.totalorder %s25, 0
        %s414 = scalar_select %p413, %s25, 0
        %p415 = scmp.lt.s32.totalorder %s26, 3
        %s416 = scalar_select %p415, %s26, 3
        %p417 = scmp.lt.s32.totalorder %s27, 0
        %s418 = scalar_select %p417, %s27, 0
        %s419 = sadd.s32 %s418, %s416
        %s420 = smul.addr %s414, 4
        %s421 = sadd.s32 %s419, %s420
        %s422 = smul.addr %s421, 8
        %s423 = scalar_lea.vmem %s4, %s422
      $region56: #{unet_dap_forward.13} parent=51 // pred_fallthru
        _
    $region52: #{unet_dap_forward.13} parent=5 // pred_fallthru
      _
  $region6: #{unet_dap_forward.13} parent=0 // loop_footer
    %s14 = sadd.s32 1, %s10
  $region7: #{unet_dap_forward.13} parent=0 // loop_footer_branch
    %9 = sbr.rel target = $region3
  $region8: #{unet_dap_forward.13} parent=0 // loop_exit
    _

// kernel: squeeze.3
$region0: #{squeeze.3}
  %s0 = inlined_call_operand.vmem [shape: bf16[64], index: 0, kind: input, shape index: {}]
  %s1 = inlined_call_operand.vmem [shape: bf16[1,2,8,2,2], index: 1, kind: output, shape index: {}]
  $region1: #{squeeze.3} parent=0
    #allocation0 [shape = 'u8[65536]{0}', space=vmem, size = 0x10000, scoped, tag = 'scoped mem for output reshape']
    #allocation1 [shape = 'u8[4096]{0}', space=vmem, size = 0x1000, scoped, tag = 'scoped mem for input reshape']
    %s3 = smul.u32 1, 2
    %s4 = sshllo.u32 0, %s3
    %s5 = sshrl.u32 %s4, 1
    %s6 = sor.u32 %s4, %s5
    %s7 = sand.u32 %s6, 85
    %s8 = sshrl.u32 %s7, 1
    %s9 = sor.u32 %s7, %s8
    %s10 = sand.u32 51, %s9
    %s11 = sshrl.u32 %s10, 2
    %s12 = sor.u32 %s10, %s11
    %s13 = sand.u32 15, %s12
    %v14 = vld [vmem:[%s0] sm:%s13]
    %v15 = vunpack.c.l.bf16 %v14
    %v16 = vunpack.c.h.bf16 %v14
    %17 = vst [vmem:[#allocation1] sm:%s4] %v15
    %v18 = vld [vmem:[#allocation1] sm:$0x1]
    %vm19 = vcmask 15360
    %20 = vst.msk [vmem:[#allocation0] sm:$0x1] %vm19, %v18
    %v21 = vld [vmem:[#allocation1] sm:$0x1]
    %22 = vrot.lane.b32.xlu0 %v21, 126
    %v23 = vpop.permute.xlu0 %22
    %vm24 = vcmask 15360
    %s25 = scalar_lea.vmem [#allocation0], 1
    %26 = vst.msk [vmem:[%s25] sm:$0x1] %vm24, %v23
    %v27 = vld [vmem:[#allocation1] sm:$0x1]
    %28 = vrot.lane.b32.xlu0 %v27, 124
    %v29 = vpop.permute.xlu0 %28
    %vm30 = vcmask 15360
    %s31 = scalar_lea.vmem [#allocation0], 8
    %32 = vst.msk [vmem:[%s31] sm:$0x1] %vm30, %v29
    %v33 = vld [vmem:[#allocation1] sm:$0x1]
    %34 = vrot.lane.b32.xlu0 %v33, 122
    %v35 = vpop.permute.xlu0 %34
    %vm36 = vcmask 15360
    %s37 = scalar_lea.vmem [#allocation0], 9
    %38 = vst.msk [vmem:[%s37] sm:$0x1] %vm36, %v35
    %v39 = vld [vmem:[#allocation1] sm:$0x1]
    %40 = vrot.lane.b32.xlu0 %v39, 120
    %v41 = vpop.permute.xlu0 %40
    %vm42 = vcmask 15360
    %s43 = scalar_lea.vmem [#allocation0], 16
    %44 = vst.msk [vmem:[%s43] sm:$0x1] %vm42, %v41
    %v45 = vld [vmem:[#allocation1] sm:$0x1]
    %46 = vrot.lane.b32.xlu0 %v45, 118
    %v47 = vpop.permute.xlu0 %46
    %vm48 = vcmask 15360
    %s49 = scalar_lea.vmem [#allocation0], 17
    %50 = vst.msk [vmem:[%s49] sm:$0x1] %vm48, %v47
    %v51 = vld [vmem:[#allocation1] sm:$0x1]
    %52 = vrot.lane.b32.xlu0 %v51, 116
    %v53 = vpop.permute.xlu0 %52
    %vm54 = vcmask 15360
    %s55 = scalar_lea.vmem [#allocation0], 24
    %56 = vst.msk [vmem:[%s55] sm:$0x1] %vm54, %v53
    %v57 = vld [vmem:[#allocation1] sm:$0x1]
    %58 = vrot.lane.b32.xlu0 %v57, 114
    %v59 = vpop.permute.xlu0 %58
    %vm60 = vcmask 15360
    %s61 = scalar_lea.vmem [#allocation0], 25
    %62 = vst.msk [vmem:[%s61] sm:$0x1] %vm60, %v59
    %v63 = vld [vmem:[#allocation1] sm:$0x1]
    %64 = vrot.lane.b32.xlu0 %v63, 112
    %v65 = vpop.permute.xlu0 %64
    %vm66 = vcmask 15360
    %s67 = scalar_lea.vmem [#allocation0], 32
    %68 = vst.msk [vmem:[%s67] sm:$0x1] %vm66, %v65
    %v69 = vld [vmem:[#allocation1] sm:$0x1]
    %70 = vrot.lane.b32.xlu0 %v69, 110
    %v71 = vpop.permute.xlu0 %70
    %vm72 = vcmask 15360
    %s73 = scalar_lea.vmem [#allocation0], 33
    %74 = vst.msk [vmem:[%s73] sm:$0x1] %vm72, %v71
    %v75 = vld [vmem:[#allocation1] sm:$0x1]
    %76 = vrot.lane.b32.xlu0 %v75, 108
    %v77 = vpop.permute.xlu0 %76
    %vm78 = vcmask 15360
    %s79 = scalar_lea.vmem [#allocation0], 40
    %80 = vst.msk [vmem:[%s79] sm:$0x1] %vm78, %v77
    %v81 = vld [vmem:[#allocation1] sm:$0x1]
    %82 = vrot.lane.b32.xlu0 %v81, 106
    %v83 = vpop.permute.xlu0 %82
    %vm84 = vcmask 15360
    %s85 = scalar_lea.vmem [#allocation0], 41
    %86 = vst.msk [vmem:[%s85] sm:$0x1] %vm84, %v83
    %v87 = vld [vmem:[#allocation1] sm:$0x1]
    %88 = vrot.lane.b32.xlu0 %v87, 104
    %v89 = vpop.permute.xlu0 %88
    %vm90 = vcmask 15360
    %s91 = scalar_lea.vmem [#allocation0], 48
    %92 = vst.msk [vmem:[%s91] sm:$0x1] %vm90, %v89
    %v93 = vld [vmem:[#allocation1] sm:$0x1]
    %94 = vrot.lane.b32.xlu0 %v93, 102
    %v95 = vpop.permute.xlu0 %94
    %vm96 = vcmask 15360
    %s97 = scalar_lea.vmem [#allocation0], 49
    %98 = vst.msk [vmem:[%s97] sm:$0x1] %vm96, %v95
    %v99 = vld [vmem:[#allocation1] sm:$0x1]
    %100 = vrot.lane.b32.xlu0 %v99, 100
    %v101 = vpop.permute.xlu0 %100
    %vm102 = vcmask 15360
    %s103 = scalar_lea.vmem [#allocation0], 56
    %104 = vst.msk [vmem:[%s103] sm:$0x1] %vm102, %v101
    %v105 = vld [vmem:[#allocation1] sm:$0x1]
    %106 = vrot.lane.b32.xlu0 %v105, 98
    %v107 = vpop.permute.xlu0 %106
    %vm108 = vcmask 15360
    %s109 = scalar_lea.vmem [#allocation0], 57
    %110 = vst.msk [vmem:[%s109] sm:$0x1] %vm108, %v107
    %v111 = vld [vmem:[#allocation1] sm:$0x1]
    %112 = vrot.lane.b32.xlu0 %v111, 96
    %v113 = vpop.permute.xlu0 %112
    %vm114 = vcmask 15360
    %s115 = scalar_lea.vmem [#allocation0], 64
    %116 = vst.msk [vmem:[%s115] sm:$0x1] %vm114, %v113
    %v117 = vld [vmem:[#allocation1] sm:$0x1]
    %118 = vrot.lane.b32.xlu0 %v117, 94
    %v119 = vpop.permute.xlu0 %118
    %vm120 = vcmask 15360
    %s121 = scalar_lea.vmem [#allocation0], 65
    %122 = vst.msk [vmem:[%s121] sm:$0x1] %vm120, %v119
    %v123 = vld [vmem:[#allocation1] sm:$0x1]
    %124 = vrot.lane.b32.xlu0 %v123, 92
    %v125 = vpop.permute.xlu0 %124
    %vm126 = vcmask 15360
    %s127 = scalar_lea.vmem [#allocation0], 72
    %128 = vst.msk [vmem:[%s127] sm:$0x1] %vm126, %v125
    %v129 = vld [vmem:[#allocation1] sm:$0x1]
    %130 = vrot.lane.b32.xlu0 %v129, 90
    %v131 = vpop.permute.xlu0 %130
    %vm132 = vcmask 15360
    %s133 = scalar_lea.vmem [#allocation0], 73
    %134 = vst.msk [vmem:[%s133] sm:$0x1] %vm132, %v131
    %v135 = vld [vmem:[#allocation1] sm:$0x1]
    %136 = vrot.lane.b32.xlu0 %v135, 88
    %v137 = vpop.permute.xlu0 %136
    %vm138 = vcmask 15360
    %s139 = scalar_lea.vmem [#allocation0], 80
    %140 = vst.msk [vmem:[%s139] sm:$0x1] %vm138, %v137
    %v141 = vld [vmem:[#allocation1] sm:$0x1]
    %142 = vrot.lane.b32.xlu0 %v141, 86
    %v143 = vpop.permute.xlu0 %142
    %vm144 = vcmask 15360
    %s145 = scalar_lea.vmem [#allocation0], 81
    %146 = vst.msk [vmem:[%s145] sm:$0x1] %vm144, %v143
    %v147 = vld [vmem:[#allocation1] sm:$0x1]
    %148 = vrot.lane.b32.xlu0 %v147, 84
    %v149 = vpop.permute.xlu0 %148
    %vm150 = vcmask 15360
    %s151 = scalar_lea.vmem [#allocation0], 88
    %152 = vst.msk [vmem:[%s151] sm:$0x1] %vm150, %v149
    %v153 = vld [vmem:[#allocation1] sm:$0x1]
    %154 = vrot.lane.b32.xlu0 %v153, 82
    %v155 = vpop.permute.xlu0 %154
    %vm156 = vcmask 15360
    %s157 = scalar_lea.vmem [#allocation0], 89
    %158 = vst.msk [vmem:[%s157] sm:$0x1] %vm156, %v155
    %v159 = vld [vmem:[#allocation1] sm:$0x1]
    %160 = vrot.lane.b32.xlu0 %v159, 80
    %v161 = vpop.permute.xlu0 %160
    %vm162 = vcmask 15360
    %s163 = scalar_lea.vmem [#allocation0], 96
    %164 = vst.msk [vmem:[%s163] sm:$0x1] %vm162, %v161
    %v165 = vld [vmem:[#allocation1] sm:$0x1]
    %166 = vrot.lane.b32.xlu0 %v165, 78
    %v167 = vpop.permute.xlu0 %166
    %vm168 = vcmask 15360
    %s169 = scalar_lea.vmem [#allocation0], 97
    %170 = vst.msk [vmem:[%s169] sm:$0x1] %vm168, %v167
    %v171 = vld [vmem:[#allocation1] sm:$0x1]
    %172 = vrot.lane.b32.xlu0 %v171, 76
    %v173 = vpop.permute.xlu0 %172
    %vm174 = vcmask 15360
    %s175 = scalar_lea.vmem [#allocation0], 104
    %176 = vst.msk [vmem:[%s175] sm:$0x1] %vm174, %v173
    %v177 = vld [vmem:[#allocation1] sm:$0x1]
    %178 = vrot.lane.b32.xlu0 %v177, 74
    %v179 = vpop.permute.xlu0 %178
    %vm180 = vcmask 15360
    %s181 = scalar_lea.vmem [#allocation0], 105
    %182 = vst.msk [vmem:[%s181] sm:$0x1] %vm180, %v179
    %v183 = vld [vmem:[#allocation1] sm:$0x1]
    %184 = vrot.lane.b32.xlu0 %v183, 72
    %v185 = vpop.permute.xlu0 %184
    %vm186 = vcmask 15360
    %s187 = scalar_lea.vmem [#allocation0], 112
    %188 = vst.msk [vmem:[%s187] sm:$0x1] %vm186, %v185
    %v189 = vld [vmem:[#allocation1] sm:$0x1]
    %190 = vrot.lane.b32.xlu0 %v189, 70
    %v191 = vpop.permute.xlu0 %190
    %vm192 = vcmask 15360
    %s193 = scalar_lea.vmem [#allocation0], 113
    %194 = vst.msk [vmem:[%s193] sm:$0x1] %vm192, %v191
    %v195 = vld [vmem:[#allocation1] sm:$0x1]
    %196 = vrot.lane.b32.xlu0 %v195, 68
    %v197 = vpop.permute.xlu0 %196
    %vm198 = vcmask 15360
    %s199 = scalar_lea.vmem [#allocation0], 120
    %200 = vst.msk [vmem:[%s199] sm:$0x1] %vm198, %v197
    %v201 = vld [vmem:[#allocation1] sm:$0x1]
    %202 = vrot.lane.b32.xlu0 %v201, 66
    %v203 = vpop.permute.xlu0 %202
    %vm204 = vcmask 15360
    %s205 = scalar_lea.vmem [#allocation0], 121
    %206 = vst.msk [vmem:[%s205] sm:$0x1] %vm204, %v203
    %s208 = smul.u32 1, 2
    %s209 = sshllo.u32 0, %s208
    %s210 = sshrl.u32 %s208, 1
    %v211 = vld [vmem:[#allocation0] sm:%s209]
    %v212 = vpack.c.bf16 0.0, %v211
    %s213 = sshllo.u32 0, %s210
    %214 = vst [vmem:[%s1] sm:%s213] %v212
    %s215 = scalar_lea.vmem [#allocation0], 8
    %v216 = vld [vmem:[%s215] sm:%s209]
    %v217 = vpack.c.bf16 0.0, %v216
    %s218 = sshllo.u32 0, %s210
    %s219 = scalar_lea.vmem %s1, 1
    %220 = vst [vmem:[%s219] sm:%s218] %v217
    %s221 = scalar_lea.vmem [#allocation0], 16
    %v222 = vld [vmem:[%s221] sm:%s209]
    %v223 = vpack.c.bf16 0.0, %v222
    %s224 = sshllo.u32 0, %s210
    %s225 = smul.addr 1, 2
    %s226 = scalar_lea.vmem %s1, %s225
    %227 = vst [vmem:[%s226] sm:%s224] %v223
    %s228 = scalar_lea.vmem [#allocation0], 24
    %v229 = vld [vmem:[%s228] sm:%s209]
    %v230 = vpack.c.bf16 0.0, %v229
    %s231 = sshllo.u32 0, %s210
    %s232 = smul.addr 1, 3
    %s233 = scalar_lea.vmem %s1, %s232
    %234 = vst [vmem:[%s233] sm:%s231] %v230
    %s235 = scalar_lea.vmem [#allocation0], 32
    %v236 = vld [vmem:[%s235] sm:%s209]
    %v237 = vpack.c.bf16 0.0, %v236
    %s238 = sshllo.u32 0, %s210
    %s239 = smul.addr 1, 4
    %s240 = scalar_lea.vmem %s1, %s239
    %241 = vst [vmem:[%s240] sm:%s238] %v237
    %s242 = scalar_lea.vmem [#allocation0], 40
    %v243 = vld [vmem:[%s242] sm:%s209]
    %v244 = vpack.c.bf16 0.0, %v243
    %s245 = sshllo.u32 0, %s210
    %s246 = smul.addr 1, 5
    %s247 = scalar_lea.vmem %s1, %s246
    %248 = vst [vmem:[%s247] sm:%s245] %v244
    %s249 = scalar_lea.vmem [#allocation0], 48
    %v250 = vld [vmem:[%s249] sm:%s209]
    %v251 = vpack.c.bf16 0.0, %v250
    %s252 = sshllo.u32 0, %s210
    %s253 = smul.addr 1, 6
    %s254 = scalar_lea.vmem %s1, %s253
    %255 = vst [vmem:[%s254] sm:%s252] %v251
    %s256 = scalar_lea.vmem [#allocation0], 56
    %v257 = vld [vmem:[%s256] sm:%s209]
    %v258 = vpack.c.bf16 0.0, %v257
    %s259 = sshllo.u32 0, %s210
    %s260 = smul.addr 1, 7
    %s261 = scalar_lea.vmem %s1, %s260
    %262 = vst [vmem:[%s261] sm:%s259] %v258
    %s263 = scalar_lea.vmem [#allocation0], 64
    %v264 = vld [vmem:[%s263] sm:%s209]
    %v265 = vpack.c.bf16 0.0, %v264
    %s266 = sshllo.u32 0, %s210
    %s267 = smul.addr 1, 8
    %s268 = scalar_lea.vmem %s1, %s267
    %269 = vst [vmem:[%s268] sm:%s266] %v265
    %s270 = scalar_lea.vmem [#allocation0], 72
    %v271 = vld [vmem:[%s270] sm:%s209]
    %v272 = vpack.c.bf16 0.0, %v271
    %s273 = sshllo.u32 0, %s210
    %s274 = smul.addr 1, 9
    %s275 = scalar_lea.vmem %s1, %s274
    %276 = vst [vmem:[%s275] sm:%s273] %v272
    %s277 = scalar_lea.vmem [#allocation0], 80
    %v278 = vld [vmem:[%s277] sm:%s209]
    %v279 = vpack.c.bf16 0.0, %v278
    %s280 = sshllo.u32 0, %s210
    %s281 = smul.addr 1, 10
    %s282 = scalar_lea.vmem %s1, %s281
    %283 = vst [vmem:[%s282] sm:%s280] %v279
    %s284 = scalar_lea.vmem [#allocation0], 88
    %v285 = vld [vmem:[%s284] sm:%s209]
    %v286 = vpack.c.bf16 0.0, %v285
    %s287 = sshllo.u32 0, %s210
    %s288 = smul.addr 1, 11
    %s289 = scalar_lea.vmem %s1, %s288
    %290 = vst [vmem:[%s289] sm:%s287] %v286
    %s291 = scalar_lea.vmem [#allocation0], 96
    %v292 = vld [vmem:[%s291] sm:%s209]
    %v293 = vpack.c.bf16 0.0, %v292
    %s294 = sshllo.u32 0, %s210
    %s295 = smul.addr 1, 12
    %s296 = scalar_lea.vmem %s1, %s295
    %297 = vst [vmem:[%s296] sm:%s294] %v293
    %s298 = scalar_lea.vmem [#allocation0], 104
    %v299 = vld [vmem:[%s298] sm:%s209]
    %v300 = vpack.c.bf16 0.0, %v299
    %s301 = sshllo.u32 0, %s210
    %s302 = smul.addr 1, 13
    %s303 = scalar_lea.vmem %s1, %s302
    %304 = vst [vmem:[%s303] sm:%s301] %v300
    %s305 = scalar_lea.vmem [#allocation0], 112
    %v306 = vld [vmem:[%s305] sm:%s209]
    %v307 = vpack.c.bf16 0.0, %v306
    %s308 = sshllo.u32 0, %s210
    %s309 = smul.addr 1, 14
    %s310 = scalar_lea.vmem %s1, %s309
    %311 = vst [vmem:[%s310] sm:%s308] %v307
    %s312 = scalar_lea.vmem [#allocation0], 120
    %v313 = vld [vmem:[%s312] sm:%s209]
    %v314 = vpack.c.bf16 0.0, %v313
    %s315 = sshllo.u32 0, %s210
    %s316 = smul.addr 1, 15
    %s317 = scalar_lea.vmem %s1, %s316
    %318 = vst [vmem:[%s317] sm:%s315] %v314

// kernel: unet_dap_forward.14
$region0: #{unet_dap_forward.14}
  #allocation0 [shape = 'u32[]', space=smem, size = 0x4, offset = 0x4, fixed_abs, tag = 'smem constant byte address 0x4 - core index']
  #allocation1 [shape = 'u32[144,128]{1,0:T(1,128)}', space=vmem, size = 0x12000, scoped, tag = 'internal scratch']
  %s0 = inlined_call_operand.vmem [shape: f32[8,64], index: 0, kind: input, shape index: {}]
  %s1 = inlined_call_operand.vmem [shape: f32[1,64], index: 1, kind: output, shape index: {}]
  %s2 = sld [smem:[#allocation0]]
  $region14: #{unet_dap_forward.14} parent=0
    _
  %s4 = ssub.s32 1, %s2
  %s5 = scalar_select 0, %s4, %s2
  // Predicated region
  $region2: #{unet_dap_forward.14} parent=0 // pred_check
    _
  $region3: #{unet_dap_forward.14} parent=0 // pred_check_branch
    %7 = sbr.rel (0) target = $region5
  $region4: #{unet_dap_forward.14} parent=0 // pred_region
    _
  $region5: #{unet_dap_forward.14} parent=0 // pred_fallthru
    _
  %v8 = vld [vmem:[%s0] sm:$0xff]
  %vm9 = vcmask 523264
  %v10 = vsel %vm9, %v8, -inf
  %v11 = vrot.slane %v10, 4
  %v12 = vmax.f32 %v10, %v11
  %v13 = vrot.slane %v12, 2
  %v14 = vmax.f32 %v12, %v13
  %v15 = vrot.slane %v14, 1
  %v16 = vmax.f32 %v14, %v15
  %vm17 = vcmask 516096
  %18 = vst.msk [vmem:[%s1] sm:$0x1] %vm17, %v16
  // Predicated region
  $region6: #{unet_dap_forward.14} parent=0 // pred_check
    _
  $region7: #{unet_dap_forward.14} parent=0 // pred_check_branch
    %20 = sbr.rel (0) target = $region9
  $region8: #{unet_dap_forward.14} parent=0 // pred_region
    _
  $region9: #{unet_dap_forward.14} parent=0 // pred_fallthru
    _
  // Predicated region
  $region10: #{unet_dap_forward.14} parent=0 // pred_check
    _
  $region11: #{unet_dap_forward.14} parent=0 // pred_check_branch
    %22 = sbr.rel (0) target = $region13
  $region12: #{unet_dap_forward.14} parent=0 // pred_region
    _
  $region13: #{unet_dap_forward.14} parent=0 // pred_fallthru
    _

// kernel: unet_dap_forward.15
$region0: #{unet_dap_forward.15}
  #allocation0 [shape = 'u32[]', space=smem, size = 0x4, offset = 0x4, fixed_abs, tag = 'smem constant byte address 0x4 - core index']
  #allocation1 [shape = 'u32[144,128]{1,0:T(1,128)}', space=vmem, size = 0x12000, scoped, tag = 'internal scratch']
  #allocation2 [shape = 'f32[16,4]{1,0:T(8,128)}', space=vmem, size = 0x2000, scoped, tag = 'scratch operand']
  %s0 = inlined_call_operand.vmem [shape: bf16[1,4,72,4], index: 0, kind: input, shape index: {}]
  %s1 = inlined_call_operand.vmem [shape: bf16[3,16,72], index: 1, kind: input, shape index: {}]
  %s2 = inlined_call_operand.vmem [shape: f32[16,1], index: 2, kind: input, shape index: {}]
  %s3 = inlined_call_operand.vmem [shape: f32[16,1], index: 3, kind: input, shape index: {}]
  %s4 = inlined_call_operand.vmem [shape: f32[1,2,16,4], index: 4, kind: output, shape index: {}]
  %s5 = sld [smem:[#allocation0]]
  $region57: #{unet_dap_forward.15} parent=0
    _
  %s7 = ssub.s32 1, %s5
  %s8 = scalar_select 0, %s7, %s5
  loop: start=0, step=1, limit=8
  $region2: #{unet_dap_forward.15} parent=0 // loop_pre_header
    _
  $region3: #{unet_dap_forward.15} parent=0 // loop_header
    %s10 = sphi 0, %s14
    %p11 = scmp.ge.s32.totalorder %s10, 8
    %s17 = sphi 0, %s43
    %s18 = sphi 0, %s39
    %s19 = sphi 0, %s35
    %s20 = sphi 0, %s31
    %s21 = sphi 0, %s17
    %s22 = sphi 0, %s18
    %s23 = sphi 0, %s19
    %s24 = sphi 0, %s20
    %s25 = sphi 0, %s21
    %s26 = sphi 0, %s22
    %s27 = sphi 0, %s23
    %s28 = sphi 0, %s24
    %s52 = sphi 0, %s54
    %s55 = sphi 0, %s52
    %s56 = sphi 0, %s55
    %s72 = sphi 0, %s56
    %s76 = sphi 0, %s76
    %s78 = sphi 0, %s76
    %s79 = sphi 0, %s78
    %s93 = sphi 0, %s79
    %s97 = sphi 0, %s97
    %s99 = sphi 0, %s97
    %s100 = sphi 0, %s99
    %s114 = sphi 0, %s100
    %s118 = sphi 0, %s118
    %s120 = sphi 0, %s118
    %s121 = sphi 0, %s120
    %s135 = sphi 0, %s121
    %s145 = sphi 0, %s147
    %s148 = sphi 0, %s145
    %s149 = sphi 0, %s148
    %s165 = sphi 0, %s149
  $region4: #{unet_dap_forward.15} parent=0 // loop_header_branch
    %13 = sbr.rel (%p11) target = $region8
  $region5: #{unet_dap_forward.15} parent=0 // loop_body
    %s15 = ssub.s32 %s10, 1
    %s16 = ssub.s32 %s10, 2
    %s29 = sadd.s32 1, %s20
    %p30 = scmp.ge.s32.totalorder %s29, 3
    %s31 = scalar_select %p30, 0, %s29
    %s32 = sadd.s32 1, %s19
    %s33 = scalar_select %p30, %s32, %s19
    %p34 = scmp.ge.s32.totalorder %s33, 1
    %s35 = scalar_select %p34, 0, %s33
    %s36 = sadd.s32 1, %s18
    %s37 = scalar_select %p34, %s36, %s18
    %p38 = scmp.ge.s32.totalorder %s37, 2
    %s39 = scalar_select %p38, 0, %s37
    %s40 = sadd.s32 1, %s17
    %s41 = scalar_select %p38, %s40, %s17
    %p42 = scmp.ge.s32.totalorder %s41, 1
    %s43 = scalar_select %p42, 0, %s41
    %s44 = sadd.s32 %s18, %s20
    %s45 = sadd.s32 %s39, %s31
    %s46 = ssub.s32 %s17, %s43
    %s47 = ssub.s32 %s44, %s45
    %s48 = sor.u32 %s46, %s47
    %s49 = ssub.s32 %s19, %s35
    %s50 = sor.u32 %s48, %s49
    %p51 = scmp.eq.s32.totalorder %s50, 0
    %s53 = sadd.s32 %s52, 1
    %s54 = scalar_select %p51, %s52, %s53
    %p57 = pneg %p51
    %p58 = scmp.eq.s32.totalorder %s10, 5
    %p59 = por %p57, %p58
    %p60 = scmp.ne.s32.totalorder %s52, %s55
    %p61 = scmp.eq.s32.totalorder %s10, 0
    %p62 = por %p60, %p61
    %p63 = scmp.ne.s32.totalorder %s52, %s55
    %p64 = scmp.eq.s32.totalorder %s15, 5
    %p65 = por %p63, %p64
    %p66 = scmp.ne.s32.totalorder %s55, %s56
    %p67 = scmp.eq.s32.totalorder %s15, 0
    %p68 = por %p66, %p67
    %p69 = scmp.ne.s32.totalorder %s55, %s56
    %p70 = scmp.eq.s32.totalorder %s16, 5
    %p71 = por %p69, %p70
    %p73 = scmp.ne.s32.totalorder %s56, %s72
    %p74 = scmp.eq.s32.totalorder %s16, 0
    %p75 = por %p73, %p74
    %s77 = sadd.s32 %s76, 1
    %p80 = scmp.eq.s32.totalorder %s10, 5
    %p81 = scmp.ne.s32.totalorder %s76, %s78
    %p82 = scmp.eq.s32.totalorder %s10, 0
    %p83 = por %p81, %p82
    %p84 = scmp.ne.s32.totalorder %s76, %s78
    %p85 = scmp.eq.s32.totalorder %s15, 5
    %p86 = por %p84, %p85
    %p87 = scmp.ne.s32.totalorder %s78, %s79
    %p88 = scmp.eq.s32.totalorder %s15, 0
    %p89 = por %p87, %p88
    %p90 = scmp.ne.s32.totalorder %s78, %s79
    %p91 = scmp.eq.s32.totalorder %s16, 5
    %p92 = por %p90, %p91
    %p94 = scmp.ne.s32.totalorder %s79, %s93
    %p95 = scmp.eq.s32.totalorder %s16, 0
    %p96 = por %p94, %p95
    %s98 = sadd.s32 %s97, 1
    %p101 = scmp.eq.s32.totalorder %s10, 5
    %p102 = scmp.ne.s32.totalorder %s97, %s99
    %p103 = scmp.eq.s32.totalorder %s10, 0
    %p104 = por %p102, %p103
    %p105 = scmp.ne.s32.totalorder %s97, %s99
    %p106 = scmp.eq.s32.totalorder %s15, 5
    %p107 = por %p105, %p106
    %p108 = scmp.ne.s32.totalorder %s99, %s100
    %p109 = scmp.eq.s32.totalorder %s15, 0
    %p110 = por %p108, %p109
    %p111 = scmp.ne.s32.totalorder %s99, %s100
    %p112 = scmp.eq.s32.totalorder %s16, 5
    %p113 = por %p111, %p112
    %p115 = scmp.ne.s32.totalorder %s100, %s114
    %p116 = scmp.eq.s32.totalorder %s16, 0
    %p117 = por %p115, %p116
    %s119 = sadd.s32 %s118, 1
    %p122 = scmp.eq.s32.totalorder %s10, 5
    %p123 = scmp.ne.s32.totalorder %s118, %s120
    %p124 = scmp.eq.s32.totalorder %s10, 0
    %p125 = por %p123, %p124
    %p126 = scmp.ne.s32.totalorder %s118, %s120
    %p127 = scmp.eq.s32.totalorder %s15, 5
    %p128 = por %p126, %p127
    %p129 = scmp.ne.s32.totalorder %s120, %s121
    %p130 = scmp.eq.s32.totalorder %s15, 0
    %p131 = por %p129, %p130
    %p132 = scmp.ne.s32.totalorder %s120, %s121
    %p133 = scmp.eq.s32.totalorder %s16, 5
    %p134 = por %p132, %p133
    %p136 = scmp.ne.s32.totalorder %s121, %s135
    %p137 = scmp.eq.s32.totalorder %s16, 0
    %p138 = por %p136, %p137
    %s139 = ssub.s32 %s17, %s43
    %s140 = ssub.s32 %s18, %s39
    %s141 = sor.u32 %s139, %s140
    %s142 = ssub.s32 %s19, %s35
    %s143 = sor.u32 %s141, %s142
    %p144 = scmp.eq.s32.totalorder %s143, 0
    %s146 = sadd.s32 %s145, 1
    %s147 = scalar_select %p144, %s145, %s146
    %p150 = pneg %p144
    %p151 = scmp.eq.s32.totalorder %s10, 5
    %p152 = por %p150, %p151
    %p153 = scmp.ne.s32.totalorder %s145, %s148
    %p154 = scmp.eq.s32.totalorder %s10, 0
    %p155 = por %p153, %p154
    %p156 = scmp.ne.s32.totalorder %s145, %s148
    %p157 = scmp.eq.s32.totalorder %s15, 5
    %p158 = por %p156, %p157
    %p159 = scmp.ne.s32.totalorder %s148, %s149
    %p160 = scmp.eq.s32.totalorder %s15, 0
    %p161 = por %p159, %p160
    %p162 = scmp.ne.s32.totalorder %s148, %s149
    %p163 = scmp.eq.s32.totalorder %s16, 5
    %p164 = por %p162, %p163
    %p166 = scmp.ne.s32.totalorder %s149, %s165
    %p167 = scmp.eq.s32.totalorder %s16, 0
    %p168 = por %p166, %p167
    %p169 = scmp.le.s32.totalorder 1, %s10
    %p170 = scmp.lt.s32.totalorder %s10, 7
    %p171 = pnand %p169, %p170
    %p172 = pneg %p171
    // Predicated region
    $region9: #{unet_dap_forward.15} parent=5 // pred_check
      _
    $region10: #{unet_dap_forward.15} parent=5 // pred_check_branch
      %174 = sbr.rel (%p171) target = $region12
    $region11: #{unet_dap_forward.15} parent=5 // pred_region
      %s175 = ssub.s32 %s10, 1
      // Predicated region
      $region13: #{unet_dap_forward.15} parent=11 // pred_check
        %p176 = pneg %p89
      $region14: #{unet_dap_forward.15} parent=11 // pred_check_branch
        %178 = sbr.rel (%p176) target = $region16
      $region15: #{unet_dap_forward.15} parent=11 // pred_region
        _
      $region16: #{unet_dap_forward.15} parent=11 // pred_fallthru
        _
      // Predicated region
      $region17: #{unet_dap_forward.15} parent=11 // pred_check
        %p179 = pneg %p110
      $region18: #{unet_dap_forward.15} parent=11 // pred_check_branch
        %181 = sbr.rel (%p179) target = $region20
      $region19: #{unet_dap_forward.15} parent=11 // pred_region
        _
      $region20: #{unet_dap_forward.15} parent=11 // pred_fallthru
        _
      // Predicated region
      $region21: #{unet_dap_forward.15} parent=11 // pred_check
        %p182 = pneg %p131
      $region22: #{unet_dap_forward.15} parent=11 // pred_check_branch
        %184 = sbr.rel (%p182) target = $region24
      $region23: #{unet_dap_forward.15} parent=11 // pred_region
        _
      $region24: #{unet_dap_forward.15} parent=11 // pred_fallthru
        _
    $region12: #{unet_dap_forward.15} parent=5 // pred_fallthru
      _
    %p185 = scmp.lt.s32.totalorder %s10, 6
    // Predicated region
    $region25: #{unet_dap_forward.15} parent=5 // pred_check
      %p186 = pneg %p185
    $region26: #{unet_dap_forward.15} parent=5 // pred_check_branch
      %188 = sbr.rel (%p186) target = $region28
    $region27: #{unet_dap_forward.15} parent=5 // pred_region
      // Predicated region
      $region29: #{unet_dap_forward.15} parent=27 // pred_check
        %p189 = pneg %p62
      $region30: #{unet_dap_forward.15} parent=27 // pred_check_branch
        %191 = sbr.rel (%p189) target = $region32
      $region31: #{unet_dap_forward.15} parent=27 // pred_region
        %s192 = sadd.s32 %s18, %s20
        %p193 = scmp.lt.s32.totalorder %s17, 0
        %s194 = scalar_select %p193, %s17, 0
        %p195 = scmp.lt.s32.totalorder %s192, 3
        %s196 = scalar_select %p195, %s192, 3
        %p197 = scmp.lt.s32.totalorder %s19, 0
        %s198 = scalar_select %p197, %s19, 0
        %s199 = smul.addr %s196, 9
        %s200 = sadd.s32 %s198, %s199
        %s201 = smul.addr %s194, 36
        %s202 = sadd.s32 %s200, %s201
        %s203 = smul.addr %s202, 4
        %s204 = scalar_lea.vmem %s0, %s203
        %s205 = sadd.s32 %s18, %s20
      $region32: #{unet_dap_forward.15} parent=27 // pred_fallthru
        _
    $region28: #{unet_dap_forward.15} parent=5 // pred_fallthru
      _
    %p206 = scmp.le.s32.totalorder 1, %s10
    %p207 = scmp.lt.s32.totalorder %s10, 7
    %p208 = pnand %p206, %p207
    %p209 = pneg %p208
    // Predicated region
    $region33: #{unet_dap_forward.15} parent=5 // pred_check
      _
    $region34: #{unet_dap_forward.15} parent=5 // pred_check_branch
      %211 = sbr.rel (%p208) target = $region36
    $region35: #{unet_dap_forward.15} parent=5 // pred_region
      %s212 = ssub.s32 %s10, 1
      %s213 = sadd.s32 %s22, %s24
      %p214 = scmp.lt.s32.totalorder %s21, 0
      %s215 = scalar_select %p214, %s21, 0
      %p216 = scmp.lt.s32.totalorder %s213, 3
      %s217 = scalar_select %p216, %s213, 3
      %p218 = scmp.lt.s32.totalorder %s23, 0
      %s219 = scalar_select %p218, %s23, 0
      %s220 = smul.addr %s217, 9
      %s221 = sadd.s32 %s219, %s220
      %s222 = smul.addr %s215, 36
      %s223 = sadd.s32 %s221, %s222
      %s224 = smul.addr %s223, 4
      %s225 = scalar_lea.vmem %s0, %s224
      %p226 = pneg %p68
      %p227 = pneg %p65
      %p228 = pneg %p89
      %p229 = pneg %p86
      %p230 = pneg %p110
      %p231 = pneg %p107
      %p232 = pneg %p131
      %p233 = pneg %p128
      %p234 = pneg %p161
      %p235 = pneg %p158
      %p236 = scmp.lt.s32.totalorder %s21, 0
      %s237 = scalar_select %p236, %s21, 0
      %p238 = scmp.lt.s32.totalorder %s22, 1
      %s239 = scalar_select %p238, %s22, 1
      %p240 = scmp.lt.s32.totalorder %s23, 0
      %s241 = scalar_select %p240, %s23, 0
      %s242 = smul.addr %s239, 2
      %s243 = sadd.s32 %s241, %s242
      %s244 = smul.addr %s237, 4
      %s245 = sadd.s32 %s243, %s244
      %s246 = smul.addr %s245, 8
      %s247 = scalar_lea.vmem %s4, %s246
      %s248 = sadd.s32 %s22, %s24
      %p249 = scmp.lt.s32.totalorder %s21, 0
      %s250 = scalar_select %p249, %s21, 0
      %p251 = scmp.lt.s32.totalorder %s248, 3
      %s252 = scalar_select %p251, %s248, 3
      %p253 = scmp.lt.s32.totalorder %s23, 0
      %s254 = scalar_select %p253, %s23, 0
      %s255 = smul.addr %s252, 9
      %s256 = sadd.s32 %s254, %s255
      %s257 = smul.addr %s250, 36
      %s258 = sadd.s32 %s256, %s257
      %s259 = smul.addr %s258, 4
      %s260 = scalar_lea.vmem %s0, %s259
      %s261 = sadd.s32 %s22, %s24
      %p262 = scmp.lt.s32.totalorder %s21, 0
      %s263 = scalar_select %p262, %s21, 0
      %p264 = scmp.lt.s32.totalorder %s22, 1
      %s265 = scalar_select %p264, %s22, 1
      %p266 = scmp.lt.s32.totalorder %s23, 0
      %s267 = scalar_select %p266, %s23, 0
      %s268 = smul.addr %s265, 2
      %s269 = sadd.s32 %s267, %s268
      %s270 = smul.addr %s263, 4
      %s271 = sadd.s32 %s269, %s270
      %s272 = smul.addr %s271, 8
      %s273 = scalar_lea.vmem %s4, %s272
      %p275 = scmp.eq.s32.totalorder %s24, 0
      // Predicated region
      $region37: #{unet_dap_forward.15} parent=35 // pred_check
        %p276 = pneg %p275
      $region38: #{unet_dap_forward.15} parent=35 // pred_check_branch
        %278 = sbr.rel (%p276) target = $region40
      $region39: #{unet_dap_forward.15} parent=35 // pred_region
        %vm279 = vcmask 31744
        %280 = vst.msk [vmem:[#allocation2] sm:$0xff] %vm279, 0.0
        %281 = vst.msk [vmem:[#allocation2 + $0x8] sm:$0xff] %vm279, 0.0
      $region40: #{unet_dap_forward.15} parent=35 // pred_fallthru
        _
      %v282 = vld [vmem:[#allocation2] sm:$0xff]
      %v283 = vld [vmem:[#allocation2 + $0x8] sm:$0xff]
      %s284 = smul.u32 %s24, 2
      %s285 = smul.addr %s284, 4
      %s286 = scalar_lea.vmem %s1, %s285
      %v287 = vld [vmem:[%s286] sm:$0xf]
      %v288 = vld [vmem:[%s286 + $0x4] sm:$0xf]
      %v289 = vld [vmem:[%s260] sm:$0xf]
      %v290 = vld [vmem:[%s260 + $0x4] sm:$0xf]
      %v291 = vld [vmem:[%s260 + $0x8] sm:$0xf]
      %v292 = vld [vmem:[%s260 + $0xc] sm:$0xf]
      %v293 = vld [vmem:[%s260 + $0x10] sm:$0xf]
      %v294 = vld [vmem:[%s260 + $0x14] sm:$0xf]
      %v295 = vld [vmem:[%s260 + $0x18] sm:$0xf]
      %v296 = vld [vmem:[%s260 + $0x1c] sm:$0xf]
      %v297 = vld [vmem:[%s260 + $0x20] sm:$0xf]
      %v300 = vunpack.c.l.b16 %v287
      %v301 = vunpack.c.l.b16 %v288
      %v302 = vpack.c.b16 %v301, %v300
      %v312 = vunpack.c.l.b16 %v289
      %v313 = vunpack.c.l.b16 %v290
      %v314 = vunpack.c.l.b16 %v291
      %v315 = vunpack.c.l.b16 %v292
      %v316 = vunpack.c.l.b16 %v293
      %v317 = vunpack.c.l.b16 %v294
      %v318 = vunpack.c.l.b16 %v295
      %v319 = vunpack.c.l.b16 %v296
      %v320 = vunpack.c.l.b16 %v297
      %v321 = vpack.c.b16 %v313, %v312
      %v322 = vpack.c.b16 %v315, %v314
      %v323 = vpack.c.b16 %v317, %v316
      %v324 = vpack.c.b16 %v319, %v318
      %v325 = vpack.c.b16 %v320, %v320
      %vm330 = vcmask 588800
      %v332 = vsel %vm330, %v302, 0
      %vm334 = vcmask 1043456
      %v336 = vsel %vm334, %v325, 0
      %338 = vmatprep.subr.bf16.mxu0 0
      %339 = vmatpush1.bf16.msra.mxu0 %v321
      %340 = vmatprep.subr.bf16.mxu0 0
      %341 = vmatpush1.bf16.msra.mxu0 %v322
      %342 = vmatprep.subr.bf16.mxu0 0
      %343 = vmatpush1.bf16.msra.mxu0 %v323
      %344 = vmatprep.subr.bf16.mxu0 0
      %345 = vmatpush1.bf16.msra.mxu0 %v324
      %346 = vmatprep.subr.bf16.mxu0 0
      %347 = vmatpush1.bf16.msra.mxu0 %v336
      %348 = vmatprep.subr.bf16.mxu0 0
      %349 = vmatpush1.bf16.msra.mxu0 0
      %350 = vmatprep.subr.bf16.mxu0 0
      %351 = vmatpush1.bf16.msra.mxu0 0
      %352 = vmatprep.subr.bf16.mxu0 0
      %353 = vmatpush1.bf16.msra.mxu0 0
      %354 = vmatprep.subr.bf16.mxu0 0
      %355 = vmatpush1.bf16.msra.mxu0 0
      %356 = vmatprep.subr.bf16.mxu0 0
      %357 = vmatpush1.bf16.msra.mxu0 0
      %358 = vmatprep.subr.bf16.mxu0 0
      %359 = vmatpush1.bf16.msra.mxu0 0
      %360 = vmatprep.subr.bf16.mxu0 0
      %361 = vmatpush1.bf16.msra.mxu0 0
      %362 = vmatprep.subr.bf16.mxu0 0
      %363 = vmatpush1.bf16.msra.mxu0 0
      %364 = vmatprep.subr.bf16.mxu0 0
      %365 = vmatpush1.bf16.msra.mxu0 0
      %366 = vmatprep.subr.bf16.mxu0 0
      %367 = vmatpush1.bf16.msra.mxu0 0
      %368 = vmatprep.subr.bf16.mxu0 0
      %369 = vmatpush1.bf16.msra.mxu0 0
      %370 = vmatprep.mubr.bf16.mxu0 0
      %371 = vmatmul.mubr.bf16.gmra.mrb[0].mxu0 %v332
      %v372 = vpop.f32.mrb[0].mxu0
      %v373 = vadd.f32 0.0, %v372
      %v374 = vpop.f32.mrb[0].mxu0
      %v375 = vpop.f32.mrb[0].mxu0
      %v376 = vadd.f32 0.0, %v375
      %v377 = vpop.f32.mrb[0].mxu0
      %378 = vdwg.mxu0
      %v379 = vadd.f32 %v282, %v373
      %v380 = vadd.f32 %v283, %v376
      %vm381 = vcmask 31744
      %382 = vst.msk [vmem:[#allocation2] sm:$0xff] %vm381, %v379
      %383 = vst.msk [vmem:[#allocation2 + $0x8] sm:$0xff] %vm381, %v380
      %p384 = scmp.eq.s32.totalorder %s24, 2
      // Predicated region
      $region41: #{unet_dap_forward.15} parent=35 // pred_check
        %p385 = pneg %p384
      $region42: #{unet_dap_forward.15} parent=35 // pred_check_branch
        %387 = sbr.rel (%p385) target = $region44
      $region43: #{unet_dap_forward.15} parent=35 // pred_region
        %v388 = vld [vmem:[#allocation2] sm:$0xff]
        %v389 = vld [vmem:[#allocation2 + $0x8] sm:$0xff]
        %v390 = vld [vmem:[%s2] sm:$0xff]
        %v391 = vld [vmem:[%s2 + $0x8] sm:$0xff]
        %393 = vset.pattern.permute.xlu0 0
        %394 = vperm.xlu0 %393, %v390
        %v395 = vpop.permute.xlu0 %394
        %398 = vset.pattern.permute.xlu0 0
        %399 = vperm.xlu0 %398, %v391
        %v400 = vpop.permute.xlu0 %399
        %v402 = vmul.f32 %v388, %v395
        %v403 = vmul.f32 %v389, %v400
        %v404 = vld [vmem:[%s3] sm:$0xff]
        %v405 = vld [vmem:[%s3 + $0x8] sm:$0xff]
        %407 = vset.pattern.permute.xlu0 0
        %408 = vperm.xlu0 %407, %v404
        %v409 = vpop.permute.xlu0 %408
        %412 = vset.pattern.permute.xlu0 0
        %413 = vperm.xlu0 %412, %v405
        %v414 = vpop.permute.xlu0 %413
        %v416 = vadd.f32 %v402, %v409
        %v417 = vadd.f32 %v403, %v414
        %v418 = vmax.f32 %v416, 0.0
        %v419 = vmax.f32 %v417, 0.0
        %420 = vst.msk [vmem:[%s273] sm:$0xff] %vm381, %v418
        %421 = vst.msk [vmem:[%s273 + $0x8] sm:$0xff] %vm381, %v419
      $region44: #{unet_dap_forward.15} parent=35 // pred_fallthru
        _
      %p422 = scmp.lt.s32.totalorder %s21, 0
      %s423 = scalar_select %p422, %s21, 0
      %p424 = scmp.lt.s32.totalorder %s22, 1
      %s425 = scalar_select %p424, %s22, 1
      %p426 = scmp.lt.s32.totalorder %s23, 0
      %s427 = scalar_select %p426, %s23, 0
      %s428 = smul.addr %s425, 2
      %s429 = sadd.s32 %s427, %s428
      %s430 = smul.addr %s423, 4
      %s431 = sadd.s32 %s429, %s430
      %s432 = smul.addr %s431, 8
      %s433 = scalar_lea.vmem %s4, %s432
      // Predicated region
      $region45: #{unet_dap_forward.15} parent=35 // pred_check
        %p434 = pneg %p158
      $region46: #{unet_dap_forward.15} parent=35 // pred_check_branch
        %436 = sbr.rel (%p434) target = $region48
      $region47: #{unet_dap_forward.15} parent=35 // pred_region
        _
      $region48: #{unet_dap_forward.15} parent=35 // pred_fallthru
        _
    $region36: #{unet_dap_forward.15} parent=5 // pred_fallthru
      _
    %p437 = scmp.le.s32.totalorder 2, %s10
    // Predicated region
    $region49: #{unet_dap_forward.15} parent=5 // pred_check
      %p438 = pneg %p437
    $region50: #{unet_dap_forward.15} parent=5 // pred_check_branch
      %440 = sbr.rel (%p438) target = $region52
    $region51: #{unet_dap_forward.15} parent=5 // pred_region
      %s441 = ssub.s32 %s10, 2
      // Predicated region
      $region53: #{unet_dap_forward.15} parent=51 // pred_check
        %p442 = pneg %p164
      $region54: #{unet_dap_forward.15} parent=51 // pred_check_branch
        %444 = sbr.rel (%p442) target = $region56
      $region55: #{unet_dap_forward.15} parent=51 // pred_region
        %p445 = scmp.lt.s32.totalorder %s25, 0
        %s446 = scalar_select %p445, %s25, 0
        %p447 = scmp.lt.s32.totalorder %s26, 1
        %s448 = scalar_select %p447, %s26, 1
        %p449 = scmp.lt.s32.totalorder %s27, 0
        %s450 = scalar_select %p449, %s27, 0
        %s451 = smul.addr %s448, 2
        %s452 = sadd.s32 %s450, %s451
        %s453 = smul.addr %s446, 4
        %s454 = sadd.s32 %s452, %s453
        %s455 = smul.addr %s454, 8
        %s456 = scalar_lea.vmem %s4, %s455
      $region56: #{unet_dap_forward.15} parent=51 // pred_fallthru
        _
    $region52: #{unet_dap_forward.15} parent=5 // pred_fallthru
      _
  $region6: #{unet_dap_forward.15} parent=0 // loop_footer
    %s14 = sadd.s32 1, %s10
  $region7: #{unet_dap_forward.15} parent=0 // loop_footer_branch
    %9 = sbr.rel target = $region3
  $region8: #{unet_dap_forward.15} parent=0 // loop_exit
    _

// kernel: unet_dap_forward.16
$region0: #{unet_dap_forward.16}
  #allocation0 [shape = 'u32[]', space=smem, size = 0x4, offset = 0x4, fixed_abs, tag = 'smem constant byte address 0x4 - core index']
  #allocation1 [shape = 'u32[144,128]{1,0:T(1,128)}', space=vmem, size = 0x12000, scoped, tag = 'internal scratch']
  #allocation2 [shape = 'f32[16,4]{1,0:T(8,128)}', space=vmem, size = 0x2000, scoped, tag = 'scratch operand']
  %s0 = inlined_call_operand.vmem [shape: bf16[1,4,144,4], index: 0, kind: input, shape index: {}]
  %s1 = inlined_call_operand.vmem [shape: bf16[3,16,144], index: 1, kind: input, shape index: {}]
  %s2 = inlined_call_operand.vmem [shape: f32[16,1], index: 2, kind: input, shape index: {}]
  %s3 = inlined_call_operand.vmem [shape: f32[16,1], index: 3, kind: input, shape index: {}]
  %s4 = inlined_call_operand.vmem [shape: f32[1,2,16,4], index: 4, kind: output, shape index: {}]
  %s5 = sld [smem:[#allocation0]]
  $region57: #{unet_dap_forward.16} parent=0
    _
  %s7 = ssub.s32 1, %s5
  %s8 = scalar_select 0, %s7, %s5
  loop: start=0, step=1, limit=8
  $region2: #{unet_dap_forward.16} parent=0 // loop_pre_header
    _
  $region3: #{unet_dap_forward.16} parent=0 // loop_header
    %s10 = sphi 0, %s14
    %p11 = scmp.ge.s32.totalorder %s10, 8
    %s17 = sphi 0, %s43
    %s18 = sphi 0, %s39
    %s19 = sphi 0, %s35
    %s20 = sphi 0, %s31
    %s21 = sphi 0, %s17
    %s22 = sphi 0, %s18
    %s23 = sphi 0, %s19
    %s24 = sphi 0, %s20
    %s25 = sphi 0, %s21
    %s26 = sphi 0, %s22
    %s27 = sphi 0, %s23
    %s28 = sphi 0, %s24
    %s52 = sphi 0, %s54
    %s55 = sphi 0, %s52
    %s56 = sphi 0, %s55
    %s72 = sphi 0, %s56
    %s76 = sphi 0, %s76
    %s78 = sphi 0, %s76
    %s79 = sphi 0, %s78
    %s93 = sphi 0, %s79
    %s97 = sphi 0, %s97
    %s99 = sphi 0, %s97
    %s100 = sphi 0, %s99
    %s114 = sphi 0, %s100
    %s118 = sphi 0, %s118
    %s120 = sphi 0, %s118
    %s121 = sphi 0, %s120
    %s135 = sphi 0, %s121
    %s145 = sphi 0, %s147
    %s148 = sphi 0, %s145
    %s149 = sphi 0, %s148
    %s165 = sphi 0, %s149
  $region4: #{unet_dap_forward.16} parent=0 // loop_header_branch
    %13 = sbr.rel (%p11) target = $region8
  $region5: #{unet_dap_forward.16} parent=0 // loop_body
    %s15 = ssub.s32 %s10, 1
    %s16 = ssub.s32 %s10, 2
    %s29 = sadd.s32 1, %s20
    %p30 = scmp.ge.s32.totalorder %s29, 3
    %s31 = scalar_select %p30, 0, %s29
    %s32 = sadd.s32 1, %s19
    %s33 = scalar_select %p30, %s32, %s19
    %p34 = scmp.ge.s32.totalorder %s33, 1
    %s35 = scalar_select %p34, 0, %s33
    %s36 = sadd.s32 1, %s18
    %s37 = scalar_select %p34, %s36, %s18
    %p38 = scmp.ge.s32.totalorder %s37, 2
    %s39 = scalar_select %p38, 0, %s37
    %s40 = sadd.s32 1, %s17
    %s41 = scalar_select %p38, %s40, %s17
    %p42 = scmp.ge.s32.totalorder %s41, 1
    %s43 = scalar_select %p42, 0, %s41
    %s44 = sadd.s32 %s18, %s20
    %s45 = sadd.s32 %s39, %s31
    %s46 = ssub.s32 %s17, %s43
    %s47 = ssub.s32 %s44, %s45
    %s48 = sor.u32 %s46, %s47
    %s49 = ssub.s32 %s19, %s35
    %s50 = sor.u32 %s48, %s49
    %p51 = scmp.eq.s32.totalorder %s50, 0
    %s53 = sadd.s32 %s52, 1
    %s54 = scalar_select %p51, %s52, %s53
    %p57 = pneg %p51
    %p58 = scmp.eq.s32.totalorder %s10, 5
    %p59 = por %p57, %p58
    %p60 = scmp.ne.s32.totalorder %s52, %s55
    %p61 = scmp.eq.s32.totalorder %s10, 0
    %p62 = por %p60, %p61
    %p63 = scmp.ne.s32.totalorder %s52, %s55
    %p64 = scmp.eq.s32.totalorder %s15, 5
    %p65 = por %p63, %p64
    %p66 = scmp.ne.s32.totalorder %s55, %s56
    %p67 = scmp.eq.s32.totalorder %s15, 0
    %p68 = por %p66, %p67
    %p69 = scmp.ne.s32.totalorder %s55, %s56
    %p70 = scmp.eq.s32.totalorder %s16, 5
    %p71 = por %p69, %p70
    %p73 = scmp.ne.s32.totalorder %s56, %s72
    %p74 = scmp.eq.s32.totalorder %s16, 0
    %p75 = por %p73, %p74
    %s77 = sadd.s32 %s76, 1
    %p80 = scmp.eq.s32.totalorder %s10, 5
    %p81 = scmp.ne.s32.totalorder %s76, %s78
    %p82 = scmp.eq.s32.totalorder %s10, 0
    %p83 = por %p81, %p82
    %p84 = scmp.ne.s32.totalorder %s76, %s78
    %p85 = scmp.eq.s32.totalorder %s15, 5
    %p86 = por %p84, %p85
    %p87 = scmp.ne.s32.totalorder %s78, %s79
    %p88 = scmp.eq.s32.totalorder %s15, 0
    %p89 = por %p87, %p88
    %p90 = scmp.ne.s32.totalorder %s78, %s79
    %p91 = scmp.eq.s32.totalorder %s16, 5
    %p92 = por %p90, %p91
    %p94 = scmp.ne.s32.totalorder %s79, %s93
    %p95 = scmp.eq.s32.totalorder %s16, 0
    %p96 = por %p94, %p95
    %s98 = sadd.s32 %s97, 1
    %p101 = scmp.eq.s32.totalorder %s10, 5
    %p102 = scmp.ne.s32.totalorder %s97, %s99
    %p103 = scmp.eq.s32.totalorder %s10, 0
    %p104 = por %p102, %p103
    %p105 = scmp.ne.s32.totalorder %s97, %s99
    %p106 = scmp.eq.s32.totalorder %s15, 5
    %p107 = por %p105, %p106
    %p108 = scmp.ne.s32.totalorder %s99, %s100
    %p109 = scmp.eq.s32.totalorder %s15, 0
    %p110 = por %p108, %p109
    %p111 = scmp.ne.s32.totalorder %s99, %s100
    %p112 = scmp.eq.s32.totalorder %s16, 5
    %p113 = por %p111, %p112
    %p115 = scmp.ne.s32.totalorder %s100, %s114
    %p116 = scmp.eq.s32.totalorder %s16, 0
    %p117 = por %p115, %p116
    %s119 = sadd.s32 %s118, 1
    %p122 = scmp.eq.s32.totalorder %s10, 5
    %p123 = scmp.ne.s32.totalorder %s118, %s120
    %p124 = scmp.eq.s32.totalorder %s10, 0
    %p125 = por %p123, %p124
    %p126 = scmp.ne.s32.totalorder %s118, %s120
    %p127 = scmp.eq.s32.totalorder %s15, 5
    %p128 = por %p126, %p127
    %p129 = scmp.ne.s32.totalorder %s120, %s121
    %p130 = scmp.eq.s32.totalorder %s15, 0
    %p131 = por %p129, %p130
    %p132 = scmp.ne.s32.totalorder %s120, %s121
    %p133 = scmp.eq.s32.totalorder %s16, 5
    %p134 = por %p132, %p133
    %p136 = scmp.ne.s32.totalorder %s121, %s135
    %p137 = scmp.eq.s32.totalorder %s16, 0
    %p138 = por %p136, %p137
    %s139 = ssub.s32 %s17, %s43
    %s140 = ssub.s32 %s18, %s39
    %s141 = sor.u32 %s139, %s140
    %s142 = ssub.s32 %s19, %s35
    %s143 = sor.u32 %s141, %s142
    %p144 = scmp.eq.s32.totalorder %s143, 0
    %s146 = sadd.s32 %s145, 1
    %s147 = scalar_select %p144, %s145, %s146
    %p150 = pneg %p144
    %p151 = scmp.eq.s32.totalorder %s10, 5
    %p152 = por %p150, %p151
    %p153 = scmp.ne.s32.totalorder %s145, %s148
    %p154 = scmp.eq.s32.totalorder %s10, 0
    %p155 = por %p153, %p154
    %p156 = scmp.ne.s32.totalorder %s145, %s148
    %p157 = scmp.eq.s32.totalorder %s15, 5
    %p158 = por %p156, %p157
    %p159 = scmp.ne.s32.totalorder %s148, %s149
    %p160 = scmp.eq.s32.totalorder %s15, 0
    %p161 = por %p159, %p160
    %p162 = scmp.ne.s32.totalorder %s148, %s149
    %p163 = scmp.eq.s32.totalorder %s16, 5
    %p164 = por %p162, %p163
    %p166 = scmp.ne.s32.totalorder %s149, %s165
    %p167 = scmp.eq.s32.totalorder %s16, 0
    %p168 = por %p166, %p167
    %p169 = scmp.le.s32.totalorder 1, %s10
    %p170 = scmp.lt.s32.totalorder %s10, 7
    %p171 = pnand %p169, %p170
    %p172 = pneg %p171
    // Predicated region
    $region9: #{unet_dap_forward.16} parent=5 // pred_check
      _
    $region10: #{unet_dap_forward.16} parent=5 // pred_check_branch
      %174 = sbr.rel (%p171) target = $region12
    $region11: #{unet_dap_forward.16} parent=5 // pred_region
      %s175 = ssub.s32 %s10, 1
      // Predicated region
      $region13: #{unet_dap_forward.16} parent=11 // pred_check
        %p176 = pneg %p89
      $region14: #{unet_dap_forward.16} parent=11 // pred_check_branch
        %178 = sbr.rel (%p176) target = $region16
      $region15: #{unet_dap_forward.16} parent=11 // pred_region
        _
      $region16: #{unet_dap_forward.16} parent=11 // pred_fallthru
        _
      // Predicated region
      $region17: #{unet_dap_forward.16} parent=11 // pred_check
        %p179 = pneg %p110
      $region18: #{unet_dap_forward.16} parent=11 // pred_check_branch
        %181 = sbr.rel (%p179) target = $region20
      $region19: #{unet_dap_forward.16} parent=11 // pred_region
        _
      $region20: #{unet_dap_forward.16} parent=11 // pred_fallthru
        _
      // Predicated region
      $region21: #{unet_dap_forward.16} parent=11 // pred_check
        %p182 = pneg %p131
      $region22: #{unet_dap_forward.16} parent=11 // pred_check_branch
        %184 = sbr.rel (%p182) target = $region24
      $region23: #{unet_dap_forward.16} parent=11 // pred_region
        _
      $region24: #{unet_dap_forward.16} parent=11 // pred_fallthru
        _
    $region12: #{unet_dap_forward.16} parent=5 // pred_fallthru
      _
    %p185 = scmp.lt.s32.totalorder %s10, 6
    // Predicated region
    $region25: #{unet_dap_forward.16} parent=5 // pred_check
      %p186 = pneg %p185
    $region26: #{unet_dap_forward.16} parent=5 // pred_check_branch
      %188 = sbr.rel (%p186) target = $region28
    $region27: #{unet_dap_forward.16} parent=5 // pred_region
      // Predicated region
      $region29: #{unet_dap_forward.16} parent=27 // pred_check
        %p189 = pneg %p62
      $region30: #{unet_dap_forward.16} parent=27 // pred_check_branch
        %191 = sbr.rel (%p189) target = $region32
      $region31: #{unet_dap_forward.16} parent=27 // pred_region
        %s192 = sadd.s32 %s18, %s20
        %p193 = scmp.lt.s32.totalorder %s17, 0
        %s194 = scalar_select %p193, %s17, 0
        %p195 = scmp.lt.s32.totalorder %s192, 3
        %s196 = scalar_select %p195, %s192, 3
        %p197 = scmp.lt.s32.totalorder %s19, 0
        %s198 = scalar_select %p197, %s19, 0
        %s199 = smul.addr %s196, 18
        %s200 = sadd.s32 %s198, %s199
        %s201 = smul.addr %s194, 72
        %s202 = sadd.s32 %s200, %s201
        %s203 = smul.addr %s202, 4
        %s204 = scalar_lea.vmem %s0, %s203
        %s205 = sadd.s32 %s18, %s20
      $region32: #{unet_dap_forward.16} parent=27 // pred_fallthru
        _
    $region28: #{unet_dap_forward.16} parent=5 // pred_fallthru
      _
    %p206 = scmp.le.s32.totalorder 1, %s10
    %p207 = scmp.lt.s32.totalorder %s10, 7
    %p208 = pnand %p206, %p207
    %p209 = pneg %p208
    // Predicated region
    $region33: #{unet_dap_forward.16} parent=5 // pred_check
      _
    $region34: #{unet_dap_forward.16} parent=5 // pred_check_branch
      %211 = sbr.rel (%p208) target = $region36
    $region35: #{unet_dap_forward.16} parent=5 // pred_region
      %s212 = ssub.s32 %s10, 1
      %s213 = sadd.s32 %s22, %s24
      %p214 = scmp.lt.s32.totalorder %s21, 0
      %s215 = scalar_select %p214, %s21, 0
      %p216 = scmp.lt.s32.totalorder %s213, 3
      %s217 = scalar_select %p216, %s213, 3
      %p218 = scmp.lt.s32.totalorder %s23, 0
      %s219 = scalar_select %p218, %s23, 0
      %s220 = smul.addr %s217, 18
      %s221 = sadd.s32 %s219, %s220
      %s222 = smul.addr %s215, 72
      %s223 = sadd.s32 %s221, %s222
      %s224 = smul.addr %s223, 4
      %s225 = scalar_lea.vmem %s0, %s224
      %p226 = pneg %p68
      %p227 = pneg %p65
      %p228 = pneg %p89
      %p229 = pneg %p86
      %p230 = pneg %p110
      %p231 = pneg %p107
      %p232 = pneg %p131
      %p233 = pneg %p128
      %p234 = pneg %p161
      %p235 = pneg %p158
      %p236 = scmp.lt.s32.totalorder %s21, 0
      %s237 = scalar_select %p236, %s21, 0
      %p238 = scmp.lt.s32.totalorder %s22, 1
      %s239 = scalar_select %p238, %s22, 1
      %p240 = scmp.lt.s32.totalorder %s23, 0
      %s241 = scalar_select %p240, %s23, 0
      %s242 = smul.addr %s239, 2
      %s243 = sadd.s32 %s241, %s242
      %s244 = smul.addr %s237, 4
      %s245 = sadd.s32 %s243, %s244
      %s246 = smul.addr %s245, 8
      %s247 = scalar_lea.vmem %s4, %s246
      %s248 = sadd.s32 %s22, %s24
      %p249 = scmp.lt.s32.totalorder %s21, 0
      %s250 = scalar_select %p249, %s21, 0
      %p251 = scmp.lt.s32.totalorder %s248, 3
      %s252 = scalar_select %p251, %s248, 3
      %p253 = scmp.lt.s32.totalorder %s23, 0
      %s254 = scalar_select %p253, %s23, 0
      %s255 = smul.addr %s252, 18
      %s256 = sadd.s32 %s254, %s255
      %s257 = smul.addr %s250, 72
      %s258 = sadd.s32 %s256, %s257
      %s259 = smul.addr %s258, 4
      %s260 = scalar_lea.vmem %s0, %s259
      %s261 = sadd.s32 %s22, %s24
      %p262 = scmp.lt.s32.totalorder %s21, 0
      %s263 = scalar_select %p262, %s21, 0
      %p264 = scmp.lt.s32.totalorder %s22, 1
      %s265 = scalar_select %p264, %s22, 1
      %p266 = scmp.lt.s32.totalorder %s23, 0
      %s267 = scalar_select %p266, %s23, 0
      %s268 = smul.addr %s265, 2
      %s269 = sadd.s32 %s267, %s268
      %s270 = smul.addr %s263, 4
      %s271 = sadd.s32 %s269, %s270
      %s272 = smul.addr %s271, 8
      %s273 = scalar_lea.vmem %s4, %s272
      %p275 = scmp.eq.s32.totalorder %s24, 0
      // Predicated region
      $region37: #{unet_dap_forward.16} parent=35 // pred_check
        %p276 = pneg %p275
      $region38: #{unet_dap_forward.16} parent=35 // pred_check_branch
        %278 = sbr.rel (%p276) target = $region40
      $region39: #{unet_dap_forward.16} parent=35 // pred_region
        %vm279 = vcmask 31744
        %280 = vst.msk [vmem:[#allocation2] sm:$0xff] %vm279, 0.0
        %281 = vst.msk [vmem:[#allocation2 + $0x8] sm:$0xff] %vm279, 0.0
      $region40: #{unet_dap_forward.16} parent=35 // pred_fallthru
        _
      %v282 = vld [vmem:[#allocation2] sm:$0xff]
      %v283 = vld [vmem:[#allocation2 + $0x8] sm:$0xff]
      %s284 = smul.u32 %s24, 4
      %s285 = smul.addr %s284, 4
      %s286 = scalar_lea.vmem %s1, %s285
      %v287 = vld [vmem:[%s286] sm:$0xff]
      %v288 = vld [vmem:[%s286 + $0x8] sm:$0xff]
      %v289 = vld [vmem:[%s260] sm:$0xf]
      %v290 = vld [vmem:[%s260 + $0x4] sm:$0xf]
      %v291 = vld [vmem:[%s260 + $0x8] sm:$0xf]
      %v292 = vld [vmem:[%s260 + $0xc] sm:$0xf]
      %v293 = vld [vmem:[%s260 + $0x10] sm:$0xf]
      %v294 = vld [vmem:[%s260 + $0x14] sm:$0xf]
      %v295 = vld [vmem:[%s260 + $0x18] sm:$0xf]
      %v296 = vld [vmem:[%s260 + $0x1c] sm:$0xf]
      %v297 = vld [vmem:[%s260 + $0x20] sm:$0xf]
      %v298 = vld [vmem:[%s260 + $0x24] sm:$0xf]
      %v299 = vld [vmem:[%s260 + $0x28] sm:$0xf]
      %v300 = vld [vmem:[%s260 + $0x2c] sm:$0xf]
      %v301 = vld [vmem:[%s260 + $0x30] sm:$0xf]
      %v302 = vld [vmem:[%s260 + $0x34] sm:$0xf]
      %v303 = vld [vmem:[%s260 + $0x38] sm:$0xf]
      %v304 = vld [vmem:[%s260 + $0x3c] sm:$0xf]
      %v305 = vld [vmem:[%s260 + $0x40] sm:$0xf]
      %v306 = vld [vmem:[%s260 + $0x44] sm:$0xf]
      %v309 = vunpack.c.l.b16 %v287
      %v310 = vunpack.c.h.b16 %v287
      %v311 = vunpack.c.l.b16 %v288
      %v312 = vunpack.c.h.b16 %v288
      %v313 = vpack.c.b16 %v311, %v309
      %v314 = vpack.c.b16 %v312, %v310
      %v334 = vunpack.c.l.b16 %v289
      %v335 = vunpack.c.l.b16 %v290
      %v336 = vunpack.c.l.b16 %v291
      %v337 = vunpack.c.l.b16 %v292
      %v338 = vunpack.c.l.b16 %v293
      %v339 = vunpack.c.l.b16 %v294
      %v340 = vunpack.c.l.b16 %v295
      %v341 = vunpack.c.l.b16 %v296
      %v342 = vunpack.c.l.b16 %v297
      %v343 = vunpack.c.l.b16 %v298
      %v344 = vunpack.c.l.b16 %v299
      %v345 = vunpack.c.l.b16 %v300
      %v346 = vunpack.c.l.b16 %v301
      %v347 = vunpack.c.l.b16 %v302
      %v348 = vunpack.c.l.b16 %v303
      %v349 = vunpack.c.l.b16 %v304
      %v350 = vunpack.c.l.b16 %v305
      %v351 = vunpack.c.l.b16 %v306
      %v352 = vpack.c.b16 %v335, %v334
      %v353 = vpack.c.b16 %v337, %v336
      %v354 = vpack.c.b16 %v339, %v338
      %v355 = vpack.c.b16 %v341, %v340
      %v356 = vpack.c.b16 %v343, %v342
      %v357 = vpack.c.b16 %v345, %v344
      %v358 = vpack.c.b16 %v347, %v346
      %v359 = vpack.c.b16 %v349, %v348
      %v360 = vpack.c.b16 %v351, %v350
      %vm370 = vcmask 130048
      %v372 = vsel %vm370, %v314, 0
      %374 = vmatprep.subr.bf16.mxu0 0
      %375 = vmatpush1.bf16.msra.mxu0 %v352
      %376 = vmatprep.subr.bf16.mxu0 0
      %377 = vmatpush1.bf16.msra.mxu0 %v353
      %378 = vmatprep.subr.bf16.mxu0 0
      %379 = vmatpush1.bf16.msra.mxu0 %v354
      %380 = vmatprep.subr.bf16.mxu0 0
      %381 = vmatpush1.bf16.msra.mxu0 %v355
      %382 = vmatprep.subr.bf16.mxu0 0
      %383 = vmatpush1.bf16.msra.mxu0 %v356
      %384 = vmatprep.subr.bf16.mxu0 0
      %385 = vmatpush1.bf16.msra.mxu0 %v357
      %386 = vmatprep.subr.bf16.mxu0 0
      %387 = vmatpush1.bf16.msra.mxu0 %v358
      %388 = vmatprep.subr.bf16.mxu0 0
      %389 = vmatpush1.bf16.msra.mxu0 %v359
      %390 = vmatprep.subr.bf16.mxu0 0
      %391 = vmatpush1.bf16.msra.mxu0 %v360
      %392 = vmatprep.subr.bf16.mxu0 0
      %393 = vmatpush1.bf16.msra.mxu0 0
      %394 = vmatprep.subr.bf16.mxu0 0
      %395 = vmatpush1.bf16.msra.mxu0 0
      %396 = vmatprep.subr.bf16.mxu0 0
      %397 = vmatpush1.bf16.msra.mxu0 0
      %398 = vmatprep.subr.bf16.mxu0 0
      %399 = vmatpush1.bf16.msra.mxu0 0
      %400 = vmatprep.subr.bf16.mxu0 0
      %401 = vmatpush1.bf16.msra.mxu0 0
      %402 = vmatprep.subr.bf16.mxu0 0
      %403 = vmatpush1.bf16.msra.mxu0 0
      %404 = vmatprep.subr.bf16.mxu0 0
      %405 = vmatpush1.bf16.msra.mxu0 0
      %406 = vmatprep.mubr.bf16.mxu0 %v372
      %407 = vmatmul.mubr.bf16.gmra.mrb[0].mxu0 %v313
      %v408 = vpop.f32.mrb[0].mxu0
      %v409 = vadd.f32 0.0, %v408
      %v410 = vpop.f32.mrb[0].mxu0
      %v411 = vpop.f32.mrb[0].mxu0
      %v412 = vadd.f32 0.0, %v411
      %v413 = vpop.f32.mrb[0].mxu0
      %414 = vdwg.mxu0
      %v415 = vadd.f32 %v282, %v409
      %v416 = vadd.f32 %v283, %v412
      %vm417 = vcmask 31744
      %418 = vst.msk [vmem:[#allocation2] sm:$0xff] %vm417, %v415
      %419 = vst.msk [vmem:[#allocation2 + $0x8] sm:$0xff] %vm417, %v416
      %p420 = scmp.eq.s32.totalorder %s24, 2
      // Predicated region
      $region41: #{unet_dap_forward.16} parent=35 // pred_check
        %p421 = pneg %p420
      $region42: #{unet_dap_forward.16} parent=35 // pred_check_branch
        %423 = sbr.rel (%p421) target = $region44
      $region43: #{unet_dap_forward.16} parent=35 // pred_region
        %v424 = vld [vmem:[#allocation2] sm:$0xff]
        %v425 = vld [vmem:[#allocation2 + $0x8] sm:$0xff]
        %v426 = vld [vmem:[%s2] sm:$0xff]
        %v427 = vld [vmem:[%s2 + $0x8] sm:$0xff]
        %429 = vset.pattern.permute.xlu0 0
        %430 = vperm.xlu0 %429, %v426
        %v431 = vpop.permute.xlu0 %430
        %434 = vset.pattern.permute.xlu0 0
        %435 = vperm.xlu0 %434, %v427
        %v436 = vpop.permute.xlu0 %435
        %v438 = vmul.f32 %v424, %v431
        %v439 = vmul.f32 %v425, %v436
        %v440 = vld [vmem:[%s3] sm:$0xff]
        %v441 = vld [vmem:[%s3 + $0x8] sm:$0xff]
        %443 = vset.pattern.permute.xlu0 0
        %444 = vperm.xlu0 %443, %v440
        %v445 = vpop.permute.xlu0 %444
        %448 = vset.pattern.permute.xlu0 0
        %449 = vperm.xlu0 %448, %v441
        %v450 = vpop.permute.xlu0 %449
        %v452 = vadd.f32 %v438, %v445
        %v453 = vadd.f32 %v439, %v450
        %v454 = vmax.f32 %v452, 0.0
        %v455 = vmax.f32 %v453, 0.0
        %456 = vst.msk [vmem:[%s273] sm:$0xff] %vm417, %v454
        %457 = vst.msk [vmem:[%s273 + $0x8] sm:$0xff] %vm417, %v455
      $region44: #{unet_dap_forward.16} parent=35 // pred_fallthru
        _
      %p458 = scmp.lt.s32.totalorder %s21, 0
      %s459 = scalar_select %p458, %s21, 0
      %p460 = scmp.lt.s32.totalorder %s22, 1
      %s461 = scalar_select %p460, %s22, 1
      %p462 = scmp.lt.s32.totalorder %s23, 0
      %s463 = scalar_select %p462, %s23, 0
      %s464 = smul.addr %s461, 2
      %s465 = sadd.s32 %s463, %s464
      %s466 = smul.addr %s459, 4
      %s467 = sadd.s32 %s465, %s466
      %s468 = smul.addr %s467, 8
      %s469 = scalar_lea.vmem %s4, %s468
      // Predicated region
      $region45: #{unet_dap_forward.16} parent=35 // pred_check
        %p470 = pneg %p158
      $region46: #{unet_dap_forward.16} parent=35 // pred_check_branch
        %472 = sbr.rel (%p470) target = $region48
      $region47: #{unet_dap_forward.16} parent=35 // pred_region
        _
      $region48: #{unet_dap_forward.16} parent=35 // pred_fallthru
        _
    $region36: #{unet_dap_forward.16} parent=5 // pred_fallthru
      _
    %p473 = scmp.le.s32.totalorder 2, %s10
    // Predicated region
    $region49: #{unet_dap_forward.16} parent=5 // pred_check
      %p474 = pneg %p473
    $region50: #{unet_dap_forward.16} parent=5 // pred_check_branch
      %476 = sbr.rel (%p474) target = $region52
    $region51: #{unet_dap_forward.16} parent=5 // pred_region
      %s477 = ssub.s32 %s10, 2
      // Predicated region
      $region53: #{unet_dap_forward.16} parent=51 // pred_check
        %p478 = pneg %p164
      $region54: #{unet_dap_forward.16} parent=51 // pred_check_branch
        %480 = sbr.rel (%p478) target = $region56
      $region55: #{unet_dap_forward.16} parent=51 // pred_region
        %p481 = scmp.lt.s32.totalorder %s25, 0
        %s482 = scalar_select %p481, %s25, 0
        %p483 = scmp.lt.s32.totalorder %s26, 1
        %s484 = scalar_select %p483, %s26, 1
        %p485 = scmp.lt.s32.totalorder %s27, 0
        %s486 = scalar_select %p485, %s27, 0
        %s487 = smul.addr %s484, 2
        %s488 = sadd.s32 %s486, %s487
        %s489 = smul.addr %s482, 4
        %s490 = sadd.s32 %s488, %s489
        %s491 = smul.addr %s490, 8
        %s492 = scalar_lea.vmem %s4, %s491
      $region56: #{unet_dap_forward.16} parent=51 // pred_fallthru
        _
    $region52: #{unet_dap_forward.16} parent=5 // pred_fallthru
      _
  $region6: #{unet_dap_forward.16} parent=0 // loop_footer
    %s14 = sadd.s32 1, %s10
  $region7: #{unet_dap_forward.16} parent=0 // loop_footer_branch
    %9 = sbr.rel target = $region3
  $region8: #{unet_dap_forward.16} parent=0 // loop_exit
    _

// kernel: unet_dap_forward.17
$region0: #{unet_dap_forward.17}
  #allocation0 [shape = 'u32[]', space=smem, size = 0x4, offset = 0x4, fixed_abs, tag = 'smem constant byte address 0x4 - core index']
  #allocation1 [shape = 'u32[144,128]{1,0:T(1,128)}', space=vmem, size = 0x12000, scoped, tag = 'internal scratch']
  #allocation2 [shape = 'f32[32,16]{1,0:T(8,128)}', space=vmem, size = 0x4000, scoped, tag = 'scratch operand']
  %s0 = inlined_call_operand.vmem [shape: bf16[1,4,252,16], index: 0, kind: input, shape index: {}]
  %s1 = inlined_call_operand.vmem [shape: bf16[3,32,252], index: 1, kind: input, shape index: {}]
  %s2 = inlined_call_operand.vmem [shape: f32[32,1], index: 2, kind: input, shape index: {}]
  %s3 = inlined_call_operand.vmem [shape: f32[32,1], index: 3, kind: input, shape index: {}]
  %s4 = inlined_call_operand.vmem [shape: f32[1,2,32,16], index: 4, kind: output, shape index: {}]
  %s5 = sld [smem:[#allocation0]]
  $region57: #{unet_dap_forward.17} parent=0
    _
  %s7 = ssub.s32 1, %s5
  %s8 = scalar_select 0, %s7, %s5
  loop: start=0, step=1, limit=8
  $region2: #{unet_dap_forward.17} parent=0 // loop_pre_header
    _
  $region3: #{unet_dap_forward.17} parent=0 // loop_header
    %s10 = sphi 0, %s14
    %p11 = scmp.ge.s32.totalorder %s10, 8
    %s17 = sphi 0, %s43
    %s18 = sphi 0, %s39
    %s19 = sphi 0, %s35
    %s20 = sphi 0, %s31
    %s21 = sphi 0, %s17
    %s22 = sphi 0, %s18
    %s23 = sphi 0, %s19
    %s24 = sphi 0, %s20
    %s25 = sphi 0, %s21
    %s26 = sphi 0, %s22
    %s27 = sphi 0, %s23
    %s28 = sphi 0, %s24
    %s52 = sphi 0, %s54
    %s55 = sphi 0, %s52
    %s56 = sphi 0, %s55
    %s72 = sphi 0, %s56
    %s76 = sphi 0, %s76
    %s78 = sphi 0, %s76
    %s79 = sphi 0, %s78
    %s93 = sphi 0, %s79
    %s97 = sphi 0, %s97
    %s99 = sphi 0, %s97
    %s100 = sphi 0, %s99
    %s114 = sphi 0, %s100
    %s118 = sphi 0, %s118
    %s120 = sphi 0, %s118
    %s121 = sphi 0, %s120
    %s135 = sphi 0, %s121
    %s145 = sphi 0, %s147
    %s148 = sphi 0, %s145
    %s149 = sphi 0, %s148
    %s165 = sphi 0, %s149
  $region4: #{unet_dap_forward.17} parent=0 // loop_header_branch
    %13 = sbr.rel (%p11) target = $region8
  $region5: #{unet_dap_forward.17} parent=0 // loop_body
    %s15 = ssub.s32 %s10, 1
    %s16 = ssub.s32 %s10, 2
    %s29 = sadd.s32 1, %s20
    %p30 = scmp.ge.s32.totalorder %s29, 3
    %s31 = scalar_select %p30, 0, %s29
    %s32 = sadd.s32 1, %s19
    %s33 = scalar_select %p30, %s32, %s19
    %p34 = scmp.ge.s32.totalorder %s33, 1
    %s35 = scalar_select %p34, 0, %s33
    %s36 = sadd.s32 1, %s18
    %s37 = scalar_select %p34, %s36, %s18
    %p38 = scmp.ge.s32.totalorder %s37, 2
    %s39 = scalar_select %p38, 0, %s37
    %s40 = sadd.s32 1, %s17
    %s41 = scalar_select %p38, %s40, %s17
    %p42 = scmp.ge.s32.totalorder %s41, 1
    %s43 = scalar_select %p42, 0, %s41
    %s44 = sadd.s32 %s18, %s20
    %s45 = sadd.s32 %s39, %s31
    %s46 = ssub.s32 %s17, %s43
    %s47 = ssub.s32 %s44, %s45
    %s48 = sor.u32 %s46, %s47
    %s49 = ssub.s32 %s19, %s35
    %s50 = sor.u32 %s48, %s49
    %p51 = scmp.eq.s32.totalorder %s50, 0
    %s53 = sadd.s32 %s52, 1
    %s54 = scalar_select %p51, %s52, %s53
    %p57 = pneg %p51
    %p58 = scmp.eq.s32.totalorder %s10, 5
    %p59 = por %p57, %p58
    %p60 = scmp.ne.s32.totalorder %s52, %s55
    %p61 = scmp.eq.s32.totalorder %s10, 0
    %p62 = por %p60, %p61
    %p63 = scmp.ne.s32.totalorder %s52, %s55
    %p64 = scmp.eq.s32.totalorder %s15, 5
    %p65 = por %p63, %p64
    %p66 = scmp.ne.s32.totalorder %s55, %s56
    %p67 = scmp.eq.s32.totalorder %s15, 0
    %p68 = por %p66, %p67
    %p69 = scmp.ne.s32.totalorder %s55, %s56
    %p70 = scmp.eq.s32.totalorder %s16, 5
    %p71 = por %p69, %p70
    %p73 = scmp.ne.s32.totalorder %s56, %s72
    %p74 = scmp.eq.s32.totalorder %s16, 0
    %p75 = por %p73, %p74
    %s77 = sadd.s32 %s76, 1
    %p80 = scmp.eq.s32.totalorder %s10, 5
    %p81 = scmp.ne.s32.totalorder %s76, %s78
    %p82 = scmp.eq.s32.totalorder %s10, 0
    %p83 = por %p81, %p82
    %p84 = scmp.ne.s32.totalorder %s76, %s78
    %p85 = scmp.eq.s32.totalorder %s15, 5
    %p86 = por %p84, %p85
    %p87 = scmp.ne.s32.totalorder %s78, %s79
    %p88 = scmp.eq.s32.totalorder %s15, 0
    %p89 = por %p87, %p88
    %p90 = scmp.ne.s32.totalorder %s78, %s79
    %p91 = scmp.eq.s32.totalorder %s16, 5
    %p92 = por %p90, %p91
    %p94 = scmp.ne.s32.totalorder %s79, %s93
    %p95 = scmp.eq.s32.totalorder %s16, 0
    %p96 = por %p94, %p95
    %s98 = sadd.s32 %s97, 1
    %p101 = scmp.eq.s32.totalorder %s10, 5
    %p102 = scmp.ne.s32.totalorder %s97, %s99
    %p103 = scmp.eq.s32.totalorder %s10, 0
    %p104 = por %p102, %p103
    %p105 = scmp.ne.s32.totalorder %s97, %s99
    %p106 = scmp.eq.s32.totalorder %s15, 5
    %p107 = por %p105, %p106
    %p108 = scmp.ne.s32.totalorder %s99, %s100
    %p109 = scmp.eq.s32.totalorder %s15, 0
    %p110 = por %p108, %p109
    %p111 = scmp.ne.s32.totalorder %s99, %s100
    %p112 = scmp.eq.s32.totalorder %s16, 5
    %p113 = por %p111, %p112
    %p115 = scmp.ne.s32.totalorder %s100, %s114
    %p116 = scmp.eq.s32.totalorder %s16, 0
    %p117 = por %p115, %p116
    %s119 = sadd.s32 %s118, 1
    %p122 = scmp.eq.s32.totalorder %s10, 5
    %p123 = scmp.ne.s32.totalorder %s118, %s120
    %p124 = scmp.eq.s32.totalorder %s10, 0
    %p125 = por %p123, %p124
    %p126 = scmp.ne.s32.totalorder %s118, %s120
    %p127 = scmp.eq.s32.totalorder %s15, 5
    %p128 = por %p126, %p127
    %p129 = scmp.ne.s32.totalorder %s120, %s121
    %p130 = scmp.eq.s32.totalorder %s15, 0
    %p131 = por %p129, %p130
    %p132 = scmp.ne.s32.totalorder %s120, %s121
    %p133 = scmp.eq.s32.totalorder %s16, 5
    %p134 = por %p132, %p133
    %p136 = scmp.ne.s32.totalorder %s121, %s135
    %p137 = scmp.eq.s32.totalorder %s16, 0
    %p138 = por %p136, %p137
    %s139 = ssub.s32 %s17, %s43
    %s140 = ssub.s32 %s18, %s39
    %s141 = sor.u32 %s139, %s140
    %s142 = ssub.s32 %s19, %s35
    %s143 = sor.u32 %s141, %s142
    %p144 = scmp.eq.s32.totalorder %s143, 0
    %s146 = sadd.s32 %s145, 1
    %s147 = scalar_select %p144, %s145, %s146
    %p150 = pneg %p144
    %p151 = scmp.eq.s32.totalorder %s10, 5
    %p152 = por %p150, %p151
    %p153 = scmp.ne.s32.totalorder %s145, %s148
    %p154 = scmp.eq.s32.totalorder %s10, 0
    %p155 = por %p153, %p154
    %p156 = scmp.ne.s32.totalorder %s145, %s148
    %p157 = scmp.eq.s32.totalorder %s15, 5
    %p158 = por %p156, %p157
    %p159 = scmp.ne.s32.totalorder %s148, %s149
    %p160 = scmp.eq.s32.totalorder %s15, 0
    %p161 = por %p159, %p160
    %p162 = scmp.ne.s32.totalorder %s148, %s149
    %p163 = scmp.eq.s32.totalorder %s16, 5
    %p164 = por %p162, %p163
    %p166 = scmp.ne.s32.totalorder %s149, %s165
    %p167 = scmp.eq.s32.totalorder %s16, 0
    %p168 = por %p166, %p167
    %p169 = scmp.le.s32.totalorder 1, %s10
    %p170 = scmp.lt.s32.totalorder %s10, 7
    %p171 = pnand %p169, %p170
    %p172 = pneg %p171
    // Predicated region
    $region9: #{unet_dap_forward.17} parent=5 // pred_check
      _
    $region10: #{unet_dap_forward.17} parent=5 // pred_check_branch
      %174 = sbr.rel (%p171) target = $region12
    $region11: #{unet_dap_forward.17} parent=5 // pred_region
      %s175 = ssub.s32 %s10, 1
      // Predicated region
      $region13: #{unet_dap_forward.17} parent=11 // pred_check
        %p176 = pneg %p89
      $region14: #{unet_dap_forward.17} parent=11 // pred_check_branch
        %178 = sbr.rel (%p176) target = $region16
      $region15: #{unet_dap_forward.17} parent=11 // pred_region
        _
      $region16: #{unet_dap_forward.17} parent=11 // pred_fallthru
        _
      // Predicated region
      $region17: #{unet_dap_forward.17} parent=11 // pred_check
        %p179 = pneg %p110
      $region18: #{unet_dap_forward.17} parent=11 // pred_check_branch
        %181 = sbr.rel (%p179) target = $region20
      $region19: #{unet_dap_forward.17} parent=11 // pred_region
        _
      $region20: #{unet_dap_forward.17} parent=11 // pred_fallthru
        _
      // Predicated region
      $region21: #{unet_dap_forward.17} parent=11 // pred_check
        %p182 = pneg %p131
      $region22: #{unet_dap_forward.17} parent=11 // pred_check_branch
        %184 = sbr.rel (%p182) target = $region24
      $region23: #{unet_dap_forward.17} parent=11 // pred_region
        _
      $region24: #{unet_dap_forward.17} parent=11 // pred_fallthru
        _
    $region12: #{unet_dap_forward.17} parent=5 // pred_fallthru
      _
    %p185 = scmp.lt.s32.totalorder %s10, 6
    // Predicated region
    $region25: #{unet_dap_forward.17} parent=5 // pred_check
      %p186 = pneg %p185
    $region26: #{unet_dap_forward.17} parent=5 // pred_check_branch
      %188 = sbr.rel (%p186) target = $region28
    $region27: #{unet_dap_forward.17} parent=5 // pred_region
      // Predicated region
      $region29: #{unet_dap_forward.17} parent=27 // pred_check
        %p189 = pneg %p62
      $region30: #{unet_dap_forward.17} parent=27 // pred_check_branch
        %191 = sbr.rel (%p189) target = $region32
      $region31: #{unet_dap_forward.17} parent=27 // pred_region
        %s192 = sadd.s32 %s18, %s20
        %p193 = scmp.lt.s32.totalorder %s17, 0
        %s194 = scalar_select %p193, %s17, 0
        %p195 = scmp.lt.s32.totalorder %s192, 3
        %s196 = scalar_select %p195, %s192, 3
        %p197 = scmp.lt.s32.totalorder %s19, 0
        %s198 = scalar_select %p197, %s19, 0
        %s199 = smul.addr %s196, 32
        %s200 = sadd.s32 %s198, %s199
        %s201 = smul.addr %s194, 128
        %s202 = sadd.s32 %s200, %s201
        %s203 = smul.addr %s202, 4
        %s204 = scalar_lea.vmem %s0, %s203
        %s205 = sadd.s32 %s18, %s20
      $region32: #{unet_dap_forward.17} parent=27 // pred_fallthru
        _
    $region28: #{unet_dap_forward.17} parent=5 // pred_fallthru
      _
    %p206 = scmp.le.s32.totalorder 1, %s10
    %p207 = scmp.lt.s32.totalorder %s10, 7
    %p208 = pnand %p206, %p207
    %p209 = pneg %p208
    // Predicated region
    $region33: #{unet_dap_forward.17} parent=5 // pred_check
      _
    $region34: #{unet_dap_forward.17} parent=5 // pred_check_branch
      %211 = sbr.rel (%p208) target = $region36
    $region35: #{unet_dap_forward.17} parent=5 // pred_region
      %s212 = ssub.s32 %s10, 1
      %s213 = sadd.s32 %s22, %s24
      %p214 = scmp.lt.s32.totalorder %s21, 0
      %s215 = scalar_select %p214, %s21, 0
      %p216 = scmp.lt.s32.totalorder %s213, 3
      %s217 = scalar_select %p216, %s213, 3
      %p218 = scmp.lt.s32.totalorder %s23, 0
      %s219 = scalar_select %p218, %s23, 0
      %s220 = smul.addr %s217, 32
      %s221 = sadd.s32 %s219, %s220
      %s222 = smul.addr %s215, 128
      %s223 = sadd.s32 %s221, %s222
      %s224 = smul.addr %s223, 4
      %s225 = scalar_lea.vmem %s0, %s224
      %p226 = pneg %p68
      %p227 = pneg %p65
      %p228 = pneg %p89
      %p229 = pneg %p86
      %p230 = pneg %p110
      %p231 = pneg %p107
      %p232 = pneg %p131
      %p233 = pneg %p128
      %p234 = pneg %p161
      %p235 = pneg %p158
      %p236 = scmp.lt.s32.totalorder %s21, 0
      %s237 = scalar_select %p236, %s21, 0
      %p238 = scmp.lt.s32.totalorder %s22, 1
      %s239 = scalar_select %p238, %s22, 1
      %p240 = scmp.lt.s32.totalorder %s23, 0
      %s241 = scalar_select %p240, %s23, 0
      %s242 = smul.addr %s239, 4
      %s243 = sadd.s32 %s241, %s242
      %s244 = smul.addr %s237, 8
      %s245 = sadd.s32 %s243, %s244
      %s246 = smul.addr %s245, 8
      %s247 = scalar_lea.vmem %s4, %s246
      %s248 = sadd.s32 %s22, %s24
      %p249 = scmp.lt.s32.totalorder %s21, 0
      %s250 = scalar_select %p249, %s21, 0
      %p251 = scmp.lt.s32.totalorder %s248, 3
      %s252 = scalar_select %p251, %s248, 3
      %p253 = scmp.lt.s32.totalorder %s23, 0
      %s254 = scalar_select %p253, %s23, 0
      %s255 = smul.addr %s252, 32
      %s256 = sadd.s32 %s254, %s255
      %s257 = smul.addr %s250, 128
      %s258 = sadd.s32 %s256, %s257
      %s259 = smul.addr %s258, 4
      %s260 = scalar_lea.vmem %s0, %s259
      %s261 = sadd.s32 %s22, %s24
      %p262 = scmp.lt.s32.totalorder %s21, 0
      %s263 = scalar_select %p262, %s21, 0
      %p264 = scmp.lt.s32.totalorder %s22, 1
      %s265 = scalar_select %p264, %s22, 1
      %p266 = scmp.lt.s32.totalorder %s23, 0
      %s267 = scalar_select %p266, %s23, 0
      %s268 = smul.addr %s265, 4
      %s269 = sadd.s32 %s267, %s268
      %s270 = smul.addr %s263, 8
      %s271 = sadd.s32 %s269, %s270
      %s272 = smul.addr %s271, 8
      %s273 = scalar_lea.vmem %s4, %s272
      %p275 = scmp.eq.s32.totalorder %s24, 0
      // Predicated region
      $region37: #{unet_dap_forward.17} parent=35 // pred_check
        %p276 = pneg %p275
      $region38: #{unet_dap_forward.17} parent=35 // pred_check_branch
        %278 = sbr.rel (%p276) target = $region40
      $region39: #{unet_dap_forward.17} parent=35 // pred_region
        %vm279 = vcmask 130048
        %280 = vst.msk [vmem:[#allocation2] sm:$0xff] %vm279, 0.0
        %281 = vst.msk [vmem:[#allocation2 + $0x8] sm:$0xff] %vm279, 0.0
        %282 = vst.msk [vmem:[#allocation2 + $0x10] sm:$0xff] %vm279, 0.0
        %283 = vst.msk [vmem:[#allocation2 + $0x18] sm:$0xff] %vm279, 0.0
      $region40: #{unet_dap_forward.17} parent=35 // pred_fallthru
        _
      %v284 = vld [vmem:[#allocation2] sm:$0xff]
      %v285 = vld [vmem:[#allocation2 + $0x8] sm:$0xff]
      %v286 = vld [vmem:[#allocation2 + $0x10] sm:$0xff]
      %v287 = vld [vmem:[#allocation2 + $0x18] sm:$0xff]
      %s288 = smul.u32 %s24, 8
      %s289 = smul.addr %s288, 4
      %s290 = scalar_lea.vmem %s1, %s289
      %v291 = vld [vmem:[%s290] sm:$0xff]
      %v292 = vld [vmem:[%s290 + $0x8] sm:$0xff]
      %v293 = vld [vmem:[%s290 + $0x10] sm:$0xff]
      %v294 = vld [vmem:[%s290 + $0x18] sm:$0xff]
      %v295 = vld [vmem:[%s260] sm:$0xf]
      %v296 = vld [vmem:[%s260 + $0x4] sm:$0xf]
      %v297 = vld [vmem:[%s260 + $0x8] sm:$0xf]
      %v298 = vld [vmem:[%s260 + $0xc] sm:$0xf]
      %v299 = vld [vmem:[%s260 + $0x10] sm:$0xf]
      %v300 = vld [vmem:[%s260 + $0x14] sm:$0xf]
      %v301 = vld [vmem:[%s260 + $0x18] sm:$0xf]
      %v302 = vld [vmem:[%s260 + $0x1c] sm:$0xf]
      %v303 = vld [vmem:[%s260 + $0x20] sm:$0xf]
      %v304 = vld [vmem:[%s260 + $0x24] sm:$0xf]
      %v305 = vld [vmem:[%s260 + $0x28] sm:$0xf]
      %v306 = vld [vmem:[%s260 + $0x2c] sm:$0xf]
      %v307 = vld [vmem:[%s260 + $0x30] sm:$0xf]
      %v308 = vld [vmem:[%s260 + $0x34] sm:$0xf]
      %v309 = vld [vmem:[%s260 + $0x38] sm:$0xf]
      %v310 = vld [vmem:[%s260 + $0x3c] sm:$0xf]
      %v311 = vld [vmem:[%s260 + $0x40] sm:$0xf]
      %v312 = vld [vmem:[%s260 + $0x44] sm:$0xf]
      %v313 = vld [vmem:[%s260 + $0x48] sm:$0xf]
      %v314 = vld [vmem:[%s260 + $0x4c] sm:$0xf]
      %v315 = vld [vmem:[%s260 + $0x50] sm:$0xf]
      %v316 = vld [vmem:[%s260 + $0x54] sm:$0xf]
      %v317 = vld [vmem:[%s260 + $0x58] sm:$0xf]
      %v318 = vld [vmem:[%s260 + $0x5c] sm:$0xf]
      %v319 = vld [vmem:[%s260 + $0x60] sm:$0xf]
      %v320 = vld [vmem:[%s260 + $0x64] sm:$0xf]
      %v321 = vld [vmem:[%s260 + $0x68] sm:$0xf]
      %v322 = vld [vmem:[%s260 + $0x6c] sm:$0xf]
      %v323 = vld [vmem:[%s260 + $0x70] sm:$0xf]
      %v324 = vld [vmem:[%s260 + $0x74] sm:$0xf]
      %v325 = vld [vmem:[%s260 + $0x78] sm:$0xf]
      %v326 = vld [vmem:[%s260 + $0x7c] sm:$0x3]
      %v331 = vunpack.c.l.b16 %v291
      %v332 = vunpack.c.h.b16 %v291
      %v333 = vunpack.c.l.b16 %v292
      %v334 = vunpack.c.h.b16 %v292
      %v335 = vunpack.c.l.b16 %v293
      %v336 = vunpack.c.h.b16 %v293
      %v337 = vunpack.c.l.b16 %v294
      %v338 = vunpack.c.h.b16 %v294
      %v339 = vpack.c.b16 %v333, %v331
      %v340 = vpack.c.b16 %v334, %v332
      %v341 = vpack.c.b16 %v337, %v335
      %v342 = vpack.c.b16 %v338, %v336
      %v377 = vunpack.c.l.b16 %v295
      %v378 = vunpack.c.l.b16 %v296
      %v379 = vunpack.c.l.b16 %v297
      %v380 = vunpack.c.l.b16 %v298
      %v381 = vunpack.c.l.b16 %v299
      %v382 = vunpack.c.l.b16 %v300
      %v383 = vunpack.c.l.b16 %v301
      %v384 = vunpack.c.l.b16 %v302
      %v385 = vunpack.c.l.b16 %v303
      %v386 = vunpack.c.l.b16 %v304
      %v387 = vunpack.c.l.b16 %v305
      %v388 = vunpack.c.l.b16 %v306
      %v389 = vunpack.c.l.b16 %v307
      %v390 = vunpack.c.l.b16 %v308
      %v391 = vunpack.c.l.b16 %v309
      %v392 = vunpack.c.l.b16 %v310
      %v393 = vunpack.c.l.b16 %v311
      %v394 = vunpack.c.l.b16 %v312
      %v395 = vunpack.c.l.b16 %v313
      %v396 = vunpack.c.l.b16 %v314
      %v397 = vunpack.c.l.b16 %v315
      %v398 = vunpack.c.l.b16 %v316
      %v399 = vunpack.c.l.b16 %v317
      %v400 = vunpack.c.l.b16 %v318
      %v401 = vunpack.c.l.b16 %v319
      %v402 = vunpack.c.l.b16 %v320
      %v403 = vunpack.c.l.b16 %v321
      %v404 = vunpack.c.l.b16 %v322
      %v405 = vunpack.c.l.b16 %v323
      %v406 = vunpack.c.l.b16 %v324
      %v407 = vunpack.c.l.b16 %v325
      %v408 = vunpack.c.l.b16 %v326
      %v409 = vpack.c.b16 %v378, %v377
      %v410 = vpack.c.b16 %v380, %v379
      %v411 = vpack.c.b16 %v382, %v381
      %v412 = vpack.c.b16 %v384, %v383
      %v413 = vpack.c.b16 %v386, %v385
      %v414 = vpack.c.b16 %v388, %v387
      %v415 = vpack.c.b16 %v390, %v389
      %v416 = vpack.c.b16 %v392, %v391
      %v417 = vpack.c.b16 %v394, %v393
      %v418 = vpack.c.b16 %v396, %v395
      %v419 = vpack.c.b16 %v398, %v397
      %v420 = vpack.c.b16 %v400, %v399
      %v421 = vpack.c.b16 %v402, %v401
      %v422 = vpack.c.b16 %v404, %v403
      %v423 = vpack.c.b16 %v406, %v405
      %v424 = vpack.c.b16 %v408, %v407
      %vm440 = vcmask 1014784
      %v442 = vsel %vm440, %v340, 0
      %v445 = vsel %vm440, %v342, 0
      %vm447 = vcmask 1045504
      %v449 = vsel %vm447, %v424, 0
      %451 = vmatprep.subr.bf16.mxu0 0
      %452 = vmatpush1.bf16.msra.mxu0 %v409
      %453 = vmatprep.subr.bf16.mxu0 0
      %454 = vmatpush1.bf16.msra.mxu0 %v410
      %455 = vmatprep.subr.bf16.mxu0 0
      %456 = vmatpush1.bf16.msra.mxu0 %v411
      %457 = vmatprep.subr.bf16.mxu0 0
      %458 = vmatpush1.bf16.msra.mxu0 %v412
      %459 = vmatprep.subr.bf16.mxu0 0
      %460 = vmatpush1.bf16.msra.mxu0 %v413
      %461 = vmatprep.subr.bf16.mxu0 0
      %462 = vmatpush1.bf16.msra.mxu0 %v414
      %463 = vmatprep.subr.bf16.mxu0 0
      %464 = vmatpush1.bf16.msra.mxu0 %v415
      %465 = vmatprep.subr.bf16.mxu0 0
      %466 = vmatpush1.bf16.msra.mxu0 %v416
      %467 = vmatprep.subr.bf16.mxu0 0
      %468 = vmatpush1.bf16.msra.mxu0 %v417
      %469 = vmatprep.subr.bf16.mxu0 0
      %470 = vmatpush1.bf16.msra.mxu0 %v418
      %471 = vmatprep.subr.bf16.mxu0 0
      %472 = vmatpush1.bf16.msra.mxu0 %v419
      %473 = vmatprep.subr.bf16.mxu0 0
      %474 = vmatpush1.bf16.msra.mxu0 %v420
      %475 = vmatprep.subr.bf16.mxu0 0
      %476 = vmatpush1.bf16.msra.mxu0 %v421
      %477 = vmatprep.subr.bf16.mxu0 0
      %478 = vmatpush1.bf16.msra.mxu0 %v422
      %479 = vmatprep.subr.bf16.mxu0 0
      %480 = vmatpush1.bf16.msra.mxu0 %v423
      %481 = vmatprep.subr.bf16.mxu0 0
      %482 = vmatpush1.bf16.msra.mxu0 %v449
      %483 = vmatprep.mubr.bf16.mxu0 %v442
      %484 = vmatmul.mubr.bf16.gmra.mrb[0].mxu0 %v339
      %v485 = vpop.f32.mrb[0].mxu0
      %v486 = vadd.f32 0.0, %v485
      %v487 = vpop.f32.mrb[0].mxu0
      %v488 = vpop.f32.mrb[0].mxu0
      %v489 = vadd.f32 0.0, %v488
      %v490 = vpop.f32.mrb[0].mxu0
      %491 = vmatprep.mubr.bf16.mxu0 %v445
      %492 = vmatmul.mubr.bf16.gmra.mrb[0].mxu0 %v341
      %v493 = vpop.f32.mrb[0].mxu0
      %v494 = vadd.f32 0.0, %v493
      %v495 = vpop.f32.mrb[0].mxu0
      %v496 = vpop.f32.mrb[0].mxu0
      %v497 = vadd.f32 0.0, %v496
      %v498 = vpop.f32.mrb[0].mxu0
      %499 = vdwg.mxu0
      %v500 = vadd.f32 %v284, %v486
      %v501 = vadd.f32 %v285, %v489
      %v502 = vadd.f32 %v286, %v494
      %v503 = vadd.f32 %v287, %v497
      %vm504 = vcmask 130048
      %505 = vst.msk [vmem:[#allocation2] sm:$0xff] %vm504, %v500
      %506 = vst.msk [vmem:[#allocation2 + $0x8] sm:$0xff] %vm504, %v501
      %507 = vst.msk [vmem:[#allocation2 + $0x10] sm:$0xff] %vm504, %v502
      %508 = vst.msk [vmem:[#allocation2 + $0x18] sm:$0xff] %vm504, %v503
      %p509 = scmp.eq.s32.totalorder %s24, 2
      // Predicated region
      $region41: #{unet_dap_forward.17} parent=35 // pred_check
        %p510 = pneg %p509
      $region42: #{unet_dap_forward.17} parent=35 // pred_check_branch
        %512 = sbr.rel (%p510) target = $region44
      $region43: #{unet_dap_forward.17} parent=35 // pred_region
        %v513 = vld [vmem:[#allocation2] sm:$0xff]
        %v514 = vld [vmem:[#allocation2 + $0x8] sm:$0xff]
        %v515 = vld [vmem:[#allocation2 + $0x10] sm:$0xff]
        %v516 = vld [vmem:[#allocation2 + $0x18] sm:$0xff]
        %v517 = vld [vmem:[%s2] sm:$0xff]
        %v518 = vld [vmem:[%s2 + $0x8] sm:$0xff]
        %v519 = vld [vmem:[%s2 + $0x10] sm:$0xff]
        %v520 = vld [vmem:[%s2 + $0x18] sm:$0xff]
        %522 = vset.pattern.permute.xlu0 0
        %523 = vperm.xlu0 %522, %v517
        %v524 = vpop.permute.xlu0 %523
        %527 = vset.pattern.permute.xlu0 0
        %528 = vperm.xlu0 %527, %v518
        %v529 = vpop.permute.xlu0 %528
        %532 = vset.pattern.permute.xlu0 0
        %533 = vperm.xlu0 %532, %v519
        %v534 = vpop.permute.xlu0 %533
        %537 = vset.pattern.permute.xlu0 0
        %538 = vperm.xlu0 %537, %v520
        %v539 = vpop.permute.xlu0 %538
        %v541 = vmul.f32 %v513, %v524
        %v542 = vmul.f32 %v514, %v529
        %v543 = vmul.f32 %v515, %v534
        %v544 = vmul.f32 %v516, %v539
        %v545 = vld [vmem:[%s3] sm:$0xff]
        %v546 = vld [vmem:[%s3 + $0x8] sm:$0xff]
        %v547 = vld [vmem:[%s3 + $0x10] sm:$0xff]
        %v548 = vld [vmem:[%s3 + $0x18] sm:$0xff]
        %550 = vset.pattern.permute.xlu0 0
        %551 = vperm.xlu0 %550, %v545
        %v552 = vpop.permute.xlu0 %551
        %555 = vset.pattern.permute.xlu0 0
        %556 = vperm.xlu0 %555, %v546
        %v557 = vpop.permute.xlu0 %556
        %560 = vset.pattern.permute.xlu0 0
        %561 = vperm.xlu0 %560, %v547
        %v562 = vpop.permute.xlu0 %561
        %565 = vset.pattern.permute.xlu0 0
        %566 = vperm.xlu0 %565, %v548
        %v567 = vpop.permute.xlu0 %566
        %v569 = vadd.f32 %v541, %v552
        %v570 = vadd.f32 %v542, %v557
        %v571 = vadd.f32 %v543, %v562
        %v572 = vadd.f32 %v544, %v567
        %v573 = vmax.f32 %v569, 0.0
        %v574 = vmax.f32 %v570, 0.0
        %v575 = vmax.f32 %v571, 0.0
        %v576 = vmax.f32 %v572, 0.0
        %577 = vst.msk [vmem:[%s273] sm:$0xff] %vm504, %v573
        %578 = vst.msk [vmem:[%s273 + $0x8] sm:$0xff] %vm504, %v574
        %579 = vst.msk [vmem:[%s273 + $0x10] sm:$0xff] %vm504, %v575
        %580 = vst.msk [vmem:[%s273 + $0x18] sm:$0xff] %vm504, %v576
      $region44: #{unet_dap_forward.17} parent=35 // pred_fallthru
        _
      %p581 = scmp.lt.s32.totalorder %s21, 0
      %s582 = scalar_select %p581, %s21, 0
      %p583 = scmp.lt.s32.totalorder %s22, 1
      %s584 = scalar_select %p583, %s22, 1
      %p585 = scmp.lt.s32.totalorder %s23, 0
      %s586 = scalar_select %p585, %s23, 0
      %s587 = smul.addr %s584, 4
      %s588 = sadd.s32 %s586, %s587
      %s589 = smul.addr %s582, 8
      %s590 = sadd.s32 %s588, %s589
      %s591 = smul.addr %s590, 8
      %s592 = scalar_lea.vmem %s4, %s591
      // Predicated region
      $region45: #{unet_dap_forward.17} parent=35 // pred_check
        %p593 = pneg %p158
      $region46: #{unet_dap_forward.17} parent=35 // pred_check_branch
        %595 = sbr.rel (%p593) target = $region48
      $region47: #{unet_dap_forward.17} parent=35 // pred_region
        _
      $region48: #{unet_dap_forward.17} parent=35 // pred_fallthru
        _
    $region36: #{unet_dap_forward.17} parent=5 // pred_fallthru
      _
    %p596 = scmp.le.s32.totalorder 2, %s10
    // Predicated region
    $region49: #{unet_dap_forward.17} parent=5 // pred_check
      %p597 = pneg %p596
    $region50: #{unet_dap_forward.17} parent=5 // pred_check_branch
      %599 = sbr.rel (%p597) target = $region52
    $region51: #{unet_dap_forward.17} parent=5 // pred_region
      %s600 = ssub.s32 %s10, 2
      // Predicated region
      $region53: #{unet_dap_forward.17} parent=51 // pred_check
        %p601 = pneg %p164
      $region54: #{unet_dap_forward.17} parent=51 // pred_check_branch
        %603 = sbr.rel (%p601) target = $region56
      $region55: #{unet_dap_forward.17} parent=51 // pred_region
        %p604 = scmp.lt.s32.totalorder %s25, 0
        %s605 = scalar_select %p604, %s25, 0
        %p606 = scmp.lt.s32.totalorder %s26, 1
        %s607 = scalar_select %p606, %s26, 1
        %p608 = scmp.lt.s32.totalorder %s27, 0
        %s609 = scalar_select %p608, %s27, 0
        %s610 = smul.addr %s607, 4
        %s611 = sadd.s32 %s609, %s610
        %s612 = smul.addr %s605, 8
        %s613 = sadd.s32 %s611, %s612
        %s614 = smul.addr %s613, 8
        %s615 = scalar_lea.vmem %s4, %s614
      $region56: #{unet_dap_forward.17} parent=51 // pred_fallthru
        _
    $region52: #{unet_dap_forward.17} parent=5 // pred_fallthru
      _
  $region6: #{unet_dap_forward.17} parent=0 // loop_footer
    %s14 = sadd.s32 1, %s10
  $region7: #{unet_dap_forward.17} parent=0 // loop_footer_branch
    %9 = sbr.rel target = $region3
  $region8: #{unet_dap_forward.17} parent=0 // loop_exit
    _

</llo_original>
